<compile_context>
chip_gen: v7x
topology: tpu7x:2x2x1
jax: 0.10.0
libtpu: 0.0.40
codegen_flags: <defaults>
</compile_context>

<pallas_src>
import functools

import jax
import jax.numpy as jnp
from jax.experimental import pallas as pl
from jax.experimental.pallas import tpu as pltpu

EPS = 1e-5
LANE = 128
VMEM_LIMIT = 32 * 1024 * 1024


# ------------------------------ small helpers --------------------------------

def _round_up(x, m):
    return (x + m - 1) // m * m


def _pick_tile_h(ho, wo, cap_rows=512):
    cap = max(1, cap_rows // max(wo, 1))
    for d in range(min(ho, cap), 0, -1):
        if ho % d == 0:
            return d
    return 1


def _pick_tile_m(count, cap=1024):
    for d in range(min(count, cap), 0, -1):
        if count % d == 0 and (d % 8 == 0 or d == count):
            return d
    return count


def _prep_w3x3(w, cin_p, cout_p):
    # (O, I, 3, 3) -> (9, cin_p, cout_p) bf16, tap index = dh*3 + dw
    o, i, _, _ = w.shape
    wt = jnp.transpose(w, (2, 3, 1, 0)).reshape(9, i, o)
    wt = jnp.pad(wt, ((0, 0), (0, cin_p - i), (0, cout_p - o)))
    return wt.astype(jnp.bfloat16)


def _prep_w1x1(w, cin_p, cout_p):
    o, i = w.shape[0], w.shape[1]
    wt = jnp.transpose(w.reshape(o, i), (1, 0))
    wt = jnp.pad(wt, ((0, cin_p - i), (0, cout_p - o)))
    return wt.astype(jnp.bfloat16)


def _pad_vec(v, n):
    return jnp.pad(v.astype(jnp.float32), (0, n - v.shape[0])).reshape(1, n)


def _bn_affine(stats, count, gamma, beta):
    # stats: (N, n_tiles, 2, C) per-tile [sum, sumsq]; single-pass var in f32.
    s = jnp.sum(stats[:, :, 0, :], axis=(0, 1))
    ss = jnp.sum(stats[:, :, 1, :], axis=(0, 1))
    mean = s / count
    var = jnp.maximum(ss / count - mean * mean, 0.0)
    scale = gamma.reshape(-1) * jax.lax.rsqrt(var + EPS)
    bias = beta.reshape(-1) - mean * scale
    return scale.reshape(1, -1).astype(jnp.float32), bias.reshape(1, -1).astype(jnp.float32)


# ------------------------------ Pallas kernels --------------------------------

def _conv_in_kernel(xph_ref, w_ref, *rest, stride, tile_h, wo, hpp, with_shortcut):
    """conv1: 3x3 stride-s conv (+ fused 1x1 shortcut conv), emits pre-BN output
    tiles and per-tile (sum, sumsq) partial BN statistics."""
    if with_shortcut:
        ws_ref, y_ref, st_ref, ys_ref, sts_ref = rest
    else:
        (y_ref, st_ref) = rest
        ws_ref = ys_ref = sts_ref = None

    cin = w_ref.shape[1]
    cout = w_ref.shape[2]
    i = pl.program_id(1)
    oh0 = i * tile_h

    acc = jnp.zeros((tile_h * wo, cout), jnp.float32)
    for dh in range(3):
        for dw in range(3):
            phase = (dh % stride) * stride + (dw % stride)
            r0 = phase * hpp + oh0 + dh // stride     # dynamic only on 3rd-minor dim
            c0 = dw // stride                          # static
            chunk = xph_ref[0, pl.ds(r0, tile_h), pl.ds(c0, wo), :]
            lhs = chunk.reshape(tile_h * wo, cin)
            acc = acc + jnp.dot(lhs, w_ref[dh * 3 + dw],
                                preferred_element_type=jnp.float32)

    y_ref[...] = acc.reshape(1, tile_h, wo, cout)
    st_ref[...] = jnp.stack(
        [jnp.sum(acc, axis=0), jnp.sum(acc * acc, axis=0)]).reshape(1, 1, 2, cout)

    if with_shortcut:
        phase = (1 % stride) * stride + (1 % stride)
        r0 = phase * hpp + oh0 + 1 // stride
        c0 = 1 // stride
        xs = xph_ref[0, pl.ds(r0, tile_h), pl.ds(c0, wo), :].reshape(tile_h * wo, cin)
        acs = jnp.dot(xs, ws_ref[...], preferred_element_type=jnp.float32)
        ys_ref[...] = acs.reshape(1, tile_h, wo, cout)
        sts_ref[...] = jnp.stack(
            [jnp.sum(acs, axis=0), jnp.sum(acs * acs, axis=0)]).reshape(1, 1, 2, cout)


def _conv_mid_kernel(ypad_ref, w_ref, sc_ref, bi_ref, y_ref, st_ref,
                     *, tile_h, wo, ho):
    """conv2: fused bn1-apply + ReLU prologue (with zero-masking of the spatial
    padding ring), then 3x3 stride-1 conv as 9 accumulated matmuls + stats."""
    cin = w_ref.shape[1]
    cout = w_ref.shape[2]
    wp = wo + 2
    i = pl.program_id(1)
    oh0 = i * tile_h

    chunk = ypad_ref[0, pl.ds(oh0, tile_h + 2), :, :]            # (tile_h+2, wp, cin) f32
    act = jnp.maximum(chunk * sc_ref[0] + bi_ref[0], 0.0)
    rows = oh0 + jax.lax.broadcasted_iota(jnp.int32, (tile_h + 2, wp, 1), 0)
    cols = jax.lax.broadcasted_iota(jnp.int32, (tile_h + 2, wp, 1), 1)
    valid = (rows >= 1) & (rows <= ho) & (cols >= 1) & (cols <= wo)
    act = jnp.where(valid, act, 0.0).astype(jnp.bfloat16)

    acc = jnp.zeros((tile_h * wo, cout), jnp.float32)
    for dh in range(3):
        for dw in range(3):
            lhs = act[dh:dh + tile_h, dw:dw + wo, :].reshape(tile_h * wo, cin)
            acc = acc + jnp.dot(lhs, w_ref[dh * 3 + dw],
                                preferred_element_type=jnp.float32)

    y_ref[...] = acc.reshape(1, tile_h, wo, cout)
    st_ref[...] = jnp.stack(
        [jnp.sum(acc, axis=0), jnp.sum(acc * acc, axis=0)]).reshape(1, 1, 2, cout)


def _finalize_kernel(y_ref, r_ref, sc_ref, bi_ref, scs_ref, bis_ref, o_ref):
    """bn2-apply + shortcut-bn-apply + residual add + final ReLU, row-tiled."""
    y = y_ref[...] * sc_ref[0] + bi_ref[0]
    r = r_ref[...] * scs_ref[0] + bis_ref[0]
    o_ref[...] = jnp.maximum(y + r, 0.0)


# ------------------------------ forward wrapper --------------------------------

def basic_block_forward(x_nchw, params, *, stride, tile_h=None, tile_m=None):
    N, Cin, H, W = x_nchw.shape
    planes = params["w1"].shape[0]
    cin_p = _round_up(Cin, LANE)
    cpl = _round_up(planes, LANE)
    Ho = (H + 2 - 3) // stride + 1
    Wo = (W + 2 - 3) // stride + 1
    count = N * Ho * Wo

    need_proj = (stride != 1) or (Cin != planes)
    if not need_proj:
        assert cin_p == cpl

    if tile_h is None:
        tile_h = _pick_tile_h(Ho, Wo)
    assert Ho % tile_h == 0
    n_ht = Ho // tile_h
    if tile_m is None:
        tile_m = _pick_tile_m(count)
    assert count % tile_m == 0

    x_nhwc = jnp.transpose(x_nchw, (0, 2, 3, 1)).astype(jnp.float32)
    x_nhwc = jnp.pad(x_nhwc, ((0, 0), (0, 0), (0, 0), (0, cin_p - Cin)))

    # spatial zero-pad + phase decomposition so stride-s taps become plain slices
    hpp = Ho + 2 // stride
    wpp = Wo + 2 // stride
    hp_t, wp_t = stride * hpp, stride * wpp
    xpad = jnp.pad(x_nhwc, ((0, 0), (1, hp_t - H - 1), (1, wp_t - W - 1), (0, 0)))
    xph = xpad.reshape(N, hpp, stride, wpp, stride, cin_p)
    xph = jnp.transpose(xph, (0, 2, 4, 1, 3, 5))
    xph = xph.reshape(N, stride * stride * hpp, wpp, cin_p).astype(jnp.bfloat16)

    w1 = _prep_w3x3(params["w1"], cin_p, cpl)
    g1, b1 = _pad_vec(params["g1"], cpl), _pad_vec(params["b1"], cpl)
    w2 = _prep_w3x3(params["w2"], cpl, cpl)
    g2, b2 = _pad_vec(params["g2"], cpl), _pad_vec(params["b2"], cpl)

    cparams2d = pltpu.CompilerParams(
        dimension_semantics=("parallel", "parallel"),
        vmem_limit_bytes=VMEM_LIMIT)

    # ---- stage A: conv1 (3x3, stride) [+ fused 1x1 projection shortcut] -----
    in_specs = [
        pl.BlockSpec((1, stride * stride * hpp, wpp, cin_p),
                     lambda n, i: (n, 0, 0, 0)),                  # resident per image
        pl.BlockSpec((9, cin_p, cpl), lambda n, i: (0, 0, 0)),    # resident weights
    ]
    args = [xph, w1]
    out_shape = [
        jax.ShapeDtypeStruct((N, Ho, Wo, cpl), jnp.float32),      # y1 (pre-BN)
        jax.ShapeDtypeStruct((N, n_ht, 2, cpl), jnp.float32),     # stats1
    ]
    out_specs = [
        pl.BlockSpec((1, tile_h, Wo, cpl), lambda n, i: (n, i, 0, 0)),
        pl.BlockSpec((1, 1, 2, cpl), lambda n, i: (n, i, 0, 0)),
    ]
    if need_proj:
        ws = _prep_w1x1(params["ws"], cin_p, cpl)
        in_specs.append(pl.BlockSpec((cin_p, cpl), lambda n, i: (0, 0)))
        args.append(ws)
        out_shape += [
            jax.ShapeDtypeStruct((N, Ho, Wo, cpl), jnp.float32),  # ys (pre-BN shortcut)
            jax.ShapeDtypeStruct((N, n_ht, 2, cpl), jnp.float32),
        ]
        out_specs += [
            pl.BlockSpec((1, tile_h, Wo, cpl), lambda n, i: (n, i, 0, 0)),
            pl.BlockSpec((1, 1, 2, cpl), lambda n, i: (n, i, 0, 0)),
        ]

    outs = pl.pallas_call(
        functools.partial(_conv_in_kernel, stride=stride, tile_h=tile_h,
                          wo=Wo, hpp=hpp, with_shortcut=need_proj),
        grid=(N, n_ht),
        in_specs=in_specs,
        out_specs=out_specs,
        out_shape=out_shape,
        compiler_params=cparams2d,
    )(*args)
    if need_proj:
        y1, st1, ys, sts = outs
    else:
        y1, st1 = outs
        ys = sts = None

    sc1, bi1 = _bn_affine(st1, count, g1, b1)

    # ---- stage B: conv2 (3x3, stride 1) with fused bn1+ReLU prologue --------
    y1_pad = jnp.pad(y1, ((0, 0), (1, 1), (1, 1), (0, 0)))
    y2, st2 = pl.pallas_call(
        functools.partial(_conv_mid_kernel, tile_h=tile_h, wo=Wo, ho=Ho),
        grid=(N, n_ht),
        in_specs=[
            pl.BlockSpec((1, Ho + 2, Wo + 2, cpl), lambda n, i: (n, 0, 0, 0)),
            pl.BlockSpec((9, cpl, cpl), lambda n, i: (0, 0, 0)),
            pl.BlockSpec((1, cpl), lambda n, i: (0, 0)),
            pl.BlockSpec((1, cpl), lambda n, i: (0, 0)),
        ],
        out_specs=[
            pl.BlockSpec((1, tile_h, Wo, cpl), lambda n, i: (n, i, 0, 0)),
            pl.BlockSpec((1, 1, 2, cpl), lambda n, i: (n, i, 0, 0)),
        ],
        out_shape=[
            jax.ShapeDtypeStruct((N, Ho, Wo, cpl), jnp.float32),
            jax.ShapeDtypeStruct((N, n_ht, 2, cpl), jnp.float32),
        ],
        compiler_params=cparams2d,
    )(y1_pad, w2, sc1, bi1)

    sc2, bi2 = _bn_affine(st2, count, g2, b2)

    # ---- stage C: bn2 + shortcut-bn + residual add + final ReLU -------------
    if need_proj:
        gs, bs = _pad_vec(params["gs"], cpl), _pad_vec(params["bs"], cpl)
        scs, bis = _bn_affine(sts, count, gs, bs)
        res = ys.reshape(count, cpl)
    else:
        scs = jnp.ones((1, cpl), jnp.float32)
        bis = jnp.zeros((1, cpl), jnp.float32)
        res = x_nhwc.reshape(count, cin_p)

    out = pl.pallas_call(
        _finalize_kernel,
        grid=(count // tile_m,),
        in_specs=[
            pl.BlockSpec((tile_m, cpl), lambda i: (i, 0)),
            pl.BlockSpec((tile_m, cpl), lambda i: (i, 0)),
            pl.BlockSpec((1, cpl), lambda i: (0, 0)),
            pl.BlockSpec((1, cpl), lambda i: (0, 0)),
            pl.BlockSpec((1, cpl), lambda i: (0, 0)),
            pl.BlockSpec((1, cpl), lambda i: (0, 0)),
        ],
        out_specs=pl.BlockSpec((tile_m, cpl), lambda i: (i, 0)),
        out_shape=jax.ShapeDtypeStruct((count, cpl), jnp.float32),
        compiler_params=pltpu.CompilerParams(
            dimension_semantics=("parallel",), vmem_limit_bytes=VMEM_LIMIT),
    )(y2.reshape(count, cpl), res, sc2, bi2, scs, bis)

    out = out.reshape(N, Ho, Wo, cpl)[..., :planes]
    return jnp.transpose(out, (0, 3, 1, 2))  # back to NCHW


# --------------------------- params & reference --------------------------------

def init_params(key, in_planes, planes):
    ks = jax.random.split(key, 9)

    def wconv(k, shape):
        fan_in = shape[1] * shape[2] * shape[3]
        return jax.random.normal(k, shape, jnp.float32) * (2.0 / fan_in) ** 0.5

    return {
        "w1": wconv(ks[0], (planes, in_planes, 3, 3)),
        "g1": 1.0 + 0.1 * jax.random.normal(ks[1], (planes,), jnp.float32),
        "b1": 0.1 * jax.random.normal(ks[2], (planes,), jnp.float32),
        "w2": wconv(ks[3], (planes, planes, 3, 3)),
        "g2": 1.0 + 0.1 * jax.random.normal(ks[4], (planes,), jnp.float32),
        "b2": 0.1 * jax.random.normal(ks[5], (planes,), jnp.float32),
        "ws": wconv(ks[6], (planes, in_planes, 1, 1)),
        "gs": 1.0 + 0.1 * jax.random.normal(ks[7], (planes,), jnp.float32),
        "bs": 0.1 * jax.random.normal(ks[8], (planes,), jnp.float32),
    }


def ref_forward(x, params, stride, mm_dtype=jnp.float32):
    """Pure-JAX BasicBlock reference (training-mode BN), matmul dtype selectable."""
    def conv(y, w, s, pad):
        return jax.lax.conv_general_dilated(
            y.astype(mm_dtype), w.astype(mm_dtype), (s, s), pad,
            dimension_numbers=("NCHW", "OIHW", "NCHW"),
            preferred_element_type=jnp.float32)

    def bn(y, g, b):
        mean = jnp.mean(y, axis=(0, 2, 3), keepdims=True)
        var = jnp.mean((y - mean) ** 2, axis=(0, 2, 3), keepdims=True)
        return ((y - mean) * jax.lax.rsqrt(var + EPS) * g.reshape(1, -1, 1, 1)
                + b.reshape(1, -1, 1, 1))

    planes = params["w1"].shape[0]
    out = jax.nn.relu(bn(conv(x, params["w1"], stride, ((1, 1), (1, 1))),
                         params["g1"], params["b1"]))
    out = bn(conv(out, params["w2"], 1, ((1, 1), (1, 1))), params["g2"], params["b2"])
    if stride != 1 or x.shape[1] != planes:
        sc = bn(conv(x, params["ws"], stride, "VALID"), params["gs"], params["bs"])
    else:
        sc = x
    return jax.nn.relu(out + sc)


# ------------------------------------ main --------------------------------------

if __name__ == "__main__":
    key = jax.random.PRNGKey(0)
    kx, kp1, kp2 = jax.random.split(key, 3)

    x = jax.random.normal(kx, (2, 4, 16, 16), jnp.float32)   # NCHW

    # Config 1: identity shortcut (stride=1, in_planes == planes)
    params1 = init_params(kp1, 4, 4)
    fwd1 = jax.jit(functools.partial(basic_block_forward, stride=1, tile_h=4, tile_m=64))
    out1 = jax.block_until_ready(fwd1(x, params1))
    assert out1.shape == (2, 4, 16, 16), out1.shape
    ref1_bf16 = ref_forward(x, params1, 1, mm_dtype=jnp.bfloat16)
    ref1_f32 = ref_forward(x, params1, 1, mm_dtype=jnp.float32)
    e1t = float(jnp.max(jnp.abs(out1 - ref1_bf16)))
    e1l = float(jnp.max(jnp.abs(out1 - ref1_f32)))
    assert e1t < 5e-3, e1t    # vs bf16-matmul reference (same compute dtype)
    assert e1l < 1e-1, e1l    # sanity vs full-f32 reference

    # Config 2: projection shortcut (stride=2, in_planes != planes)
    params2 = init_params(kp2, 4, 8)
    fwd2 = jax.jit(functools.partial(basic_block_forward, stride=2, tile_h=4, tile_m=64))
    out2 = jax.block_until_ready(fwd2(x, params2))
    assert out2.shape == (2, 8, 8, 8), out2.shape
    ref2_bf16 = ref_forward(x, params2, 2, mm_dtype=jnp.bfloat16)
    ref2_f32 = ref_forward(x, params2, 2, mm_dtype=jnp.float32)
    e2t = float(jnp.max(jnp.abs(out2 - ref2_bf16)))
    e2l = float(jnp.max(jnp.abs(out2 - ref2_f32)))
    assert e2t < 5e-3, e2t
    assert e2l < 1e-1, e2l

    print("KERNEL_OK")
</pallas_src>

<mosaic_0001>
module attributes {stable_mosaic.version = 11 : i64} {
  func.func @_conv_in_kernel(%arg0: i32, %arg1: i32, %arg2: memref<1x18x18x128xbf16, #tpu.memory_space<vmem>>, %arg3: memref<9x128x128xbf16, #tpu.memory_space<vmem>>, %arg4: memref<1x4x16x128xf32, #tpu.memory_space<vmem>>, %arg5: memref<1x1x2x128xf32, #tpu.memory_space<vmem>>) attributes {dimension_semantics = [#tpu.dimension_semantics<parallel>, #tpu.dimension_semantics<parallel>], iteration_bounds = array<i64: 2, 4>, scalar_prefetch = 0 : i64, scratch_operands = 0 : i64, tpu.core_type = #tpu.core_type<tc>, window_params = [{transform_indices = @transform_0, window_bounds = array<i64: 1, 18, 18, 128>}, {pipeline_mode = #tpu.pipeline_mode<synchronous>, transform_indices = @transform_1, window_bounds = array<i64: 9, 128, 128>}, {transform_indices = @transform_2, window_bounds = array<i64: 1, 4, 16, 128>}, {transform_indices = @transform_3, window_bounds = array<i64: 1, 1, 2, 128>}]} {
    %c4_i32 = arith.constant 4 : i32
    %0 = arith.muli %arg1, %c4_i32 : i32
    %cst = arith.constant 0.000000e+00 : f32
    %1 = vector.broadcast %cst : f32 to vector<64x128xf32>
    %c0_i32 = arith.constant 0 : i32
    %2 = arith.addi %c0_i32, %0 : i32
    %c0_i32_0 = arith.constant 0 : i32
    %3 = arith.addi %2, %c0_i32_0 : i32
    %c0 = arith.constant 0 : index
    %4 = arith.index_cast %3 : i32 to index
    %c0_1 = arith.constant 0 : index
    %c0_2 = arith.constant 0 : index
    %5 = vector.load %arg2[%c0, %4, %c0_1, %c0_2] : memref<1x18x18x128xbf16, #tpu.memory_space<vmem>>, vector<1x4x16x128xbf16>
    %6 = vector.shape_cast %5 : vector<1x4x16x128xbf16> to vector<4x16x128xbf16>
    %7 = vector.shape_cast %6 : vector<4x16x128xbf16> to vector<64x128xbf16>
    %c0_3 = arith.constant 0 : index
    %c0_4 = arith.constant 0 : index
    %c0_5 = arith.constant 0 : index
    %8 = vector.load %arg3[%c0_3, %c0_4, %c0_5] : memref<9x128x128xbf16, #tpu.memory_space<vmem>>, vector<1x128x128xbf16>
    %9 = vector.shape_cast %8 : vector<1x128x128xbf16> to vector<128x128xbf16>
    %cst_6 = arith.constant dense<0.000000e+00> : vector<64x128xf32>
    %10 = tpu.matmul %7, %9, %cst_6 {dimension_numbers = #tpu.dot_dimension_numbers<[1], [0], [0], [1], [0, 0, 1, 1], [], []>} : vector<64x128xbf16>, vector<128x128xbf16>, vector<64x128xf32> -> vector<64x128xf32>
    %11 = arith.addf %1, %10 : vector<64x128xf32>
    %c0_i32_7 = arith.constant 0 : i32
    %12 = arith.addi %c0_i32_7, %0 : i32
    %c0_i32_8 = arith.constant 0 : i32
    %13 = arith.addi %12, %c0_i32_8 : i32
    %c0_9 = arith.constant 0 : index
    %14 = arith.index_cast %13 : i32 to index
    %c1 = arith.constant 1 : index
    %c0_10 = arith.constant 0 : index
    %15 = vector.load %arg2[%c0_9, %14, %c1, %c0_10] : memref<1x18x18x128xbf16, #tpu.memory_space<vmem>>, vector<1x4x16x128xbf16>
    %16 = vector.shape_cast %15 : vector<1x4x16x128xbf16> to vector<4x16x128xbf16>
    %17 = vector.shape_cast %16 : vector<4x16x128xbf16> to vector<64x128xbf16>
    %c1_11 = arith.constant 1 : index
    %c0_12 = arith.constant 0 : index
    %c0_13 = arith.constant 0 : index
    %18 = vector.load %arg3[%c1_11, %c0_12, %c0_13] : memref<9x128x128xbf16, #tpu.memory_space<vmem>>, vector<1x128x128xbf16>
    %19 = vector.shape_cast %18 : vector<1x128x128xbf16> to vector<128x128xbf16>
    %cst_14 = arith.constant dense<0.000000e+00> : vector<64x128xf32>
    %20 = tpu.matmul %17, %19, %cst_14 {dimension_numbers = #tpu.dot_dimension_numbers<[1], [0], [0], [1], [0, 0, 1, 1], [], []>} : vector<64x128xbf16>, vector<128x128xbf16>, vector<64x128xf32> -> vector<64x128xf32>
    %21 = arith.addf %11, %20 : vector<64x128xf32>
    %c0_i32_15 = arith.constant 0 : i32
    %22 = arith.addi %c0_i32_15, %0 : i32
    %c0_i32_16 = arith.constant 0 : i32
    %23 = arith.addi %22, %c0_i32_16 : i32
    %c0_17 = arith.constant 0 : index
    %24 = arith.index_cast %23 : i32 to index
    %c2 = arith.constant 2 : index
    %c0_18 = arith.constant 0 : index
    %25 = vector.load %arg2[%c0_17, %24, %c2, %c0_18] : memref<1x18x18x128xbf16, #tpu.memory_space<vmem>>, vector<1x4x16x128xbf16>
    %26 = vector.shape_cast %25 : vector<1x4x16x128xbf16> to vector<4x16x128xbf16>
    %27 = vector.shape_cast %26 : vector<4x16x128xbf16> to vector<64x128xbf16>
    %c2_19 = arith.constant 2 : index
    %c0_20 = arith.constant 0 : index
    %c0_21 = arith.constant 0 : index
    %28 = vector.load %arg3[%c2_19, %c0_20, %c0_21] : memref<9x128x128xbf16, #tpu.memory_space<vmem>>, vector<1x128x128xbf16>
    %29 = vector.shape_cast %28 : vector<1x128x128xbf16> to vector<128x128xbf16>
    %cst_22 = arith.constant dense<0.000000e+00> : vector<64x128xf32>
    %30 = tpu.matmul %27, %29, %cst_22 {dimension_numbers = #tpu.dot_dimension_numbers<[1], [0], [0], [1], [0, 0, 1, 1], [], []>} : vector<64x128xbf16>, vector<128x128xbf16>, vector<64x128xf32> -> vector<64x128xf32>
    %31 = arith.addf %21, %30 : vector<64x128xf32>
    %c0_i32_23 = arith.constant 0 : i32
    %32 = arith.addi %c0_i32_23, %0 : i32
    %c1_i32 = arith.constant 1 : i32
    %33 = arith.addi %32, %c1_i32 : i32
    %c0_24 = arith.constant 0 : index
    %34 = arith.index_cast %33 : i32 to index
    %c0_25 = arith.constant 0 : index
    %c0_26 = arith.constant 0 : index
    %35 = vector.load %arg2[%c0_24, %34, %c0_25, %c0_26] : memref<1x18x18x128xbf16, #tpu.memory_space<vmem>>, vector<1x4x16x128xbf16>
    %36 = vector.shape_cast %35 : vector<1x4x16x128xbf16> to vector<4x16x128xbf16>
    %37 = vector.shape_cast %36 : vector<4x16x128xbf16> to vector<64x128xbf16>
    %c3 = arith.constant 3 : index
    %c0_27 = arith.constant 0 : index
    %c0_28 = arith.constant 0 : index
    %38 = vector.load %arg3[%c3, %c0_27, %c0_28] : memref<9x128x128xbf16, #tpu.memory_space<vmem>>, vector<1x128x128xbf16>
    %39 = vector.shape_cast %38 : vector<1x128x128xbf16> to vector<128x128xbf16>
    %cst_29 = arith.constant dense<0.000000e+00> : vector<64x128xf32>
    %40 = tpu.matmul %37, %39, %cst_29 {dimension_numbers = #tpu.dot_dimension_numbers<[1], [0], [0], [1], [0, 0, 1, 1], [], []>} : vector<64x128xbf16>, vector<128x128xbf16>, vector<64x128xf32> -> vector<64x128xf32>
    %41 = arith.addf %31, %40 : vector<64x128xf32>
    %c0_i32_30 = arith.constant 0 : i32
    %42 = arith.addi %c0_i32_30, %0 : i32
    %c1_i32_31 = arith.constant 1 : i32
    %43 = arith.addi %42, %c1_i32_31 : i32
    %c0_32 = arith.constant 0 : index
    %44 = arith.index_cast %43 : i32 to index
    %c1_33 = arith.constant 1 : index
    %c0_34 = arith.constant 0 : index
    %45 = vector.load %arg2[%c0_32, %44, %c1_33, %c0_34] : memref<1x18x18x128xbf16, #tpu.memory_space<vmem>>, vector<1x4x16x128xbf16>
    %46 = vector.shape_cast %45 : vector<1x4x16x128xbf16> to vector<4x16x128xbf16>
    %47 = vector.shape_cast %46 : vector<4x16x128xbf16> to vector<64x128xbf16>
    %c4 = arith.constant 4 : index
    %c0_35 = arith.constant 0 : index
    %c0_36 = arith.constant 0 : index
    %48 = vector.load %arg3[%c4, %c0_35, %c0_36] : memref<9x128x128xbf16, #tpu.memory_space<vmem>>, vector<1x128x128xbf16>
    %49 = vector.shape_cast %48 : vector<1x128x128xbf16> to vector<128x128xbf16>
    %cst_37 = arith.constant dense<0.000000e+00> : vector<64x128xf32>
    %50 = tpu.matmul %47, %49, %cst_37 {dimension_numbers = #tpu.dot_dimension_numbers<[1], [0], [0], [1], [0, 0, 1, 1], [], []>} : vector<64x128xbf16>, vector<128x128xbf16>, vector<64x128xf32> -> vector<64x128xf32>
    %51 = arith.addf %41, %50 : vector<64x128xf32>
    %c0_i32_38 = arith.constant 0 : i32
    %52 = arith.addi %c0_i32_38, %0 : i32
    %c1_i32_39 = arith.constant 1 : i32
    %53 = arith.addi %52, %c1_i32_39 : i32
    %c0_40 = arith.constant 0 : index
    %54 = arith.index_cast %53 : i32 to index
    %c2_41 = arith.constant 2 : index
    %c0_42 = arith.constant 0 : index
    %55 = vector.load %arg2[%c0_40, %54, %c2_41, %c0_42] : memref<1x18x18x128xbf16, #tpu.memory_space<vmem>>, vector<1x4x16x128xbf16>
    %56 = vector.shape_cast %55 : vector<1x4x16x128xbf16> to vector<4x16x128xbf16>
    %57 = vector.shape_cast %56 : vector<4x16x128xbf16> to vector<64x128xbf16>
    %c5 = arith.constant 5 : index
    %c0_43 = arith.constant 0 : index
    %c0_44 = arith.constant 0 : index
    %58 = vector.load %arg3[%c5, %c0_43, %c0_44] : memref<9x128x128xbf16, #tpu.memory_space<vmem>>, vector<1x128x128xbf16>
    %59 = vector.shape_cast %58 : vector<1x128x128xbf16> to vector<128x128xbf16>
    %cst_45 = arith.constant dense<0.000000e+00> : vector<64x128xf32>
    %60 = tpu.matmul %57, %59, %cst_45 {dimension_numbers = #tpu.dot_dimension_numbers<[1], [0], [0], [1], [0, 0, 1, 1], [], []>} : vector<64x128xbf16>, vector<128x128xbf16>, vector<64x128xf32> -> vector<64x128xf32>
    %61 = arith.addf %51, %60 : vector<64x128xf32>
    %c0_i32_46 = arith.constant 0 : i32
    %62 = arith.addi %c0_i32_46, %0 : i32
    %c2_i32 = arith.constant 2 : i32
    %63 = arith.addi %62, %c2_i32 : i32
    %c0_47 = arith.constant 0 : index
    %64 = arith.index_cast %63 : i32 to index
    %c0_48 = arith.constant 0 : index
    %c0_49 = arith.constant 0 : index
    %65 = vector.load %arg2[%c0_47, %64, %c0_48, %c0_49] : memref<1x18x18x128xbf16, #tpu.memory_space<vmem>>, vector<1x4x16x128xbf16>
    %66 = vector.shape_cast %65 : vector<1x4x16x128xbf16> to vector<4x16x128xbf16>
    %67 = vector.shape_cast %66 : vector<4x16x128xbf16> to vector<64x128xbf16>
    %c6 = arith.constant 6 : index
    %c0_50 = arith.constant 0 : index
    %c0_51 = arith.constant 0 : index
    %68 = vector.load %arg3[%c6, %c0_50, %c0_51] : memref<9x128x128xbf16, #tpu.memory_space<vmem>>, vector<1x128x128xbf16>
    %69 = vector.shape_cast %68 : vector<1x128x128xbf16> to vector<128x128xbf16>
    %cst_52 = arith.constant dense<0.000000e+00> : vector<64x128xf32>
    %70 = tpu.matmul %67, %69, %cst_52 {dimension_numbers = #tpu.dot_dimension_numbers<[1], [0], [0], [1], [0, 0, 1, 1], [], []>} : vector<64x128xbf16>, vector<128x128xbf16>, vector<64x128xf32> -> vector<64x128xf32>
    %71 = arith.addf %61, %70 : vector<64x128xf32>
    %c0_i32_53 = arith.constant 0 : i32
    %72 = arith.addi %c0_i32_53, %0 : i32
    %c2_i32_54 = arith.constant 2 : i32
    %73 = arith.addi %72, %c2_i32_54 : i32
    %c0_55 = arith.constant 0 : index
    %74 = arith.index_cast %73 : i32 to index
    %c1_56 = arith.constant 1 : index
    %c0_57 = arith.constant 0 : index
    %75 = vector.load %arg2[%c0_55, %74, %c1_56, %c0_57] : memref<1x18x18x128xbf16, #tpu.memory_space<vmem>>, vector<1x4x16x128xbf16>
    %76 = vector.shape_cast %75 : vector<1x4x16x128xbf16> to vector<4x16x128xbf16>
    %77 = vector.shape_cast %76 : vector<4x16x128xbf16> to vector<64x128xbf16>
    %c7 = arith.constant 7 : index
    %c0_58 = arith.constant 0 : index
    %c0_59 = arith.constant 0 : index
    %78 = vector.load %arg3[%c7, %c0_58, %c0_59] : memref<9x128x128xbf16, #tpu.memory_space<vmem>>, vector<1x128x128xbf16>
    %79 = vector.shape_cast %78 : vector<1x128x128xbf16> to vector<128x128xbf16>
    %cst_60 = arith.constant dense<0.000000e+00> : vector<64x128xf32>
    %80 = tpu.matmul %77, %79, %cst_60 {dimension_numbers = #tpu.dot_dimension_numbers<[1], [0], [0], [1], [0, 0, 1, 1], [], []>} : vector<64x128xbf16>, vector<128x128xbf16>, vector<64x128xf32> -> vector<64x128xf32>
    %81 = arith.addf %71, %80 : vector<64x128xf32>
    %c0_i32_61 = arith.constant 0 : i32
    %82 = arith.addi %c0_i32_61, %0 : i32
    %c2_i32_62 = arith.constant 2 : i32
    %83 = arith.addi %82, %c2_i32_62 : i32
    %c0_63 = arith.constant 0 : index
    %84 = arith.index_cast %83 : i32 to index
    %c2_64 = arith.constant 2 : index
    %c0_65 = arith.constant 0 : index
    %85 = vector.load %arg2[%c0_63, %84, %c2_64, %c0_65] : memref<1x18x18x128xbf16, #tpu.memory_space<vmem>>, vector<1x4x16x128xbf16>
    %86 = vector.shape_cast %85 : vector<1x4x16x128xbf16> to vector<4x16x128xbf16>
    %87 = vector.shape_cast %86 : vector<4x16x128xbf16> to vector<64x128xbf16>
    %c8 = arith.constant 8 : index
    %c0_66 = arith.constant 0 : index
    %c0_67 = arith.constant 0 : index
    %88 = vector.load %arg3[%c8, %c0_66, %c0_67] : memref<9x128x128xbf16, #tpu.memory_space<vmem>>, vector<1x128x128xbf16>
    %89 = vector.shape_cast %88 : vector<1x128x128xbf16> to vector<128x128xbf16>
    %cst_68 = arith.constant dense<0.000000e+00> : vector<64x128xf32>
    %90 = tpu.matmul %87, %89, %cst_68 {dimension_numbers = #tpu.dot_dimension_numbers<[1], [0], [0], [1], [0, 0, 1, 1], [], []>} : vector<64x128xbf16>, vector<128x128xbf16>, vector<64x128xf32> -> vector<64x128xf32>
    %91 = arith.addf %81, %90 : vector<64x128xf32>
    %92 = vector.shape_cast %91 : vector<64x128xf32> to vector<1x4x16x128xf32>
    %c0_69 = arith.constant 0 : index
    %c0_70 = arith.constant 0 : index
    %c0_71 = arith.constant 0 : index
    %c0_72 = arith.constant 0 : index
    %93 = vector.load %arg4[%c0_69, %c0_70, %c0_71, %c0_72] : memref<1x4x16x128xf32, #tpu.memory_space<vmem>>, vector<1x4x16x128xf32>
    tpu.vector_store %arg4[%c0_69, %c0_70, %c0_71, %c0_72], %92 {strides = array<i32>} : memref<1x4x16x128xf32, #tpu.memory_space<vmem>>, vector<1x4x16x128xf32>,
    %cst_73 = arith.constant dense<0.000000e+00> : vector<128xf32>
    %94 = vector.multi_reduction <add>, %91, %cst_73 [0] : vector<64x128xf32> to vector<128xf32>
    %95 = arith.mulf %91, %91 : vector<64x128xf32>
    %cst_74 = arith.constant dense<0.000000e+00> : vector<128xf32>
    %96 = vector.multi_reduction <add>, %95, %cst_74 [0] : vector<64x128xf32> to vector<128xf32>
    %97 = vector.shape_cast %94 : vector<128xf32> to vector<1x128xf32>
    %98 = vector.shape_cast %96 : vector<128xf32> to vector<1x128xf32>
    %99 = tpu.concatenate %97, %98 in 0 : vector<1x128xf32>, vector<1x128xf32> -> vector<2x128xf32>
    %100 = vector.shape_cast %99 : vector<2x128xf32> to vector<1x1x2x128xf32>
    %c0_75 = arith.constant 0 : index
    %c0_76 = arith.constant 0 : index
    %c0_77 = arith.constant 0 : index
    %c0_78 = arith.constant 0 : index
    %101 = vector.load %arg5[%c0_75, %c0_76, %c0_77, %c0_78] : memref<1x1x2x128xf32, #tpu.memory_space<vmem>>, vector<1x1x2x128xf32>
    tpu.vector_store %arg5[%c0_75, %c0_76, %c0_77, %c0_78], %100 {strides = array<i32>} : memref<1x1x2x128xf32, #tpu.memory_space<vmem>>, vector<1x1x2x128xf32>,
    return
  }
  func.func @transform_0(%arg0: i32, %arg1: i32) -> (i32, i32, i32, i32) {
    %c0_i32 = arith.constant 0 : i32
    %c0_i32_0 = arith.constant 0 : i32
    %c0_i32_1 = arith.constant 0 : i32
    %c0_i32_2 = arith.constant 0 : i32
    return %arg0, %c0_i32, %c0_i32_0, %c0_i32_1 : i32, i32, i32, i32
  }
  func.func @transform_1(%arg0: i32, %arg1: i32) -> (i32, i32, i32) {
    %c0_i32 = arith.constant 0 : i32
    %c0_i32_0 = arith.constant 0 : i32
    %c0_i32_1 = arith.constant 0 : i32
    %c0_i32_2 = arith.constant 0 : i32
    return %c0_i32, %c0_i32_0, %c0_i32_1 : i32, i32, i32
  }
  func.func @transform_2(%arg0: i32, %arg1: i32) -> (i32, i32, i32, i32) {
    %c0_i32 = arith.constant 0 : i32
    %c0_i32_0 = arith.constant 0 : i32
    %c0_i32_1 = arith.constant 0 : i32
    return %arg0, %arg1, %c0_i32, %c0_i32_0 : i32, i32, i32, i32
  }
  func.func @transform_3(%arg0: i32, %arg1: i32) -> (i32, i32, i32, i32) {
    %c0_i32 = arith.constant 0 : i32
    %c0_i32_0 = arith.constant 0 : i32
    %c0_i32_1 = arith.constant 0 : i32
    return %arg0, %arg1, %c0_i32, %c0_i32_0 : i32, i32, i32, i32
  }
}

module attributes {stable_mosaic.version = 11 : i64} {
  func.func @_conv_mid_kernel(%arg0: i32, %arg1: i32, %arg2: memref<1x18x18x128xf32, #tpu.memory_space<vmem>>, %arg3: memref<9x128x128xbf16, #tpu.memory_space<vmem>>, %arg4: memref<1x128xf32, #tpu.memory_space<vmem>>, %arg5: memref<1x128xf32, #tpu.memory_space<vmem>>, %arg6: memref<1x4x16x128xf32, #tpu.memory_space<vmem>>, %arg7: memref<1x1x2x128xf32, #tpu.memory_space<vmem>>) attributes {dimension_semantics = [#tpu.dimension_semantics<parallel>, #tpu.dimension_semantics<parallel>], iteration_bounds = array<i64: 2, 4>, scalar_prefetch = 0 : i64, scratch_operands = 0 : i64, tpu.core_type = #tpu.core_type<tc>, window_params = [{transform_indices = @transform_0, window_bounds = array<i64: 1, 18, 18, 128>}, {pipeline_mode = #tpu.pipeline_mode<synchronous>, transform_indices = @transform_1, window_bounds = array<i64: 9, 128, 128>}, {pipeline_mode = #tpu.pipeline_mode<synchronous>, transform_indices = @transform_2, window_bounds = array<i64: 1, 128>}, {pipeline_mode = #tpu.pipeline_mode<synchronous>, transform_indices = @transform_3, window_bounds = array<i64: 1, 128>}, {transform_indices = @transform_4, window_bounds = array<i64: 1, 4, 16, 128>}, {transform_indices = @transform_5, window_bounds = array<i64: 1, 1, 2, 128>}]} {
    %c4_i32 = arith.constant 4 : i32
    %0 = arith.muli %arg1, %c4_i32 : i32
    %c0 = arith.constant 0 : index
    %1 = arith.index_cast %0 : i32 to index
    %c0_0 = arith.constant 0 : index
    %c0_1 = arith.constant 0 : index
    %2 = vector.load %arg2[%c0, %1, %c0_0, %c0_1] : memref<1x18x18x128xf32, #tpu.memory_space<vmem>>, vector<1x6x18x128xf32>
    %3 = vector.shape_cast %2 : vector<1x6x18x128xf32> to vector<6x18x128xf32>
    %c0_2 = arith.constant 0 : index
    %c0_3 = arith.constant 0 : index
    %4 = vector.load %arg4[%c0_2, %c0_3] : memref<1x128xf32, #tpu.memory_space<vmem>>, vector<1x128xf32>
    %5 = vector.shape_cast %4 : vector<1x128xf32> to vector<128xf32>
    %6 = vector.shape_cast %5 : vector<128xf32> to vector<1x1x128xf32>
    %7 = vector.broadcast %6 : vector<1x1x128xf32> to vector<6x18x128xf32>
    %8 = arith.mulf %3, %7 : vector<6x18x128xf32>
    %c0_4 = arith.constant 0 : index
    %c0_5 = arith.constant 0 : index
    %9 = vector.load %arg5[%c0_4, %c0_5] : memref<1x128xf32, #tpu.memory_space<vmem>>, vector<1x128xf32>
    %10 = vector.shape_cast %9 : vector<1x128xf32> to vector<128xf32>
    %11 = vector.shape_cast %10 : vector<128xf32> to vector<1x1x128xf32>
    %12 = vector.broadcast %11 : vector<1x1x128xf32> to vector<6x18x128xf32>
    %13 = arith.addf %8, %12 : vector<6x18x128xf32>
    %cst = arith.constant 0.000000e+00 : f32
    %14 = vector.broadcast %cst : f32 to vector<6x18x128xf32>
    %15 = arith.maximumf %13, %14 : vector<6x18x128xf32>
    %16 = tpu.iota {dimensions = array<i32: 0>} : vector<6x18x1xi32>
    %17 = vector.broadcast %0 : i32 to vector<6x18x1xi32>
    %18 = arith.addi %17, %16 : vector<6x18x1xi32>
    %19 = tpu.iota {dimensions = array<i32: 1>} : vector<6x18x1xi32>
    %c1_i32 = arith.constant 1 : i32
    %20 = vector.broadcast %c1_i32 : i32 to vector<6x18x1xi32>
    %21 = arith.cmpi sge, %18, %20 : vector<6x18x1xi32>
    %c16_i32 = arith.constant 16 : i32
    %22 = vector.broadcast %c16_i32 : i32 to vector<6x18x1xi32>
    %23 = arith.cmpi sle, %18, %22 : vector<6x18x1xi32>
    %24 = arith.andi %21, %23 : vector<6x18x1xi1>
    %c1_i32_6 = arith.constant 1 : i32
    %25 = vector.broadcast %c1_i32_6 : i32 to vector<6x18x1xi32>
    %26 = arith.cmpi sge, %19, %25 : vector<6x18x1xi32>
    %27 = arith.andi %24, %26 : vector<6x18x1xi1>
    %c16_i32_7 = arith.constant 16 : i32
    %28 = vector.broadcast %c16_i32_7 : i32 to vector<6x18x1xi32>
    %29 = arith.cmpi sle, %19, %28 : vector<6x18x1xi32>
    %30 = arith.andi %27, %29 : vector<6x18x1xi1>
    %cst_8 = arith.constant 0.000000e+00 : f32
    %31 = vector.shape_cast %30 : vector<6x18x1xi1> to vector<6x18x1xi1>
    %32 = vector.broadcast %31 : vector<6x18x1xi1> to vector<6x18x128xi1>
    %33 = vector.broadcast %cst_8 : f32 to vector<6x18x128xf32>
    %34 = arith.select %32, %15, %33 : vector<6x18x128xi1>, vector<6x18x128xf32>
    %35 = arith.truncf %34 : vector<6x18x128xf32> to vector<6x18x128xbf16>
    %cst_9 = arith.constant 0.000000e+00 : f32
    %36 = vector.broadcast %cst_9 : f32 to vector<64x128xf32>
    %37 = vector.extract_strided_slice %35 {offsets = [0, 0, 0], sizes = [4, 16, 128], strides = [1, 1, 1]} : vector<6x18x128xbf16> to vector<4x16x128xbf16>
    %38 = vector.shape_cast %37 : vector<4x16x128xbf16> to vector<64x128xbf16>
    %c0_10 = arith.constant 0 : index
    %c0_11 = arith.constant 0 : index
    %c0_12 = arith.constant 0 : index
    %39 = vector.load %arg3[%c0_10, %c0_11, %c0_12] : memref<9x128x128xbf16, #tpu.memory_space<vmem>>, vector<1x128x128xbf16>
    %40 = vector.shape_cast %39 : vector<1x128x128xbf16> to vector<128x128xbf16>
    %cst_13 = arith.constant dense<0.000000e+00> : vector<64x128xf32>
    %41 = tpu.matmul %38, %40, %cst_13 {dimension_numbers = #tpu.dot_dimension_numbers<[1], [0], [0], [1], [0, 0, 1, 1], [], []>} : vector<64x128xbf16>, vector<128x128xbf16>, vector<64x128xf32> -> vector<64x128xf32>
    %42 = arith.addf %36, %41 : vector<64x128xf32>
    %43 = vector.extract_strided_slice %35 {offsets = [0, 1, 0], sizes = [4, 16, 128], strides = [1, 1, 1]} : vector<6x18x128xbf16> to vector<4x16x128xbf16>
    %44 = vector.shape_cast %43 : vector<4x16x128xbf16> to vector<64x128xbf16>
    %c1 = arith.constant 1 : index
    %c0_14 = arith.constant 0 : index
    %c0_15 = arith.constant 0 : index
    %45 = vector.load %arg3[%c1, %c0_14, %c0_15] : memref<9x128x128xbf16, #tpu.memory_space<vmem>>, vector<1x128x128xbf16>
    %46 = vector.shape_cast %45 : vector<1x128x128xbf16> to vector<128x128xbf16>
    %cst_16 = arith.constant dense<0.000000e+00> : vector<64x128xf32>
    %47 = tpu.matmul %44, %46, %cst_16 {dimension_numbers = #tpu.dot_dimension_numbers<[1], [0], [0], [1], [0, 0, 1, 1], [], []>} : vector<64x128xbf16>, vector<128x128xbf16>, vector<64x128xf32> -> vector<64x128xf32>
    %48 = arith.addf %42, %47 : vector<64x128xf32>
    %49 = vector.extract_strided_slice %35 {offsets = [0, 2, 0], sizes = [4, 16, 128], strides = [1, 1, 1]} : vector<6x18x128xbf16> to vector<4x16x128xbf16>
    %50 = vector.shape_cast %49 : vector<4x16x128xbf16> to vector<64x128xbf16>
    %c2 = arith.constant 2 : index
    %c0_17 = arith.constant 0 : index
    %c0_18 = arith.constant 0 : index
    %51 = vector.load %arg3[%c2, %c0_17, %c0_18] : memref<9x128x128xbf16, #tpu.memory_space<vmem>>, vector<1x128x128xbf16>
    %52 = vector.shape_cast %51 : vector<1x128x128xbf16> to vector<128x128xbf16>
    %cst_19 = arith.constant dense<0.000000e+00> : vector<64x128xf32>
    %53 = tpu.matmul %50, %52, %cst_19 {dimension_numbers = #tpu.dot_dimension_numbers<[1], [0], [0], [1], [0, 0, 1, 1], [], []>} : vector<64x128xbf16>, vector<128x128xbf16>, vector<64x128xf32> -> vector<64x128xf32>
    %54 = arith.addf %48, %53 : vector<64x128xf32>
    %55 = vector.extract_strided_slice %35 {offsets = [1, 0, 0], sizes = [4, 16, 128], strides = [1, 1, 1]} : vector<6x18x128xbf16> to vector<4x16x128xbf16>
    %56 = vector.shape_cast %55 : vector<4x16x128xbf16> to vector<64x128xbf16>
    %c3 = arith.constant 3 : index
    %c0_20 = arith.constant 0 : index
    %c0_21 = arith.constant 0 : index
    %57 = vector.load %arg3[%c3, %c0_20, %c0_21] : memref<9x128x128xbf16, #tpu.memory_space<vmem>>, vector<1x128x128xbf16>
    %58 = vector.shape_cast %57 : vector<1x128x128xbf16> to vector<128x128xbf16>
    %cst_22 = arith.constant dense<0.000000e+00> : vector<64x128xf32>
    %59 = tpu.matmul %56, %58, %cst_22 {dimension_numbers = #tpu.dot_dimension_numbers<[1], [0], [0], [1], [0, 0, 1, 1], [], []>} : vector<64x128xbf16>, vector<128x128xbf16>, vector<64x128xf32> -> vector<64x128xf32>
    %60 = arith.addf %54, %59 : vector<64x128xf32>
    %61 = vector.extract_strided_slice %35 {offsets = [1, 1, 0], sizes = [4, 16, 128], strides = [1, 1, 1]} : vector<6x18x128xbf16> to vector<4x16x128xbf16>
    %62 = vector.shape_cast %61 : vector<4x16x128xbf16> to vector<64x128xbf16>
    %c4 = arith.constant 4 : index
    %c0_23 = arith.constant 0 : index
    %c0_24 = arith.constant 0 : index
    %63 = vector.load %arg3[%c4, %c0_23, %c0_24] : memref<9x128x128xbf16, #tpu.memory_space<vmem>>, vector<1x128x128xbf16>
    %64 = vector.shape_cast %63 : vector<1x128x128xbf16> to vector<128x128xbf16>
    %cst_25 = arith.constant dense<0.000000e+00> : vector<64x128xf32>
    %65 = tpu.matmul %62, %64, %cst_25 {dimension_numbers = #tpu.dot_dimension_numbers<[1], [0], [0], [1], [0, 0, 1, 1], [], []>} : vector<64x128xbf16>, vector<128x128xbf16>, vector<64x128xf32> -> vector<64x128xf32>
    %66 = arith.addf %60, %65 : vector<64x128xf32>
    %67 = vector.extract_strided_slice %35 {offsets = [1, 2, 0], sizes = [4, 16, 128], strides = [1, 1, 1]} : vector<6x18x128xbf16> to vector<4x16x128xbf16>
    %68 = vector.shape_cast %67 : vector<4x16x128xbf16> to vector<64x128xbf16>
    %c5 = arith.constant 5 : index
    %c0_26 = arith.constant 0 : index
    %c0_27 = arith.constant 0 : index
    %69 = vector.load %arg3[%c5, %c0_26, %c0_27] : memref<9x128x128xbf16, #tpu.memory_space<vmem>>, vector<1x128x128xbf16>
    %70 = vector.shape_cast %69 : vector<1x128x128xbf16> to vector<128x128xbf16>
    %cst_28 = arith.constant dense<0.000000e+00> : vector<64x128xf32>
    %71 = tpu.matmul %68, %70, %cst_28 {dimension_numbers = #tpu.dot_dimension_numbers<[1], [0], [0], [1], [0, 0, 1, 1], [], []>} : vector<64x128xbf16>, vector<128x128xbf16>, vector<64x128xf32> -> vector<64x128xf32>
    %72 = arith.addf %66, %71 : vector<64x128xf32>
    %73 = vector.extract_strided_slice %35 {offsets = [2, 0, 0], sizes = [4, 16, 128], strides = [1, 1, 1]} : vector<6x18x128xbf16> to vector<4x16x128xbf16>
    %74 = vector.shape_cast %73 : vector<4x16x128xbf16> to vector<64x128xbf16>
    %c6 = arith.constant 6 : index
    %c0_29 = arith.constant 0 : index
    %c0_30 = arith.constant 0 : index
    %75 = vector.load %arg3[%c6, %c0_29, %c0_30] : memref<9x128x128xbf16, #tpu.memory_space<vmem>>, vector<1x128x128xbf16>
    %76 = vector.shape_cast %75 : vector<1x128x128xbf16> to vector<128x128xbf16>
    %cst_31 = arith.constant dense<0.000000e+00> : vector<64x128xf32>
    %77 = tpu.matmul %74, %76, %cst_31 {dimension_numbers = #tpu.dot_dimension_numbers<[1], [0], [0], [1], [0, 0, 1, 1], [], []>} : vector<64x128xbf16>, vector<128x128xbf16>, vector<64x128xf32> -> vector<64x128xf32>
    %78 = arith.addf %72, %77 : vector<64x128xf32>
    %79 = vector.extract_strided_slice %35 {offsets = [2, 1, 0], sizes = [4, 16, 128], strides = [1, 1, 1]} : vector<6x18x128xbf16> to vector<4x16x128xbf16>
    %80 = vector.shape_cast %79 : vector<4x16x128xbf16> to vector<64x128xbf16>
    %c7 = arith.constant 7 : index
    %c0_32 = arith.constant 0 : index
    %c0_33 = arith.constant 0 : index
    %81 = vector.load %arg3[%c7, %c0_32, %c0_33] : memref<9x128x128xbf16, #tpu.memory_space<vmem>>, vector<1x128x128xbf16>
    %82 = vector.shape_cast %81 : vector<1x128x128xbf16> to vector<128x128xbf16>
    %cst_34 = arith.constant dense<0.000000e+00> : vector<64x128xf32>
    %83 = tpu.matmul %80, %82, %cst_34 {dimension_numbers = #tpu.dot_dimension_numbers<[1], [0], [0], [1], [0, 0, 1, 1], [], []>} : vector<64x128xbf16>, vector<128x128xbf16>, vector<64x128xf32> -> vector<64x128xf32>
    %84 = arith.addf %78, %83 : vector<64x128xf32>
    %85 = vector.extract_strided_slice %35 {offsets = [2, 2, 0], sizes = [4, 16, 128], strides = [1, 1, 1]} : vector<6x18x128xbf16> to vector<4x16x128xbf16>
    %86 = vector.shape_cast %85 : vector<4x16x128xbf16> to vector<64x128xbf16>
    %c8 = arith.constant 8 : index
    %c0_35 = arith.constant 0 : index
    %c0_36 = arith.constant 0 : index
    %87 = vector.load %arg3[%c8, %c0_35, %c0_36] : memref<9x128x128xbf16, #tpu.memory_space<vmem>>, vector<1x128x128xbf16>
    %88 = vector.shape_cast %87 : vector<1x128x128xbf16> to vector<128x128xbf16>
    %cst_37 = arith.constant dense<0.000000e+00> : vector<64x128xf32>
    %89 = tpu.matmul %86, %88, %cst_37 {dimension_numbers = #tpu.dot_dimension_numbers<[1], [0], [0], [1], [0, 0, 1, 1], [], []>} : vector<64x128xbf16>, vector<128x128xbf16>, vector<64x128xf32> -> vector<64x128xf32>
    %90 = arith.addf %84, %89 : vector<64x128xf32>
    %91 = vector.shape_cast %90 : vector<64x128xf32> to vector<1x4x16x128xf32>
    %c0_38 = arith.constant 0 : index
    %c0_39 = arith.constant 0 : index
    %c0_40 = arith.constant 0 : index
    %c0_41 = arith.constant 0 : index
    %92 = vector.load %arg6[%c0_38, %c0_39, %c0_40, %c0_41] : memref<1x4x16x128xf32, #tpu.memory_space<vmem>>, vector<1x4x16x128xf32>
    tpu.vector_store %arg6[%c0_38, %c0_39, %c0_40, %c0_41], %91 {strides = array<i32>} : memref<1x4x16x128xf32, #tpu.memory_space<vmem>>, vector<1x4x16x128xf32>,
    %cst_42 = arith.constant dense<0.000000e+00> : vector<128xf32>
    %93 = vector.multi_reduction <add>, %90, %cst_42 [0] : vector<64x128xf32> to vector<128xf32>
    %94 = arith.mulf %90, %90 : vector<64x128xf32>
    %cst_43 = arith.constant dense<0.000000e+00> : vector<128xf32>
    %95 = vector.multi_reduction <add>, %94, %cst_43 [0] : vector<64x128xf32> to vector<128xf32>
    %96 = vector.shape_cast %93 : vector<128xf32> to vector<1x128xf32>
    %97 = vector.shape_cast %95 : vector<128xf32> to vector<1x128xf32>
    %98 = tpu.concatenate %96, %97 in 0 : vector<1x128xf32>, vector<1x128xf32> -> vector<2x128xf32>
    %99 = vector.shape_cast %98 : vector<2x128xf32> to vector<1x1x2x128xf32>
    %c0_44 = arith.constant 0 : index
    %c0_45 = arith.constant 0 : index
    %c0_46 = arith.constant 0 : index
    %c0_47 = arith.constant 0 : index
    %100 = vector.load %arg7[%c0_44, %c0_45, %c0_46, %c0_47] : memref<1x1x2x128xf32, #tpu.memory_space<vmem>>, vector<1x1x2x128xf32>
    tpu.vector_store %arg7[%c0_44, %c0_45, %c0_46, %c0_47], %99 {strides = array<i32>} : memref<1x1x2x128xf32, #tpu.memory_space<vmem>>, vector<1x1x2x128xf32>,
    return
  }
  func.func @transform_0(%arg0: i32, %arg1: i32) -> (i32, i32, i32, i32) {
    %c0_i32 = arith.constant 0 : i32
    %c0_i32_0 = arith.constant 0 : i32
    %c0_i32_1 = arith.constant 0 : i32
    %c0_i32_2 = arith.constant 0 : i32
    return %arg0, %c0_i32, %c0_i32_0, %c0_i32_1 : i32, i32, i32, i32
  }
  func.func @transform_1(%arg0: i32, %arg1: i32) -> (i32, i32, i32) {
    %c0_i32 = arith.constant 0 : i32
    %c0_i32_0 = arith.constant 0 : i32
    %c0_i32_1 = arith.constant 0 : i32
    %c0_i32_2 = arith.constant 0 : i32
    return %c0_i32, %c0_i32_0, %c0_i32_1 : i32, i32, i32
  }
  func.func @transform_2(%arg0: i32, %arg1: i32) -> (i32, i32) {
    %c0_i32 = arith.constant 0 : i32
    %c0_i32_0 = arith.constant 0 : i32
    %c0_i32_1 = arith.constant 0 : i32
    return %c0_i32, %c0_i32_0 : i32, i32
  }
  func.func @transform_3(%arg0: i32, %arg1: i32) -> (i32, i32) {
    %c0_i32 = arith.constant 0 : i32
    %c0_i32_0 = arith.constant 0 : i32
    %c0_i32_1 = arith.constant 0 : i32
    return %c0_i32, %c0_i32_0 : i32, i32
  }
  func.func @transform_4(%arg0: i32, %arg1: i32) -> (i32, i32, i32, i32) {
    %c0_i32 = arith.constant 0 : i32
    %c0_i32_0 = arith.constant 0 : i32
    %c0_i32_1 = arith.constant 0 : i32
    return %arg0, %arg1, %c0_i32, %c0_i32_0 : i32, i32, i32, i32
  }
  func.func @transform_5(%arg0: i32, %arg1: i32) -> (i32, i32, i32, i32) {
    %c0_i32 = arith.constant 0 : i32
    %c0_i32_0 = arith.constant 0 : i32
    %c0_i32_1 = arith.constant 0 : i32
    return %arg0, %arg1, %c0_i32, %c0_i32_0 : i32, i32, i32, i32
  }
}

module attributes {stable_mosaic.version = 11 : i64} {
  func.func @_finalize_kernel(%arg0: i32, %arg1: memref<64x128xf32, #tpu.memory_space<vmem>>, %arg2: memref<64x128xf32, #tpu.memory_space<vmem>>, %arg3: memref<1x128xf32, #tpu.memory_space<vmem>>, %arg4: memref<1x128xf32, #tpu.memory_space<vmem>>, %arg5: memref<1x128xf32, #tpu.memory_space<vmem>>, %arg6: memref<1x128xf32, #tpu.memory_space<vmem>>, %arg7: memref<64x128xf32, #tpu.memory_space<vmem>>) attributes {dimension_semantics = [#tpu.dimension_semantics<parallel>], iteration_bounds = array<i64: 8>, scalar_prefetch = 0 : i64, scratch_operands = 0 : i64, tpu.core_type = #tpu.core_type<tc>, window_params = [{transform_indices = @transform_0, window_bounds = array<i64: 64, 128>}, {transform_indices = @transform_1, window_bounds = array<i64: 64, 128>}, {pipeline_mode = #tpu.pipeline_mode<synchronous>, transform_indices = @transform_2, window_bounds = array<i64: 1, 128>}, {pipeline_mode = #tpu.pipeline_mode<synchronous>, transform_indices = @transform_3, window_bounds = array<i64: 1, 128>}, {pipeline_mode = #tpu.pipeline_mode<synchronous>, transform_indices = @transform_4, window_bounds = array<i64: 1, 128>}, {pipeline_mode = #tpu.pipeline_mode<synchronous>, transform_indices = @transform_5, window_bounds = array<i64: 1, 128>}, {transform_indices = @transform_6, window_bounds = array<i64: 64, 128>}]} {
    %c0 = arith.constant 0 : index
    %c0_0 = arith.constant 0 : index
    %0 = vector.load %arg1[%c0, %c0_0] : memref<64x128xf32, #tpu.memory_space<vmem>>, vector<64x128xf32>
    %c0_1 = arith.constant 0 : index
    %c0_2 = arith.constant 0 : index
    %1 = vector.load %arg3[%c0_1, %c0_2] : memref<1x128xf32, #tpu.memory_space<vmem>>, vector<1x128xf32>
    %2 = vector.shape_cast %1 : vector<1x128xf32> to vector<128xf32>
    %3 = vector.shape_cast %2 : vector<128xf32> to vector<1x128xf32>
    %4 = vector.broadcast %3 : vector<1x128xf32> to vector<64x128xf32>
    %5 = arith.mulf %0, %4 : vector<64x128xf32>
    %c0_3 = arith.constant 0 : index
    %c0_4 = arith.constant 0 : index
    %6 = vector.load %arg4[%c0_3, %c0_4] : memref<1x128xf32, #tpu.memory_space<vmem>>, vector<1x128xf32>
    %7 = vector.shape_cast %6 : vector<1x128xf32> to vector<128xf32>
    %8 = vector.shape_cast %7 : vector<128xf32> to vector<1x128xf32>
    %9 = vector.broadcast %8 : vector<1x128xf32> to vector<64x128xf32>
    %10 = arith.addf %5, %9 : vector<64x128xf32>
    %c0_5 = arith.constant 0 : index
    %c0_6 = arith.constant 0 : index
    %11 = vector.load %arg2[%c0_5, %c0_6] : memref<64x128xf32, #tpu.memory_space<vmem>>, vector<64x128xf32>
    %c0_7 = arith.constant 0 : index
    %c0_8 = arith.constant 0 : index
    %12 = vector.load %arg5[%c0_7, %c0_8] : memref<1x128xf32, #tpu.memory_space<vmem>>, vector<1x128xf32>
    %13 = vector.shape_cast %12 : vector<1x128xf32> to vector<128xf32>
    %14 = vector.shape_cast %13 : vector<128xf32> to vector<1x128xf32>
    %15 = vector.broadcast %14 : vector<1x128xf32> to vector<64x128xf32>
    %16 = arith.mulf %11, %15 : vector<64x128xf32>
    %c0_9 = arith.constant 0 : index
    %c0_10 = arith.constant 0 : index
    %17 = vector.load %arg6[%c0_9, %c0_10] : memref<1x128xf32, #tpu.memory_space<vmem>>, vector<1x128xf32>
    %18 = vector.shape_cast %17 : vector<1x128xf32> to vector<128xf32>
    %19 = vector.shape_cast %18 : vector<128xf32> to vector<1x128xf32>
    %20 = vector.broadcast %19 : vector<1x128xf32> to vector<64x128xf32>
    %21 = arith.addf %16, %20 : vector<64x128xf32>
    %22 = arith.addf %10, %21 : vector<64x128xf32>
    %cst = arith.constant 0.000000e+00 : f32
    %23 = vector.broadcast %cst : f32 to vector<64x128xf32>
    %24 = arith.maximumf %22, %23 : vector<64x128xf32>
    %c0_11 = arith.constant 0 : index
    %c0_12 = arith.constant 0 : index
    %25 = vector.load %arg7[%c0_11, %c0_12] : memref<64x128xf32, #tpu.memory_space<vmem>>, vector<64x128xf32>
    tpu.vector_store %arg7[%c0_11, %c0_12], %24 {strides = array<i32>} : memref<64x128xf32, #tpu.memory_space<vmem>>, vector<64x128xf32>,
    return
  }
  func.func @transform_0(%arg0: i32) -> (i32, i32) {
    %c0_i32 = arith.constant 0 : i32
    %c0_i32_0 = arith.constant 0 : i32
    return %arg0, %c0_i32 : i32, i32
  }
  func.func @transform_1(%arg0: i32) -> (i32, i32) {
    %c0_i32 = arith.constant 0 : i32
    %c0_i32_0 = arith.constant 0 : i32
    return %arg0, %c0_i32 : i32, i32
  }
  func.func @transform_2(%arg0: i32) -> (i32, i32) {
    %c0_i32 = arith.constant 0 : i32
    %c0_i32_0 = arith.constant 0 : i32
    %c0_i32_1 = arith.constant 0 : i32
    return %c0_i32, %c0_i32_0 : i32, i32
  }
  func.func @transform_3(%arg0: i32) -> (i32, i32) {
    %c0_i32 = arith.constant 0 : i32
    %c0_i32_0 = arith.constant 0 : i32
    %c0_i32_1 = arith.constant 0 : i32
    return %c0_i32, %c0_i32_0 : i32, i32
  }
  func.func @transform_4(%arg0: i32) -> (i32, i32) {
    %c0_i32 = arith.constant 0 : i32
    %c0_i32_0 = arith.constant 0 : i32
    %c0_i32_1 = arith.constant 0 : i32
    return %c0_i32, %c0_i32_0 : i32, i32
  }
  func.func @transform_5(%arg0: i32) -> (i32, i32) {
    %c0_i32 = arith.constant 0 : i32
    %c0_i32_0 = arith.constant 0 : i32
    %c0_i32_1 = arith.constant 0 : i32
    return %c0_i32, %c0_i32_0 : i32, i32
  }
  func.func @transform_6(%arg0: i32) -> (i32, i32) {
    %c0_i32 = arith.constant 0 : i32
    %c0_i32_0 = arith.constant 0 : i32
    return %arg0, %c0_i32 : i32, i32
  }
}

</mosaic_0001>

<llo_original>
// kernel: basic_block_forward.5
$region0: #{basic_block_forward.5}
  #allocation0 [shape = 'u32[]', space=smem, size = 0x4, offset = 0x4, fixed_abs, tag = 'smem constant byte address 0x4 - core index']
  #allocation1 [shape = 'u32[144,128]{1,0:T(1,128)}', space=vmem, size = 0x12000, scoped, tag = 'internal scratch']
  %s0 = inlined_call_operand.vmem [shape: f32[512,128], index: 0, kind: input, shape index: {}]
  %s1 = inlined_call_operand.vmem [shape: f32[512,128], index: 1, kind: input, shape index: {}]
  %s2 = inlined_call_operand.vmem [shape: f32[1,128], index: 2, kind: input, shape index: {}]
  %s3 = inlined_call_operand.vmem [shape: f32[1,128], index: 3, kind: input, shape index: {}]
  %s4 = inlined_call_operand.vmem [shape: f32[1,128], index: 4, kind: input, shape index: {}]
  %s5 = inlined_call_operand.vmem [shape: f32[1,128], index: 5, kind: input, shape index: {}]
  %s6 = inlined_call_operand.vmem [shape: f32[512,128], index: 6, kind: output, shape index: {}]
  %s7 = sld [smem:[#allocation0]]
  $region57: #{basic_block_forward.5} parent=0
    _
  %s9 = ssub.s32 1, %s7
  %s10 = scalar_select 0, %s9, %s7
  loop: start=0, step=1, limit=10
  $region2: #{basic_block_forward.5} parent=0 // loop_pre_header
    _
  $region3: #{basic_block_forward.5} parent=0 // loop_header
    %s12 = sphi 0, %s16
    %p13 = scmp.ge.s32.totalorder %s12, 10
    %s22 = sphi 0, %s24
    %s25 = sphi 0, %s22
    %s26 = sphi 0, %s25
    %s42 = sphi 0, %s26
    %s48 = sphi 0, %s50
    %s51 = sphi 0, %s48
    %s52 = sphi 0, %s51
    %s68 = sphi 0, %s52
    %s72 = sphi 0, %s72
    %s74 = sphi 0, %s72
    %s75 = sphi 0, %s74
    %s89 = sphi 0, %s75
    %s93 = sphi 0, %s93
    %s95 = sphi 0, %s93
    %s96 = sphi 0, %s95
    %s110 = sphi 0, %s96
    %s114 = sphi 0, %s114
    %s116 = sphi 0, %s114
    %s117 = sphi 0, %s116
    %s131 = sphi 0, %s117
    %s135 = sphi 0, %s135
    %s137 = sphi 0, %s135
    %s138 = sphi 0, %s137
    %s152 = sphi 0, %s138
    %s158 = sphi 0, %s160
    %s161 = sphi 0, %s158
    %s162 = sphi 0, %s161
    %s178 = sphi 0, %s162
  $region4: #{basic_block_forward.5} parent=0 // loop_header_branch
    %15 = sbr.rel (%p13) target = $region8
  $region5: #{basic_block_forward.5} parent=0 // loop_body
    %s17 = ssub.s32 %s12, 1
    %s18 = ssub.s32 %s12, 2
    %s19 = sadd.s32 %s12, 1
    %s20 = ssub.s32 %s12, %s19
    %p21 = scmp.eq.s32.totalorder %s20, 0
    %s23 = sadd.s32 %s22, 1
    %s24 = scalar_select %p21, %s22, %s23
    %p27 = pneg %p21
    %p28 = scmp.eq.s32.totalorder %s12, 7
    %p29 = por %p27, %p28
    %p30 = scmp.ne.s32.totalorder %s22, %s25
    %p31 = scmp.eq.s32.totalorder %s12, 0
    %p32 = por %p30, %p31
    %p33 = scmp.ne.s32.totalorder %s22, %s25
    %p34 = scmp.eq.s32.totalorder %s17, 7
    %p35 = por %p33, %p34
    %p36 = scmp.ne.s32.totalorder %s25, %s26
    %p37 = scmp.eq.s32.totalorder %s17, 0
    %p38 = por %p36, %p37
    %p39 = scmp.ne.s32.totalorder %s25, %s26
    %p40 = scmp.eq.s32.totalorder %s18, 7
    %p41 = por %p39, %p40
    %p43 = scmp.ne.s32.totalorder %s26, %s42
    %p44 = scmp.eq.s32.totalorder %s18, 0
    %p45 = por %p43, %p44
    %s46 = ssub.s32 %s12, %s19
    %p47 = scmp.eq.s32.totalorder %s46, 0
    %s49 = sadd.s32 %s48, 1
    %s50 = scalar_select %p47, %s48, %s49
    %p53 = pneg %p47
    %p54 = scmp.eq.s32.totalorder %s12, 7
    %p55 = por %p53, %p54
    %p56 = scmp.ne.s32.totalorder %s48, %s51
    %p57 = scmp.eq.s32.totalorder %s12, 0
    %p58 = por %p56, %p57
    %p59 = scmp.ne.s32.totalorder %s48, %s51
    %p60 = scmp.eq.s32.totalorder %s17, 7
    %p61 = por %p59, %p60
    %p62 = scmp.ne.s32.totalorder %s51, %s52
    %p63 = scmp.eq.s32.totalorder %s17, 0
    %p64 = por %p62, %p63
    %p65 = scmp.ne.s32.totalorder %s51, %s52
    %p66 = scmp.eq.s32.totalorder %s18, 7
    %p67 = por %p65, %p66
    %p69 = scmp.ne.s32.totalorder %s52, %s68
    %p70 = scmp.eq.s32.totalorder %s18, 0
    %p71 = por %p69, %p70
    %s73 = sadd.s32 %s72, 1
    %p76 = scmp.eq.s32.totalorder %s12, 7
    %p77 = scmp.ne.s32.totalorder %s72, %s74
    %p78 = scmp.eq.s32.totalorder %s12, 0
    %p79 = por %p77, %p78
    %p80 = scmp.ne.s32.totalorder %s72, %s74
    %p81 = scmp.eq.s32.totalorder %s17, 7
    %p82 = por %p80, %p81
    %p83 = scmp.ne.s32.totalorder %s74, %s75
    %p84 = scmp.eq.s32.totalorder %s17, 0
    %p85 = por %p83, %p84
    %p86 = scmp.ne.s32.totalorder %s74, %s75
    %p87 = scmp.eq.s32.totalorder %s18, 7
    %p88 = por %p86, %p87
    %p90 = scmp.ne.s32.totalorder %s75, %s89
    %p91 = scmp.eq.s32.totalorder %s18, 0
    %p92 = por %p90, %p91
    %s94 = sadd.s32 %s93, 1
    %p97 = scmp.eq.s32.totalorder %s12, 7
    %p98 = scmp.ne.s32.totalorder %s93, %s95
    %p99 = scmp.eq.s32.totalorder %s12, 0
    %p100 = por %p98, %p99
    %p101 = scmp.ne.s32.totalorder %s93, %s95
    %p102 = scmp.eq.s32.totalorder %s17, 7
    %p103 = por %p101, %p102
    %p104 = scmp.ne.s32.totalorder %s95, %s96
    %p105 = scmp.eq.s32.totalorder %s17, 0
    %p106 = por %p104, %p105
    %p107 = scmp.ne.s32.totalorder %s95, %s96
    %p108 = scmp.eq.s32.totalorder %s18, 7
    %p109 = por %p107, %p108
    %p111 = scmp.ne.s32.totalorder %s96, %s110
    %p112 = scmp.eq.s32.totalorder %s18, 0
    %p113 = por %p111, %p112
    %s115 = sadd.s32 %s114, 1
    %p118 = scmp.eq.s32.totalorder %s12, 7
    %p119 = scmp.ne.s32.totalorder %s114, %s116
    %p120 = scmp.eq.s32.totalorder %s12, 0
    %p121 = por %p119, %p120
    %p122 = scmp.ne.s32.totalorder %s114, %s116
    %p123 = scmp.eq.s32.totalorder %s17, 7
    %p124 = por %p122, %p123
    %p125 = scmp.ne.s32.totalorder %s116, %s117
    %p126 = scmp.eq.s32.totalorder %s17, 0
    %p127 = por %p125, %p126
    %p128 = scmp.ne.s32.totalorder %s116, %s117
    %p129 = scmp.eq.s32.totalorder %s18, 7
    %p130 = por %p128, %p129
    %p132 = scmp.ne.s32.totalorder %s117, %s131
    %p133 = scmp.eq.s32.totalorder %s18, 0
    %p134 = por %p132, %p133
    %s136 = sadd.s32 %s135, 1
    %p139 = scmp.eq.s32.totalorder %s12, 7
    %p140 = scmp.ne.s32.totalorder %s135, %s137
    %p141 = scmp.eq.s32.totalorder %s12, 0
    %p142 = por %p140, %p141
    %p143 = scmp.ne.s32.totalorder %s135, %s137
    %p144 = scmp.eq.s32.totalorder %s17, 7
    %p145 = por %p143, %p144
    %p146 = scmp.ne.s32.totalorder %s137, %s138
    %p147 = scmp.eq.s32.totalorder %s17, 0
    %p148 = por %p146, %p147
    %p149 = scmp.ne.s32.totalorder %s137, %s138
    %p150 = scmp.eq.s32.totalorder %s18, 7
    %p151 = por %p149, %p150
    %p153 = scmp.ne.s32.totalorder %s138, %s152
    %p154 = scmp.eq.s32.totalorder %s18, 0
    %p155 = por %p153, %p154
    %s156 = ssub.s32 %s12, %s19
    %p157 = scmp.eq.s32.totalorder %s156, 0
    %s159 = sadd.s32 %s158, 1
    %s160 = scalar_select %p157, %s158, %s159
    %p163 = pneg %p157
    %p164 = scmp.eq.s32.totalorder %s12, 7
    %p165 = por %p163, %p164
    %p166 = scmp.ne.s32.totalorder %s158, %s161
    %p167 = scmp.eq.s32.totalorder %s12, 0
    %p168 = por %p166, %p167
    %p169 = scmp.ne.s32.totalorder %s158, %s161
    %p170 = scmp.eq.s32.totalorder %s17, 7
    %p171 = por %p169, %p170
    %p172 = scmp.ne.s32.totalorder %s161, %s162
    %p173 = scmp.eq.s32.totalorder %s17, 0
    %p174 = por %p172, %p173
    %p175 = scmp.ne.s32.totalorder %s161, %s162
    %p176 = scmp.eq.s32.totalorder %s18, 7
    %p177 = por %p175, %p176
    %p179 = scmp.ne.s32.totalorder %s162, %s178
    %p180 = scmp.eq.s32.totalorder %s18, 0
    %p181 = por %p179, %p180
    %p182 = scmp.le.s32.totalorder 1, %s12
    %p183 = scmp.lt.s32.totalorder %s12, 9
    %p184 = pnand %p182, %p183
    %p185 = pneg %p184
    // Predicated region
    $region9: #{basic_block_forward.5} parent=5 // pred_check
      _
    $region10: #{basic_block_forward.5} parent=5 // pred_check_branch
      %187 = sbr.rel (%p184) target = $region12
    $region11: #{basic_block_forward.5} parent=5 // pred_region
      %s188 = ssub.s32 %s12, 1
      // Predicated region
      $region13: #{basic_block_forward.5} parent=11 // pred_check
        %p189 = pneg %p85
      $region14: #{basic_block_forward.5} parent=11 // pred_check_branch
        %191 = sbr.rel (%p189) target = $region16
      $region15: #{basic_block_forward.5} parent=11 // pred_region
        _
      $region16: #{basic_block_forward.5} parent=11 // pred_fallthru
        _
      // Predicated region
      $region17: #{basic_block_forward.5} parent=11 // pred_check
        %p192 = pneg %p106
      $region18: #{basic_block_forward.5} parent=11 // pred_check_branch
        %194 = sbr.rel (%p192) target = $region20
      $region19: #{basic_block_forward.5} parent=11 // pred_region
        _
      $region20: #{basic_block_forward.5} parent=11 // pred_fallthru
        _
      // Predicated region
      $region21: #{basic_block_forward.5} parent=11 // pred_check
        %p195 = pneg %p127
      $region22: #{basic_block_forward.5} parent=11 // pred_check_branch
        %197 = sbr.rel (%p195) target = $region24
      $region23: #{basic_block_forward.5} parent=11 // pred_region
        _
      $region24: #{basic_block_forward.5} parent=11 // pred_fallthru
        _
      // Predicated region
      $region25: #{basic_block_forward.5} parent=11 // pred_check
        %p198 = pneg %p148
      $region26: #{basic_block_forward.5} parent=11 // pred_check_branch
        %200 = sbr.rel (%p198) target = $region28
      $region27: #{basic_block_forward.5} parent=11 // pred_region
        _
      $region28: #{basic_block_forward.5} parent=11 // pred_fallthru
        _
    $region12: #{basic_block_forward.5} parent=5 // pred_fallthru
      _
    %p201 = scmp.lt.s32.totalorder %s12, 8
    // Predicated region
    $region29: #{basic_block_forward.5} parent=5 // pred_check
      %p202 = pneg %p201
    $region30: #{basic_block_forward.5} parent=5 // pred_check_branch
      %204 = sbr.rel (%p202) target = $region32
    $region31: #{basic_block_forward.5} parent=5 // pred_region
      // Predicated region
      $region33: #{basic_block_forward.5} parent=31 // pred_check
        %p205 = pneg %p32
      $region34: #{basic_block_forward.5} parent=31 // pred_check_branch
        %207 = sbr.rel (%p205) target = $region36
      $region35: #{basic_block_forward.5} parent=31 // pred_region
        %s208 = smul.u32 8, %s12
        %p209 = scmp.lt.s32.totalorder %s208, 63
        %s210 = scalar_select %p209, %s208, 63
        %s211 = smul.addr %s210, 8
        %s212 = scalar_lea.vmem %s0, %s211
        %s213 = smul.u32 8, %s12
      $region36: #{basic_block_forward.5} parent=31 // pred_fallthru
        _
      // Predicated region
      $region37: #{basic_block_forward.5} parent=31 // pred_check
        %p214 = pneg %p58
      $region38: #{basic_block_forward.5} parent=31 // pred_check_branch
        %216 = sbr.rel (%p214) target = $region40
      $region39: #{basic_block_forward.5} parent=31 // pred_region
        %s217 = smul.u32 8, %s12
        %p218 = scmp.lt.s32.totalorder %s217, 63
        %s219 = scalar_select %p218, %s217, 63
        %s220 = smul.addr %s219, 8
        %s221 = scalar_lea.vmem %s1, %s220
        %s222 = smul.u32 8, %s12
      $region40: #{basic_block_forward.5} parent=31 // pred_fallthru
        _
    $region32: #{basic_block_forward.5} parent=5 // pred_fallthru
      _
    %p223 = scmp.le.s32.totalorder 1, %s12
    %p224 = scmp.lt.s32.totalorder %s12, 9
    %p225 = pnand %p223, %p224
    %p226 = pneg %p225
    // Predicated region
    $region41: #{basic_block_forward.5} parent=5 // pred_check
      _
    $region42: #{basic_block_forward.5} parent=5 // pred_check_branch
      %228 = sbr.rel (%p225) target = $region44
    $region43: #{basic_block_forward.5} parent=5 // pred_region
      %s229 = ssub.s32 %s12, 1
      %s230 = smul.u32 8, %s17
      %p231 = scmp.lt.s32.totalorder %s230, 63
      %s232 = scalar_select %p231, %s230, 63
      %s233 = smul.addr %s232, 8
      %s234 = scalar_lea.vmem %s0, %s233
      %p235 = pneg %p38
      %p236 = pneg %p35
      %s237 = smul.u32 8, %s17
      %p238 = scmp.lt.s32.totalorder %s237, 63
      %s239 = scalar_select %p238, %s237, 63
      %s240 = smul.addr %s239, 8
      %s241 = scalar_lea.vmem %s1, %s240
      %p242 = pneg %p64
      %p243 = pneg %p61
      %p244 = pneg %p85
      %p245 = pneg %p82
      %p246 = pneg %p106
      %p247 = pneg %p103
      %p248 = pneg %p127
      %p249 = pneg %p124
      %p250 = pneg %p148
      %p251 = pneg %p145
      %p252 = pneg %p174
      %p253 = pneg %p171
      %s254 = smul.u32 8, %s17
      %p255 = scmp.lt.s32.totalorder %s254, 63
      %s256 = scalar_select %p255, %s254, 63
      %s257 = smul.addr %s256, 8
      %s258 = scalar_lea.vmem %s6, %s257
      %s259 = smul.u32 8, %s17
      %p260 = scmp.lt.s32.totalorder %s259, 63
      %s261 = scalar_select %p260, %s259, 63
      %s262 = smul.addr %s261, 8
      %s263 = scalar_lea.vmem %s0, %s262
      %s264 = smul.u32 8, %s17
      %s265 = smul.u32 8, %s17
      %p266 = scmp.lt.s32.totalorder %s265, 63
      %s267 = scalar_select %p266, %s265, 63
      %s268 = smul.addr %s267, 8
      %s269 = scalar_lea.vmem %s1, %s268
      %s270 = smul.u32 8, %s17
      %s271 = smul.u32 8, %s17
      %p272 = scmp.lt.s32.totalorder %s271, 63
      %s273 = scalar_select %p272, %s271, 63
      %s274 = smul.addr %s273, 8
      %s275 = scalar_lea.vmem %s6, %s274
      %s276 = smul.u32 8, %s17
      %v277 = vld [vmem:[%s263] sm:$0xff]
      %v278 = vld [vmem:[%s263 + $0x8] sm:$0xff]
      %v279 = vld [vmem:[%s263 + $0x10] sm:$0xff]
      %v280 = vld [vmem:[%s263 + $0x18] sm:$0xff]
      %v281 = vld [vmem:[%s263 + $0x20] sm:$0xff]
      %v282 = vld [vmem:[%s263 + $0x28] sm:$0xff]
      %v283 = vld [vmem:[%s263 + $0x30] sm:$0xff]
      %v284 = vld [vmem:[%s263 + $0x38] sm:$0xff]
      %v285 = vld [vmem:[%s2] sm:$0x1]
      %v287 = vlaneseq
      %v288 = vshrl.u32 %v287, 7
      %v289 = vsub.s32 0, %v288
      %v290 = vrot.slane %v285, %v289
      %v292 = vmul.f32 %v277, %v290
      %v293 = vmul.f32 %v278, %v290
      %v294 = vmul.f32 %v279, %v290
      %v295 = vmul.f32 %v280, %v290
      %v296 = vmul.f32 %v281, %v290
      %v297 = vmul.f32 %v282, %v290
      %v298 = vmul.f32 %v283, %v290
      %v299 = vmul.f32 %v284, %v290
      %v300 = vld [vmem:[%s3] sm:$0x1]
      %v302 = vlaneseq
      %v303 = vshrl.u32 %v302, 7
      %v304 = vsub.s32 0, %v303
      %v305 = vrot.slane %v300, %v304
      %v307 = vadd.f32 %v292, %v305
      %v308 = vadd.f32 %v293, %v305
      %v309 = vadd.f32 %v294, %v305
      %v310 = vadd.f32 %v295, %v305
      %v311 = vadd.f32 %v296, %v305
      %v312 = vadd.f32 %v297, %v305
      %v313 = vadd.f32 %v298, %v305
      %v314 = vadd.f32 %v299, %v305
      %v315 = vld [vmem:[%s269] sm:$0xff]
      %v316 = vld [vmem:[%s269 + $0x8] sm:$0xff]
      %v317 = vld [vmem:[%s269 + $0x10] sm:$0xff]
      %v318 = vld [vmem:[%s269 + $0x18] sm:$0xff]
      %v319 = vld [vmem:[%s269 + $0x20] sm:$0xff]
      %v320 = vld [vmem:[%s269 + $0x28] sm:$0xff]
      %v321 = vld [vmem:[%s269 + $0x30] sm:$0xff]
      %v322 = vld [vmem:[%s269 + $0x38] sm:$0xff]
      %v323 = vld [vmem:[%s4] sm:$0x1]
      %v325 = vlaneseq
      %v326 = vshrl.u32 %v325, 7
      %v327 = vsub.s32 0, %v326
      %v328 = vrot.slane %v323, %v327
      %v330 = vmul.f32 %v315, %v328
      %v331 = vmul.f32 %v316, %v328
      %v332 = vmul.f32 %v317, %v328
      %v333 = vmul.f32 %v318, %v328
      %v334 = vmul.f32 %v319, %v328
      %v335 = vmul.f32 %v320, %v328
      %v336 = vmul.f32 %v321, %v328
      %v337 = vmul.f32 %v322, %v328
      %v338 = vld [vmem:[%s5] sm:$0x1]
      %v340 = vlaneseq
      %v341 = vshrl.u32 %v340, 7
      %v342 = vsub.s32 0, %v341
      %v343 = vrot.slane %v338, %v342
      %v345 = vadd.f32 %v330, %v343
      %v346 = vadd.f32 %v331, %v343
      %v347 = vadd.f32 %v332, %v343
      %v348 = vadd.f32 %v333, %v343
      %v349 = vadd.f32 %v334, %v343
      %v350 = vadd.f32 %v335, %v343
      %v351 = vadd.f32 %v336, %v343
      %v352 = vadd.f32 %v337, %v343
      %v353 = vadd.f32 %v307, %v345
      %v354 = vadd.f32 %v308, %v346
      %v355 = vadd.f32 %v309, %v347
      %v356 = vadd.f32 %v310, %v348
      %v357 = vadd.f32 %v311, %v349
      %v358 = vadd.f32 %v312, %v350
      %v359 = vadd.f32 %v313, %v351
      %v360 = vadd.f32 %v314, %v352
      %v361 = vmax.f32 %v353, 0.0
      %v362 = vmax.f32 %v354, 0.0
      %v363 = vmax.f32 %v355, 0.0
      %v364 = vmax.f32 %v356, 0.0
      %v365 = vmax.f32 %v357, 0.0
      %v366 = vmax.f32 %v358, 0.0
      %v367 = vmax.f32 %v359, 0.0
      %v368 = vmax.f32 %v360, 0.0
      %369 = vst [vmem:[%s275] sm:$0xff] %v361
      %370 = vst [vmem:[%s275 + $0x8] sm:$0xff] %v362
      %371 = vst [vmem:[%s275 + $0x10] sm:$0xff] %v363
      %372 = vst [vmem:[%s275 + $0x18] sm:$0xff] %v364
      %373 = vst [vmem:[%s275 + $0x20] sm:$0xff] %v365
      %374 = vst [vmem:[%s275 + $0x28] sm:$0xff] %v366
      %375 = vst [vmem:[%s275 + $0x30] sm:$0xff] %v367
      %376 = vst [vmem:[%s275 + $0x38] sm:$0xff] %v368
      %s377 = smul.u32 8, %s17
      %p378 = scmp.lt.s32.totalorder %s377, 63
      %s379 = scalar_select %p378, %s377, 63
      %s380 = smul.addr %s379, 8
      %s381 = scalar_lea.vmem %s6, %s380
      // Predicated region
      $region45: #{basic_block_forward.5} parent=43 // pred_check
        %p382 = pneg %p171
      $region46: #{basic_block_forward.5} parent=43 // pred_check_branch
        %384 = sbr.rel (%p382) target = $region48
      $region47: #{basic_block_forward.5} parent=43 // pred_region
        %s385 = smul.u32 8, %s17
      $region48: #{basic_block_forward.5} parent=43 // pred_fallthru
        _
    $region44: #{basic_block_forward.5} parent=5 // pred_fallthru
      _
    %p386 = scmp.le.s32.totalorder 2, %s12
    // Predicated region
    $region49: #{basic_block_forward.5} parent=5 // pred_check
      %p387 = pneg %p386
    $region50: #{basic_block_forward.5} parent=5 // pred_check_branch
      %389 = sbr.rel (%p387) target = $region52
    $region51: #{basic_block_forward.5} parent=5 // pred_region
      %s390 = ssub.s32 %s12, 2
      // Predicated region
      $region53: #{basic_block_forward.5} parent=51 // pred_check
        %p391 = pneg %p177
      $region54: #{basic_block_forward.5} parent=51 // pred_check_branch
        %393 = sbr.rel (%p391) target = $region56
      $region55: #{basic_block_forward.5} parent=51 // pred_region
        %s394 = smul.u32 8, %s18
        %p395 = scmp.lt.s32.totalorder %s394, 63
        %s396 = scalar_select %p395, %s394, 63
        %s397 = smul.addr %s396, 8
        %s398 = scalar_lea.vmem %s6, %s397
      $region56: #{basic_block_forward.5} parent=51 // pred_fallthru
        _
    $region52: #{basic_block_forward.5} parent=5 // pred_fallthru
      _
  $region6: #{basic_block_forward.5} parent=0 // loop_footer
    %s16 = sadd.s32 1, %s12
  $region7: #{basic_block_forward.5} parent=0 // loop_footer_branch
    %11 = sbr.rel target = $region3
  $region8: #{basic_block_forward.5} parent=0 // loop_exit
    _

// kernel: basic_block_forward.4
$region0: #{basic_block_forward.4}
  #allocation0 [shape = 'u32[]', space=smem, size = 0x4, offset = 0x4, fixed_abs, tag = 'smem constant byte address 0x4 - core index']
  #allocation1 [shape = 'u32[144,128]{1,0:T(1,128)}', space=vmem, size = 0x12000, scoped, tag = 'internal scratch']
  %s0 = inlined_call_operand.vmem [shape: f32[2,18,18,128], index: 0, kind: input, shape index: {}]
  %s1 = inlined_call_operand.vmem [shape: bf16[9,128,128], index: 1, kind: input, shape index: {}]
  %s2 = inlined_call_operand.vmem [shape: f32[1,128], index: 2, kind: input, shape index: {}]
  %s3 = inlined_call_operand.vmem [shape: f32[1,128], index: 3, kind: input, shape index: {}]
  %s4 = inlined_call_operand.vmem [shape: f32[2,16,16,128], index: 4, kind: output, shape index: {0}]
  %s5 = inlined_call_operand.vmem [shape: f32[2,4,2,128], index: 5, kind: output, shape index: {1}]
  %6 = xla_tuple %s4, %s5
  %s7 = sld [smem:[#allocation0]]
  $region57: #{basic_block_forward.4} parent=0
    _
  %s9 = ssub.s32 1, %s7
  %s10 = scalar_select 0, %s9, %s7
  loop: start=0, step=1, limit=10
  $region2: #{basic_block_forward.4} parent=0 // loop_pre_header
    _
  $region3: #{basic_block_forward.4} parent=0 // loop_header
    %s12 = sphi 0, %s16
    %p13 = scmp.ge.s32.totalorder %s12, 10
    %s19 = sphi 0, %s31
    %s20 = sphi 0, %s27
    %s21 = sphi 0, %s19
    %s22 = sphi 0, %s20
    %s23 = sphi 0, %s21
    %s24 = sphi 0, %s22
    %s34 = sphi 0, %s36
    %s37 = sphi 0, %s34
    %s38 = sphi 0, %s37
    %s54 = sphi 0, %s38
    %s58 = sphi 0, %s58
    %s60 = sphi 0, %s58
    %s61 = sphi 0, %s60
    %s75 = sphi 0, %s61
    %s79 = sphi 0, %s79
    %s81 = sphi 0, %s79
    %s82 = sphi 0, %s81
    %s96 = sphi 0, %s82
    %s100 = sphi 0, %s100
    %s102 = sphi 0, %s100
    %s103 = sphi 0, %s102
    %s117 = sphi 0, %s103
    %s125 = sphi 0, %s127
    %s128 = sphi 0, %s125
    %s129 = sphi 0, %s128
    %s145 = sphi 0, %s129
    %s153 = sphi 0, %s155
    %s156 = sphi 0, %s153
    %s157 = sphi 0, %s156
    %s173 = sphi 0, %s157
  $region4: #{basic_block_forward.4} parent=0 // loop_header_branch
    %15 = sbr.rel (%p13) target = $region8
  $region5: #{basic_block_forward.4} parent=0 // loop_body
    %s17 = ssub.s32 %s12, 1
    %s18 = ssub.s32 %s12, 2
    %s25 = sadd.s32 1, %s20
    %p26 = scmp.ge.s32.totalorder %s25, 4
    %s27 = scalar_select %p26, 0, %s25
    %s28 = sadd.s32 1, %s19
    %s29 = scalar_select %p26, %s28, %s19
    %p30 = scmp.ge.s32.totalorder %s29, 2
    %s31 = scalar_select %p30, 0, %s29
    %s32 = ssub.s32 %s19, %s31
    %p33 = scmp.eq.s32.totalorder %s32, 0
    %s35 = sadd.s32 %s34, 1
    %s36 = scalar_select %p33, %s34, %s35
    %p39 = pneg %p33
    %p40 = scmp.eq.s32.totalorder %s12, 7
    %p41 = por %p39, %p40
    %p42 = scmp.ne.s32.totalorder %s34, %s37
    %p43 = scmp.eq.s32.totalorder %s12, 0
    %p44 = por %p42, %p43
    %p45 = scmp.ne.s32.totalorder %s34, %s37
    %p46 = scmp.eq.s32.totalorder %s17, 7
    %p47 = por %p45, %p46
    %p48 = scmp.ne.s32.totalorder %s37, %s38
    %p49 = scmp.eq.s32.totalorder %s17, 0
    %p50 = por %p48, %p49
    %p51 = scmp.ne.s32.totalorder %s37, %s38
    %p52 = scmp.eq.s32.totalorder %s18, 7
    %p53 = por %p51, %p52
    %p55 = scmp.ne.s32.totalorder %s38, %s54
    %p56 = scmp.eq.s32.totalorder %s18, 0
    %p57 = por %p55, %p56
    %s59 = sadd.s32 %s58, 1
    %p62 = scmp.eq.s32.totalorder %s12, 7
    %p63 = scmp.ne.s32.totalorder %s58, %s60
    %p64 = scmp.eq.s32.totalorder %s12, 0
    %p65 = por %p63, %p64
    %p66 = scmp.ne.s32.totalorder %s58, %s60
    %p67 = scmp.eq.s32.totalorder %s17, 7
    %p68 = por %p66, %p67
    %p69 = scmp.ne.s32.totalorder %s60, %s61
    %p70 = scmp.eq.s32.totalorder %s17, 0
    %p71 = por %p69, %p70
    %p72 = scmp.ne.s32.totalorder %s60, %s61
    %p73 = scmp.eq.s32.totalorder %s18, 7
    %p74 = por %p72, %p73
    %p76 = scmp.ne.s32.totalorder %s61, %s75
    %p77 = scmp.eq.s32.totalorder %s18, 0
    %p78 = por %p76, %p77
    %s80 = sadd.s32 %s79, 1
    %p83 = scmp.eq.s32.totalorder %s12, 7
    %p84 = scmp.ne.s32.totalorder %s79, %s81
    %p85 = scmp.eq.s32.totalorder %s12, 0
    %p86 = por %p84, %p85
    %p87 = scmp.ne.s32.totalorder %s79, %s81
    %p88 = scmp.eq.s32.totalorder %s17, 7
    %p89 = por %p87, %p88
    %p90 = scmp.ne.s32.totalorder %s81, %s82
    %p91 = scmp.eq.s32.totalorder %s17, 0
    %p92 = por %p90, %p91
    %p93 = scmp.ne.s32.totalorder %s81, %s82
    %p94 = scmp.eq.s32.totalorder %s18, 7
    %p95 = por %p93, %p94
    %p97 = scmp.ne.s32.totalorder %s82, %s96
    %p98 = scmp.eq.s32.totalorder %s18, 0
    %p99 = por %p97, %p98
    %s101 = sadd.s32 %s100, 1
    %p104 = scmp.eq.s32.totalorder %s12, 7
    %p105 = scmp.ne.s32.totalorder %s100, %s102
    %p106 = scmp.eq.s32.totalorder %s12, 0
    %p107 = por %p105, %p106
    %p108 = scmp.ne.s32.totalorder %s100, %s102
    %p109 = scmp.eq.s32.totalorder %s17, 7
    %p110 = por %p108, %p109
    %p111 = scmp.ne.s32.totalorder %s102, %s103
    %p112 = scmp.eq.s32.totalorder %s17, 0
    %p113 = por %p111, %p112
    %p114 = scmp.ne.s32.totalorder %s102, %s103
    %p115 = scmp.eq.s32.totalorder %s18, 7
    %p116 = por %p114, %p115
    %p118 = scmp.ne.s32.totalorder %s103, %s117
    %p119 = scmp.eq.s32.totalorder %s18, 0
    %p120 = por %p118, %p119
    %s121 = ssub.s32 %s19, %s31
    %s122 = ssub.s32 %s20, %s27
    %s123 = sor.u32 %s121, %s122
    %p124 = scmp.eq.s32.totalorder %s123, 0
    %s126 = sadd.s32 %s125, 1
    %s127 = scalar_select %p124, %s125, %s126
    %p130 = pneg %p124
    %p131 = scmp.eq.s32.totalorder %s12, 7
    %p132 = por %p130, %p131
    %p133 = scmp.ne.s32.totalorder %s125, %s128
    %p134 = scmp.eq.s32.totalorder %s12, 0
    %p135 = por %p133, %p134
    %p136 = scmp.ne.s32.totalorder %s125, %s128
    %p137 = scmp.eq.s32.totalorder %s17, 7
    %p138 = por %p136, %p137
    %p139 = scmp.ne.s32.totalorder %s128, %s129
    %p140 = scmp.eq.s32.totalorder %s17, 0
    %p141 = por %p139, %p140
    %p142 = scmp.ne.s32.totalorder %s128, %s129
    %p143 = scmp.eq.s32.totalorder %s18, 7
    %p144 = por %p142, %p143
    %p146 = scmp.ne.s32.totalorder %s129, %s145
    %p147 = scmp.eq.s32.totalorder %s18, 0
    %p148 = por %p146, %p147
    %s149 = ssub.s32 %s19, %s31
    %s150 = ssub.s32 %s20, %s27
    %s151 = sor.u32 %s149, %s150
    %p152 = scmp.eq.s32.totalorder %s151, 0
    %s154 = sadd.s32 %s153, 1
    %s155 = scalar_select %p152, %s153, %s154
    %p158 = pneg %p152
    %p159 = scmp.eq.s32.totalorder %s12, 7
    %p160 = por %p158, %p159
    %p161 = scmp.ne.s32.totalorder %s153, %s156
    %p162 = scmp.eq.s32.totalorder %s12, 0
    %p163 = por %p161, %p162
    %p164 = scmp.ne.s32.totalorder %s153, %s156
    %p165 = scmp.eq.s32.totalorder %s17, 7
    %p166 = por %p164, %p165
    %p167 = scmp.ne.s32.totalorder %s156, %s157
    %p168 = scmp.eq.s32.totalorder %s17, 0
    %p169 = por %p167, %p168
    %p170 = scmp.ne.s32.totalorder %s156, %s157
    %p171 = scmp.eq.s32.totalorder %s18, 7
    %p172 = por %p170, %p171
    %p174 = scmp.ne.s32.totalorder %s157, %s173
    %p175 = scmp.eq.s32.totalorder %s18, 0
    %p176 = por %p174, %p175
    %p177 = scmp.le.s32.totalorder 1, %s12
    %p178 = scmp.lt.s32.totalorder %s12, 9
    %p179 = pnand %p177, %p178
    %p180 = pneg %p179
    // Predicated region
    $region9: #{basic_block_forward.4} parent=5 // pred_check
      _
    $region10: #{basic_block_forward.4} parent=5 // pred_check_branch
      %182 = sbr.rel (%p179) target = $region12
    $region11: #{basic_block_forward.4} parent=5 // pred_region
      %s183 = ssub.s32 %s12, 1
      // Predicated region
      $region13: #{basic_block_forward.4} parent=11 // pred_check
        %p184 = pneg %p71
      $region14: #{basic_block_forward.4} parent=11 // pred_check_branch
        %186 = sbr.rel (%p184) target = $region16
      $region15: #{basic_block_forward.4} parent=11 // pred_region
        _
      $region16: #{basic_block_forward.4} parent=11 // pred_fallthru
        _
      // Predicated region
      $region17: #{basic_block_forward.4} parent=11 // pred_check
        %p187 = pneg %p92
      $region18: #{basic_block_forward.4} parent=11 // pred_check_branch
        %189 = sbr.rel (%p187) target = $region20
      $region19: #{basic_block_forward.4} parent=11 // pred_region
        _
      $region20: #{basic_block_forward.4} parent=11 // pred_fallthru
        _
      // Predicated region
      $region21: #{basic_block_forward.4} parent=11 // pred_check
        %p190 = pneg %p113
      $region22: #{basic_block_forward.4} parent=11 // pred_check_branch
        %192 = sbr.rel (%p190) target = $region24
      $region23: #{basic_block_forward.4} parent=11 // pred_region
        _
      $region24: #{basic_block_forward.4} parent=11 // pred_fallthru
        _
    $region12: #{basic_block_forward.4} parent=5 // pred_fallthru
      _
    %p193 = scmp.lt.s32.totalorder %s12, 8
    // Predicated region
    $region25: #{basic_block_forward.4} parent=5 // pred_check
      %p194 = pneg %p193
    $region26: #{basic_block_forward.4} parent=5 // pred_check_branch
      %196 = sbr.rel (%p194) target = $region28
    $region27: #{basic_block_forward.4} parent=5 // pred_region
      // Predicated region
      $region29: #{basic_block_forward.4} parent=27 // pred_check
        %p197 = pneg %p44
      $region30: #{basic_block_forward.4} parent=27 // pred_check_branch
        %199 = sbr.rel (%p197) target = $region32
      $region31: #{basic_block_forward.4} parent=27 // pred_region
        %p200 = scmp.lt.s32.totalorder %s19, 1
        %s201 = scalar_select %p200, %s19, 1
        %s202 = smul.addr %s201, 54
        %s203 = smul.addr %s202, 8
        %s204 = scalar_lea.vmem %s0, %s203
      $region32: #{basic_block_forward.4} parent=27 // pred_fallthru
        _
    $region28: #{basic_block_forward.4} parent=5 // pred_fallthru
      _
    %p205 = scmp.le.s32.totalorder 1, %s12
    %p206 = scmp.lt.s32.totalorder %s12, 9
    %p207 = pnand %p205, %p206
    %p208 = pneg %p207
    // Predicated region
    $region33: #{basic_block_forward.4} parent=5 // pred_check
      _
    $region34: #{basic_block_forward.4} parent=5 // pred_check_branch
      %210 = sbr.rel (%p207) target = $region36
    $region35: #{basic_block_forward.4} parent=5 // pred_region
      %s211 = ssub.s32 %s12, 1
      %p212 = scmp.lt.s32.totalorder %s21, 1
      %s213 = scalar_select %p212, %s21, 1
      %s214 = smul.addr %s213, 54
      %s215 = smul.addr %s214, 8
      %s216 = scalar_lea.vmem %s0, %s215
      %p217 = pneg %p50
      %p218 = pneg %p47
      %p219 = pneg %p71
      %p220 = pneg %p68
      %p221 = pneg %p92
      %p222 = pneg %p89
      %p223 = pneg %p113
      %p224 = pneg %p110
      %p225 = pneg %p141
      %p226 = pneg %p138
      %s227 = smul.u32 4, %s22
      %p228 = scmp.lt.s32.totalorder %s21, 1
      %s229 = scalar_select %p228, %s21, 1
      %p230 = scmp.lt.s32.totalorder %s227, 15
      %s231 = scalar_select %p230, %s227, 15
      %s232 = smul.addr %s231, 2
      %s233 = smul.addr %s229, 32
      %s234 = sadd.s32 %s232, %s233
      %s235 = smul.addr %s234, 8
      %s236 = scalar_lea.vmem %s4, %s235
      %p237 = pneg %p169
      %p238 = pneg %p166
      %p239 = scmp.lt.s32.totalorder %s21, 1
      %s240 = scalar_select %p239, %s21, 1
      %p241 = scmp.lt.s32.totalorder %s22, 3
      %s242 = scalar_select %p241, %s22, 3
      %s243 = smul.addr %s240, 4
      %s244 = sadd.s32 %s242, %s243
      %s245 = smul.addr %s244, 2
      %s246 = scalar_lea.vmem %s5, %s245
      %p247 = scmp.lt.s32.totalorder %s21, 1
      %s248 = scalar_select %p247, %s21, 1
      %s249 = smul.addr %s248, 54
      %s250 = smul.addr %s249, 8
      %s251 = scalar_lea.vmem %s0, %s250
      %s252 = smul.u32 4, %s22
      %p253 = scmp.lt.s32.totalorder %s21, 1
      %s254 = scalar_select %p253, %s21, 1
      %p255 = scmp.lt.s32.totalorder %s252, 15
      %s256 = scalar_select %p255, %s252, 15
      %s257 = smul.addr %s256, 2
      %s258 = smul.addr %s254, 32
      %s259 = sadd.s32 %s257, %s258
      %s260 = smul.addr %s259, 8
      %s261 = scalar_lea.vmem %s4, %s260
      %s262 = smul.u32 4, %s22
      %p263 = scmp.lt.s32.totalorder %s21, 1
      %s264 = scalar_select %p263, %s21, 1
      %p265 = scmp.lt.s32.totalorder %s22, 3
      %s266 = scalar_select %p265, %s22, 3
      %s267 = smul.addr %s264, 4
      %s268 = sadd.s32 %s266, %s267
      %s269 = smul.addr %s268, 2
      %s270 = scalar_lea.vmem %s5, %s269
      %s272 = smul.u32 %s22, 4
      %s273 = smul.u32 %s272, 24
      %s274 = scalar_lea.vmem %s251, %s273
      %v275 = vld [vmem:[%s274] sm:$0xff]
      %v276 = vld [vmem:[%s274 + $0x8] sm:$0xff]
      %v277 = vld [vmem:[%s274 + $0x10] sm:$0x3]
      %v278 = vld [vmem:[%s274 + $0x18] sm:$0xff]
      %v279 = vld [vmem:[%s274 + $0x20] sm:$0xff]
      %v280 = vld [vmem:[%s274 + $0x28] sm:$0x3]
      %v281 = vld [vmem:[%s274 + $0x30] sm:$0xff]
      %v282 = vld [vmem:[%s274 + $0x38] sm:$0xff]
      %v283 = vld [vmem:[%s274 + $0x40] sm:$0x3]
      %v284 = vld [vmem:[%s274 + $0x48] sm:$0xff]
      %v285 = vld [vmem:[%s274 + $0x50] sm:$0xff]
      %v286 = vld [vmem:[%s274 + $0x58] sm:$0x3]
      %v287 = vld [vmem:[%s274 + $0x60] sm:$0xff]
      %v288 = vld [vmem:[%s274 + $0x68] sm:$0xff]
      %v289 = vld [vmem:[%s274 + $0x70] sm:$0x3]
      %v290 = vld [vmem:[%s274 + $0x78] sm:$0xff]
      %v291 = vld [vmem:[%s274 + $0x80] sm:$0xff]
      %v292 = vld [vmem:[%s274 + $0x88] sm:$0x3]
      %v293 = vld [vmem:[%s2] sm:$0x1]
      %v295 = vlaneseq
      %v296 = vshrl.u32 %v295, 7
      %v297 = vsub.s32 0, %v296
      %v298 = vrot.slane %v293, %v297
      %v300 = vmul.f32 %v275, %v298
      %v301 = vmul.f32 %v276, %v298
      %v302 = vmul.f32 %v277, %v298
      %v303 = vmul.f32 %v278, %v298
      %v304 = vmul.f32 %v279, %v298
      %v305 = vmul.f32 %v280, %v298
      %v306 = vmul.f32 %v281, %v298
      %v307 = vmul.f32 %v282, %v298
      %v308 = vmul.f32 %v283, %v298
      %v309 = vmul.f32 %v284, %v298
      %v310 = vmul.f32 %v285, %v298
      %v311 = vmul.f32 %v286, %v298
      %v312 = vmul.f32 %v287, %v298
      %v313 = vmul.f32 %v288, %v298
      %v314 = vmul.f32 %v289, %v298
      %v315 = vmul.f32 %v290, %v298
      %v316 = vmul.f32 %v291, %v298
      %v317 = vmul.f32 %v292, %v298
      %v318 = vld [vmem:[%s3] sm:$0x1]
      %v320 = vlaneseq
      %v321 = vshrl.u32 %v320, 7
      %v322 = vsub.s32 0, %v321
      %v323 = vrot.slane %v318, %v322
      %v325 = vadd.f32 %v300, %v323
      %v326 = vadd.f32 %v301, %v323
      %v327 = vadd.f32 %v302, %v323
      %v328 = vadd.f32 %v303, %v323
      %v329 = vadd.f32 %v304, %v323
      %v330 = vadd.f32 %v305, %v323
      %v331 = vadd.f32 %v306, %v323
      %v332 = vadd.f32 %v307, %v323
      %v333 = vadd.f32 %v308, %v323
      %v334 = vadd.f32 %v309, %v323
      %v335 = vadd.f32 %v310, %v323
      %v336 = vadd.f32 %v311, %v323
      %v337 = vadd.f32 %v312, %v323
      %v338 = vadd.f32 %v313, %v323
      %v339 = vadd.f32 %v314, %v323
      %v340 = vadd.f32 %v315, %v323
      %v341 = vadd.f32 %v316, %v323
      %v342 = vadd.f32 %v317, %v323
      %v343 = vmax.f32 %v325, 0.0
      %v344 = vmax.f32 %v326, 0.0
      %v345 = vmax.f32 %v327, 0.0
      %v346 = vmax.f32 %v328, 0.0
      %v347 = vmax.f32 %v329, 0.0
      %v348 = vmax.f32 %v330, 0.0
      %v349 = vmax.f32 %v331, 0.0
      %v350 = vmax.f32 %v332, 0.0
      %v351 = vmax.f32 %v333, 0.0
      %v352 = vmax.f32 %v334, 0.0
      %v353 = vmax.f32 %v335, 0.0
      %v354 = vmax.f32 %v336, 0.0
      %v355 = vmax.f32 %v337, 0.0
      %v356 = vmax.f32 %v338, 0.0
      %v357 = vmax.f32 %v339, 0.0
      %v358 = vmax.f32 %v340, 0.0
      %v359 = vmax.f32 %v341, 0.0
      %v360 = vmax.f32 %v342, 0.0
      %v361 = vstv %s272
      %v362 = vadd.s32 %v361, 1
      %v363 = vadd.s32 %v361, 2
      %v364 = vadd.s32 %v361, 3
      %v365 = vadd.s32 %v361, 4
      %v366 = vadd.s32 %v361, 5
      %v367 = vlaneseq
      %v368 = vshrl.u32 %v367, 7
      %v369 = vadd.s32 %v368, 8
      %v370 = vadd.s32 %v368, 16
      %vm371 = vcmp.ge.s32.totalorder %v361, 1
      %vm372 = vcmp.ge.s32.totalorder %v362, 1
      %vm373 = vcmp.ge.s32.totalorder %v363, 1
      %vm374 = vcmp.ge.s32.totalorder %v364, 1
      %vm375 = vcmp.ge.s32.totalorder %v365, 1
      %vm376 = vcmp.ge.s32.totalorder %v366, 1
      %vm377 = vcmp.le.s32.totalorder %v361, 16
      %vm378 = vcmp.le.s32.totalorder %v362, 16
      %vm379 = vcmp.le.s32.totalorder %v363, 16
      %vm380 = vcmp.le.s32.totalorder %v364, 16
      %vm381 = vcmp.le.s32.totalorder %v365, 16
      %vm382 = vcmp.le.s32.totalorder %v366, 16
      %vm383 = vmand %vm371, %vm377
      %vm384 = vmand %vm372, %vm378
      %vm385 = vmand %vm373, %vm379
      %vm386 = vmand %vm374, %vm380
      %vm387 = vmand %vm375, %vm381
      %vm388 = vmand %vm376, %vm382
      %vm389 = vcmp.ge.s32.totalorder %v368, 1
      %vm390 = vcmp.ge.s32.totalorder %v369, 1
      %vm391 = vcmp.ge.s32.totalorder %v370, 1
      %vm392 = vmand %vm383, %vm389
      %vm393 = vmand %vm383, %vm390
      %vm394 = vmand %vm383, %vm391
      %vm395 = vmand %vm384, %vm389
      %vm396 = vmand %vm384, %vm390
      %vm397 = vmand %vm384, %vm391
      %vm398 = vmand %vm385, %vm389
      %vm399 = vmand %vm385, %vm390
      %vm400 = vmand %vm385, %vm391
      %vm401 = vmand %vm386, %vm389
      %vm402 = vmand %vm386, %vm390
      %vm403 = vmand %vm386, %vm391
      %vm404 = vmand %vm387, %vm389
      %vm405 = vmand %vm387, %vm390
      %vm406 = vmand %vm387, %vm391
      %vm407 = vmand %vm388, %vm389
      %vm408 = vmand %vm388, %vm390
      %vm409 = vmand %vm388, %vm391
      %vm410 = vcmp.le.s32.totalorder %v368, 16
      %vm411 = vcmp.le.s32.totalorder %v369, 16
      %vm412 = vcmp.le.s32.totalorder %v370, 16
      %vm413 = vmand %vm392, %vm410
      %vm414 = vmand %vm393, %vm411
      %vm415 = vmand %vm394, %vm412
      %vm416 = vmand %vm395, %vm410
      %vm417 = vmand %vm396, %vm411
      %vm418 = vmand %vm397, %vm412
      %vm419 = vmand %vm398, %vm410
      %vm420 = vmand %vm399, %vm411
      %vm421 = vmand %vm400, %vm412
      %vm422 = vmand %vm401, %vm410
      %vm423 = vmand %vm402, %vm411
      %vm424 = vmand %vm403, %vm412
      %vm425 = vmand %vm404, %vm410
      %vm426 = vmand %vm405, %vm411
      %vm427 = vmand %vm406, %vm412
      %vm428 = vmand %vm407, %vm410
      %vm429 = vmand %vm408, %vm411
      %vm430 = vmand %vm409, %vm412
      %v431 = vsel %vm413, 1, 0
      %v432 = vsel %vm414, 1, 0
      %v433 = vsel %vm415, 1, 0
      %v434 = vsel %vm416, 1, 0
      %v435 = vsel %vm417, 1, 0
      %v436 = vsel %vm418, 1, 0
      %v437 = vsel %vm419, 1, 0
      %v438 = vsel %vm420, 1, 0
      %v439 = vsel %vm421, 1, 0
      %v440 = vsel %vm422, 1, 0
      %v441 = vsel %vm423, 1, 0
      %v442 = vsel %vm424, 1, 0
      %v443 = vsel %vm425, 1, 0
      %v444 = vsel %vm426, 1, 0
      %v445 = vsel %vm427, 1, 0
      %v446 = vsel %vm428, 1, 0
      %v447 = vsel %vm429, 1, 0
      %v448 = vsel %vm430, 1, 0
      %vm449 = vcmp.eq.s32.totalorder %v431, 1
      %vm450 = vcmp.eq.s32.totalorder %v432, 1
      %vm451 = vcmp.eq.s32.totalorder %v433, 1
      %vm452 = vcmp.eq.s32.totalorder %v434, 1
      %vm453 = vcmp.eq.s32.totalorder %v435, 1
      %vm454 = vcmp.eq.s32.totalorder %v436, 1
      %vm455 = vcmp.eq.s32.totalorder %v437, 1
      %vm456 = vcmp.eq.s32.totalorder %v438, 1
      %vm457 = vcmp.eq.s32.totalorder %v439, 1
      %vm458 = vcmp.eq.s32.totalorder %v440, 1
      %vm459 = vcmp.eq.s32.totalorder %v441, 1
      %vm460 = vcmp.eq.s32.totalorder %v442, 1
      %vm461 = vcmp.eq.s32.totalorder %v443, 1
      %vm462 = vcmp.eq.s32.totalorder %v444, 1
      %vm463 = vcmp.eq.s32.totalorder %v445, 1
      %vm464 = vcmp.eq.s32.totalorder %v446, 1
      %vm465 = vcmp.eq.s32.totalorder %v447, 1
      %vm466 = vcmp.eq.s32.totalorder %v448, 1
      %v467 = vsel %vm449, %v343, 0.0
      %v468 = vsel %vm450, %v344, 0.0
      %v469 = vsel %vm451, %v345, 0.0
      %v470 = vsel %vm452, %v346, 0.0
      %v471 = vsel %vm453, %v347, 0.0
      %v472 = vsel %vm454, %v348, 0.0
      %v473 = vsel %vm455, %v349, 0.0
      %v474 = vsel %vm456, %v350, 0.0
      %v475 = vsel %vm457, %v351, 0.0
      %v476 = vsel %vm458, %v352, 0.0
      %v477 = vsel %vm459, %v353, 0.0
      %v478 = vsel %vm460, %v354, 0.0
      %v479 = vsel %vm461, %v355, 0.0
      %v480 = vsel %vm462, %v356, 0.0
      %v481 = vsel %vm463, %v357, 0.0
      %v482 = vsel %vm464, %v358, 0.0
      %v483 = vsel %vm465, %v359, 0.0
      %v484 = vsel %vm466, %v360, 0.0
      %v485 = vpack.c.bf16 %v468, %v467
      %v486 = vpack.c.bf16 %v469, %v469
      %v487 = vpack.c.bf16 %v471, %v470
      %v488 = vpack.c.bf16 %v472, %v472
      %v489 = vpack.c.bf16 %v474, %v473
      %v490 = vpack.c.bf16 %v475, %v475
      %v491 = vpack.c.bf16 %v477, %v476
      %v492 = vpack.c.bf16 %v478, %v478
      %v493 = vpack.c.bf16 %v480, %v479
      %v494 = vpack.c.bf16 %v481, %v481
      %v495 = vpack.c.bf16 %v483, %v482
      %v496 = vpack.c.bf16 %v484, %v484
      %v497 = vld [vmem:[%s1] sm:$0xf]
      %v498 = vld [vmem:[%s1 + $0x4] sm:$0xf]
      %v499 = vld [vmem:[%s1 + $0x8] sm:$0xf]
      %v500 = vld [vmem:[%s1 + $0xc] sm:$0xf]
      %v501 = vld [vmem:[%s1 + $0x10] sm:$0xf]
      %v502 = vld [vmem:[%s1 + $0x14] sm:$0xf]
      %v503 = vld [vmem:[%s1 + $0x18] sm:$0xf]
      %v504 = vld [vmem:[%s1 + $0x1c] sm:$0xf]
      %v505 = vld [vmem:[%s1 + $0x20] sm:$0xf]
      %v506 = vld [vmem:[%s1 + $0x24] sm:$0xf]
      %v507 = vld [vmem:[%s1 + $0x28] sm:$0xf]
      %v508 = vld [vmem:[%s1 + $0x2c] sm:$0xf]
      %v509 = vld [vmem:[%s1 + $0x30] sm:$0xf]
      %v510 = vld [vmem:[%s1 + $0x34] sm:$0xf]
      %v511 = vld [vmem:[%s1 + $0x38] sm:$0xf]
      %v512 = vld [vmem:[%s1 + $0x3c] sm:$0xf]
      %vm513 = vsmask.f32 7424
      %v515 = vshrl.u32 %v485, 16
      %v517 = vshll.u32 %v485, 16
      %v519 = vrot.slane %v517, 1
      %v520 = vor.u32 %v515, %v519
      %v522 = vshll.u32 %v486, 16
      %v524 = vrot.slane %v522, 1
      %v525 = vsel %vm513, %v520, %v524
      %v527 = vshrl.u32 %v487, 16
      %v529 = vshll.u32 %v487, 16
      %v531 = vrot.slane %v529, 1
      %v532 = vor.u32 %v527, %v531
      %v534 = vshll.u32 %v488, 16
      %v536 = vrot.slane %v534, 1
      %v537 = vsel %vm513, %v532, %v536
      %v539 = vshrl.u32 %v489, 16
      %v541 = vshll.u32 %v489, 16
      %v543 = vrot.slane %v541, 1
      %v544 = vor.u32 %v539, %v543
      %v546 = vshll.u32 %v490, 16
      %v548 = vrot.slane %v546, 1
      %v549 = vsel %vm513, %v544, %v548
      %v551 = vshrl.u32 %v491, 16
      %v553 = vshll.u32 %v491, 16
      %v555 = vrot.slane %v553, 1
      %v556 = vor.u32 %v551, %v555
      %v558 = vshll.u32 %v492, 16
      %v560 = vrot.slane %v558, 1
      %v561 = vsel %vm513, %v556, %v560
      %s566 = scalar_lea.vmem %s1, 64
      %v567 = vld [vmem:[%s566] sm:$0xf]
      %v568 = vld [vmem:[%s566 + $0x4] sm:$0xf]
      %v569 = vld [vmem:[%s566 + $0x8] sm:$0xf]
      %v570 = vld [vmem:[%s566 + $0xc] sm:$0xf]
      %v571 = vld [vmem:[%s566 + $0x10] sm:$0xf]
      %v572 = vld [vmem:[%s566 + $0x14] sm:$0xf]
      %v573 = vld [vmem:[%s566 + $0x18] sm:$0xf]
      %v574 = vld [vmem:[%s566 + $0x1c] sm:$0xf]
      %v575 = vld [vmem:[%s566 + $0x20] sm:$0xf]
      %v576 = vld [vmem:[%s566 + $0x24] sm:$0xf]
      %v577 = vld [vmem:[%s566 + $0x28] sm:$0xf]
      %v578 = vld [vmem:[%s566 + $0x2c] sm:$0xf]
      %v579 = vld [vmem:[%s566 + $0x30] sm:$0xf]
      %v580 = vld [vmem:[%s566 + $0x34] sm:$0xf]
      %v581 = vld [vmem:[%s566 + $0x38] sm:$0xf]
      %v582 = vld [vmem:[%s566 + $0x3c] sm:$0xf]
      %v599 = vunpack.c.l.b16 %v567
      %v600 = vunpack.c.l.b16 %v568
      %v601 = vunpack.c.l.b16 %v569
      %v602 = vunpack.c.l.b16 %v570
      %v603 = vunpack.c.l.b16 %v571
      %v604 = vunpack.c.l.b16 %v572
      %v605 = vunpack.c.l.b16 %v573
      %v606 = vunpack.c.l.b16 %v574
      %v607 = vunpack.c.l.b16 %v575
      %v608 = vunpack.c.l.b16 %v576
      %v609 = vunpack.c.l.b16 %v577
      %v610 = vunpack.c.l.b16 %v578
      %v611 = vunpack.c.l.b16 %v579
      %v612 = vunpack.c.l.b16 %v580
      %v613 = vunpack.c.l.b16 %v581
      %v614 = vunpack.c.l.b16 %v582
      %v615 = vpack.c.b16 %v600, %v599
      %v616 = vpack.c.b16 %v602, %v601
      %v617 = vpack.c.b16 %v604, %v603
      %v618 = vpack.c.b16 %v606, %v605
      %v619 = vpack.c.b16 %v608, %v607
      %v620 = vpack.c.b16 %v610, %v609
      %v621 = vpack.c.b16 %v612, %v611
      %v622 = vpack.c.b16 %v614, %v613
      %631 = vmatprep.subr.bf16.mxu0 0
      %632 = vmatpush1.bf16.msra.mxu0 %v615
      %633 = vmatprep.subr.bf16.mxu0 0
      %634 = vmatpush1.bf16.msra.mxu0 %v616
      %635 = vmatprep.subr.bf16.mxu0 0
      %636 = vmatpush1.bf16.msra.mxu0 %v617
      %637 = vmatprep.subr.bf16.mxu0 0
      %638 = vmatpush1.bf16.msra.mxu0 %v618
      %639 = vmatprep.subr.bf16.mxu0 0
      %640 = vmatpush1.bf16.msra.mxu0 %v619
      %641 = vmatprep.subr.bf16.mxu0 0
      %642 = vmatpush1.bf16.msra.mxu0 %v620
      %643 = vmatprep.subr.bf16.mxu0 0
      %644 = vmatpush1.bf16.msra.mxu0 %v621
      %645 = vmatprep.subr.bf16.mxu0 0
      %646 = vmatpush1.bf16.msra.mxu0 %v622
      %647 = vmatprep.subr.bf16.mxu0 0
      %648 = vmatpush1.bf16.msra.mxu0 0
      %649 = vmatprep.subr.bf16.mxu0 0
      %650 = vmatpush1.bf16.msra.mxu0 0
      %651 = vmatprep.subr.bf16.mxu0 0
      %652 = vmatpush1.bf16.msra.mxu0 0
      %653 = vmatprep.subr.bf16.mxu0 0
      %654 = vmatpush1.bf16.msra.mxu0 0
      %655 = vmatprep.subr.bf16.mxu0 0
      %656 = vmatpush1.bf16.msra.mxu0 0
      %657 = vmatprep.subr.bf16.mxu0 0
      %658 = vmatpush1.bf16.msra.mxu0 0
      %659 = vmatprep.subr.bf16.mxu0 0
      %660 = vmatpush1.bf16.msra.mxu0 0
      %661 = vmatprep.subr.bf16.mxu0 0
      %662 = vmatpush1.bf16.msra.mxu0 0
      %663 = vmatprep.mubr.bf16.mxu0 0
      %664 = vmatmul.mubr.bf16.gmra.mrb[0].mxu0 %v525
      %v665 = vpop.f32.mrb[0].mxu0
      %v666 = vadd.f32 0.0, %v665
      %v667 = vpop.f32.mrb[0].mxu0
      %v668 = vpop.f32.mrb[0].mxu0
      %v669 = vadd.f32 0.0, %v668
      %v670 = vpop.f32.mrb[0].mxu0
      %671 = vmatprep.mubr.bf16.mxu0 0
      %672 = vmatmul.mubr.bf16.gmra.mrb[0].mxu0 %v537
      %v673 = vpop.f32.mrb[0].mxu0
      %v674 = vadd.f32 0.0, %v673
      %v675 = vpop.f32.mrb[0].mxu0
      %v676 = vpop.f32.mrb[0].mxu0
      %v677 = vadd.f32 0.0, %v676
      %v678 = vpop.f32.mrb[0].mxu0
      %679 = vmatprep.mubr.bf16.mxu0 0
      %680 = vmatmul.mubr.bf16.gmra.mrb[0].mxu0 %v549
      %v681 = vpop.f32.mrb[0].mxu0
      %v682 = vadd.f32 0.0, %v681
      %v683 = vpop.f32.mrb[0].mxu0
      %v684 = vpop.f32.mrb[0].mxu0
      %v685 = vadd.f32 0.0, %v684
      %v686 = vpop.f32.mrb[0].mxu0
      %687 = vmatprep.mubr.bf16.mxu0 0
      %688 = vmatmul.mubr.bf16.gmra.mrb[0].mxu0 %v561
      %v689 = vpop.f32.mrb[0].mxu0
      %v690 = vadd.f32 0.0, %v689
      %v691 = vpop.f32.mrb[0].mxu0
      %v692 = vpop.f32.mrb[0].mxu0
      %v693 = vadd.f32 0.0, %v692
      %v694 = vpop.f32.mrb[0].mxu0
      %695 = vdwg.mxu0
      %v712 = vunpack.c.l.b16 %v497
      %v713 = vunpack.c.l.b16 %v498
      %v714 = vunpack.c.l.b16 %v499
      %v715 = vunpack.c.l.b16 %v500
      %v716 = vunpack.c.l.b16 %v501
      %v717 = vunpack.c.l.b16 %v502
      %v718 = vunpack.c.l.b16 %v503
      %v719 = vunpack.c.l.b16 %v504
      %v720 = vunpack.c.l.b16 %v505
      %v721 = vunpack.c.l.b16 %v506
      %v722 = vunpack.c.l.b16 %v507
      %v723 = vunpack.c.l.b16 %v508
      %v724 = vunpack.c.l.b16 %v509
      %v725 = vunpack.c.l.b16 %v510
      %v726 = vunpack.c.l.b16 %v511
      %v727 = vunpack.c.l.b16 %v512
      %v728 = vpack.c.b16 %v713, %v712
      %v729 = vpack.c.b16 %v715, %v714
      %v730 = vpack.c.b16 %v717, %v716
      %v731 = vpack.c.b16 %v719, %v718
      %v732 = vpack.c.b16 %v721, %v720
      %v733 = vpack.c.b16 %v723, %v722
      %v734 = vpack.c.b16 %v725, %v724
      %v735 = vpack.c.b16 %v727, %v726
      %744 = vmatprep.subr.bf16.mxu0 0
      %745 = vmatpush1.bf16.msra.mxu0 %v728
      %746 = vmatprep.subr.bf16.mxu0 0
      %747 = vmatpush1.bf16.msra.mxu0 %v729
      %748 = vmatprep.subr.bf16.mxu0 0
      %749 = vmatpush1.bf16.msra.mxu0 %v730
      %750 = vmatprep.subr.bf16.mxu0 0
      %751 = vmatpush1.bf16.msra.mxu0 %v731
      %752 = vmatprep.subr.bf16.mxu0 0
      %753 = vmatpush1.bf16.msra.mxu0 %v732
      %754 = vmatprep.subr.bf16.mxu0 0
      %755 = vmatpush1.bf16.msra.mxu0 %v733
      %756 = vmatprep.subr.bf16.mxu0 0
      %757 = vmatpush1.bf16.msra.mxu0 %v734
      %758 = vmatprep.subr.bf16.mxu0 0
      %759 = vmatpush1.bf16.msra.mxu0 %v735
      %760 = vmatprep.subr.bf16.mxu0 0
      %761 = vmatpush1.bf16.msra.mxu0 0
      %762 = vmatprep.subr.bf16.mxu0 0
      %763 = vmatpush1.bf16.msra.mxu0 0
      %764 = vmatprep.subr.bf16.mxu0 0
      %765 = vmatpush1.bf16.msra.mxu0 0
      %766 = vmatprep.subr.bf16.mxu0 0
      %767 = vmatpush1.bf16.msra.mxu0 0
      %768 = vmatprep.subr.bf16.mxu0 0
      %769 = vmatpush1.bf16.msra.mxu0 0
      %770 = vmatprep.subr.bf16.mxu0 0
      %771 = vmatpush1.bf16.msra.mxu0 0
      %772 = vmatprep.subr.bf16.mxu0 0
      %773 = vmatpush1.bf16.msra.mxu0 0
      %774 = vmatprep.subr.bf16.mxu0 0
      %775 = vmatpush1.bf16.msra.mxu0 0
      %776 = vmatprep.mubr.bf16.mxu0 0
      %777 = vmatmul.mubr.bf16.gmra.mrb[0].mxu0 %v485
      %v778 = vpop.f32.mrb[0].mxu0
      %v779 = vadd.f32 %v666, %v778
      %v780 = vpop.f32.mrb[0].mxu0
      %v781 = vpop.f32.mrb[0].mxu0
      %v782 = vadd.f32 %v669, %v781
      %v783 = vpop.f32.mrb[0].mxu0
      %784 = vmatprep.mubr.bf16.mxu0 0
      %785 = vmatmul.mubr.bf16.gmra.mrb[0].mxu0 %v487
      %v786 = vpop.f32.mrb[0].mxu0
      %v787 = vadd.f32 %v674, %v786
      %v788 = vpop.f32.mrb[0].mxu0
      %v789 = vpop.f32.mrb[0].mxu0
      %v790 = vadd.f32 %v677, %v789
      %v791 = vpop.f32.mrb[0].mxu0
      %792 = vmatprep.mubr.bf16.mxu0 0
      %793 = vmatmul.mubr.bf16.gmra.mrb[0].mxu0 %v489
      %v794 = vpop.f32.mrb[0].mxu0
      %v795 = vadd.f32 %v682, %v794
      %v796 = vpop.f32.mrb[0].mxu0
      %v797 = vpop.f32.mrb[0].mxu0
      %v798 = vadd.f32 %v685, %v797
      %v799 = vpop.f32.mrb[0].mxu0
      %800 = vmatprep.mubr.bf16.mxu0 0
      %801 = vmatmul.mubr.bf16.gmra.mrb[0].mxu0 %v491
      %v802 = vpop.f32.mrb[0].mxu0
      %v803 = vadd.f32 %v690, %v802
      %v804 = vpop.f32.mrb[0].mxu0
      %v805 = vpop.f32.mrb[0].mxu0
      %v806 = vadd.f32 %v693, %v805
      %v807 = vpop.f32.mrb[0].mxu0
      %808 = vdwg.mxu0
      %vm817 = vcmask 1046528
      %v818 = vrot.slane %v485, 1
      %v819 = vrot.slane %v486, 1
      %v820 = vsel %vm817, %v818, %v819
      %v821 = vrot.slane %v487, 1
      %v822 = vrot.slane %v488, 1
      %v823 = vsel %vm817, %v821, %v822
      %v824 = vrot.slane %v489, 1
      %v825 = vrot.slane %v490, 1
      %v826 = vsel %vm817, %v824, %v825
      %v827 = vrot.slane %v491, 1
      %v828 = vrot.slane %v492, 1
      %v829 = vsel %vm817, %v827, %v828
      %s834 = scalar_lea.vmem %s1, 128
      %v835 = vld [vmem:[%s834] sm:$0xf]
      %v836 = vld [vmem:[%s834 + $0x4] sm:$0xf]
      %v837 = vld [vmem:[%s834 + $0x8] sm:$0xf]
      %v838 = vld [vmem:[%s834 + $0xc] sm:$0xf]
      %v839 = vld [vmem:[%s834 + $0x10] sm:$0xf]
      %v840 = vld [vmem:[%s834 + $0x14] sm:$0xf]
      %v841 = vld [vmem:[%s834 + $0x18] sm:$0xf]
      %v842 = vld [vmem:[%s834 + $0x1c] sm:$0xf]
      %v843 = vld [vmem:[%s834 + $0x20] sm:$0xf]
      %v844 = vld [vmem:[%s834 + $0x24] sm:$0xf]
      %v845 = vld [vmem:[%s834 + $0x28] sm:$0xf]
      %v846 = vld [vmem:[%s834 + $0x2c] sm:$0xf]
      %v847 = vld [vmem:[%s834 + $0x30] sm:$0xf]
      %v848 = vld [vmem:[%s834 + $0x34] sm:$0xf]
      %v849 = vld [vmem:[%s834 + $0x38] sm:$0xf]
      %v850 = vld [vmem:[%s834 + $0x3c] sm:$0xf]
      %v867 = vunpack.c.l.b16 %v835
      %v868 = vunpack.c.l.b16 %v836
      %v869 = vunpack.c.l.b16 %v837
      %v870 = vunpack.c.l.b16 %v838
      %v871 = vunpack.c.l.b16 %v839
      %v872 = vunpack.c.l.b16 %v840
      %v873 = vunpack.c.l.b16 %v841
      %v874 = vunpack.c.l.b16 %v842
      %v875 = vunpack.c.l.b16 %v843
      %v876 = vunpack.c.l.b16 %v844
      %v877 = vunpack.c.l.b16 %v845
      %v878 = vunpack.c.l.b16 %v846
      %v879 = vunpack.c.l.b16 %v847
      %v880 = vunpack.c.l.b16 %v848
      %v881 = vunpack.c.l.b16 %v849
      %v882 = vunpack.c.l.b16 %v850
      %v883 = vpack.c.b16 %v868, %v867
      %v884 = vpack.c.b16 %v870, %v869
      %v885 = vpack.c.b16 %v872, %v871
      %v886 = vpack.c.b16 %v874, %v873
      %v887 = vpack.c.b16 %v876, %v875
      %v888 = vpack.c.b16 %v878, %v877
      %v889 = vpack.c.b16 %v880, %v879
      %v890 = vpack.c.b16 %v882, %v881
      %899 = vmatprep.subr.bf16.mxu0 0
      %900 = vmatpush1.bf16.msra.mxu0 %v883
      %901 = vmatprep.subr.bf16.mxu0 0
      %902 = vmatpush1.bf16.msra.mxu0 %v884
      %903 = vmatprep.subr.bf16.mxu0 0
      %904 = vmatpush1.bf16.msra.mxu0 %v885
      %905 = vmatprep.subr.bf16.mxu0 0
      %906 = vmatpush1.bf16.msra.mxu0 %v886
      %907 = vmatprep.subr.bf16.mxu0 0
      %908 = vmatpush1.bf16.msra.mxu0 %v887
      %909 = vmatprep.subr.bf16.mxu0 0
      %910 = vmatpush1.bf16.msra.mxu0 %v888
      %911 = vmatprep.subr.bf16.mxu0 0
      %912 = vmatpush1.bf16.msra.mxu0 %v889
      %913 = vmatprep.subr.bf16.mxu0 0
      %914 = vmatpush1.bf16.msra.mxu0 %v890
      %915 = vmatprep.subr.bf16.mxu0 0
      %916 = vmatpush1.bf16.msra.mxu0 0
      %917 = vmatprep.subr.bf16.mxu0 0
      %918 = vmatpush1.bf16.msra.mxu0 0
      %919 = vmatprep.subr.bf16.mxu0 0
      %920 = vmatpush1.bf16.msra.mxu0 0
      %921 = vmatprep.subr.bf16.mxu0 0
      %922 = vmatpush1.bf16.msra.mxu0 0
      %923 = vmatprep.subr.bf16.mxu0 0
      %924 = vmatpush1.bf16.msra.mxu0 0
      %925 = vmatprep.subr.bf16.mxu0 0
      %926 = vmatpush1.bf16.msra.mxu0 0
      %927 = vmatprep.subr.bf16.mxu0 0
      %928 = vmatpush1.bf16.msra.mxu0 0
      %929 = vmatprep.subr.bf16.mxu0 0
      %930 = vmatpush1.bf16.msra.mxu0 0
      %931 = vmatprep.mubr.bf16.mxu0 0
      %932 = vmatmul.mubr.bf16.gmra.mrb[0].mxu0 %v820
      %v933 = vpop.f32.mrb[0].mxu0
      %v934 = vadd.f32 0.0, %v933
      %v935 = vpop.f32.mrb[0].mxu0
      %v936 = vpop.f32.mrb[0].mxu0
      %v937 = vadd.f32 0.0, %v936
      %v938 = vpop.f32.mrb[0].mxu0
      %939 = vmatprep.mubr.bf16.mxu0 0
      %940 = vmatmul.mubr.bf16.gmra.mrb[0].mxu0 %v823
      %v941 = vpop.f32.mrb[0].mxu0
      %v942 = vadd.f32 0.0, %v941
      %v943 = vpop.f32.mrb[0].mxu0
      %v944 = vpop.f32.mrb[0].mxu0
      %v945 = vadd.f32 0.0, %v944
      %v946 = vpop.f32.mrb[0].mxu0
      %947 = vmatprep.mubr.bf16.mxu0 0
      %948 = vmatmul.mubr.bf16.gmra.mrb[0].mxu0 %v826
      %v949 = vpop.f32.mrb[0].mxu0
      %v950 = vadd.f32 0.0, %v949
      %v951 = vpop.f32.mrb[0].mxu0
      %v952 = vpop.f32.mrb[0].mxu0
      %v953 = vadd.f32 0.0, %v952
      %v954 = vpop.f32.mrb[0].mxu0
      %955 = vmatprep.mubr.bf16.mxu0 0
      %956 = vmatmul.mubr.bf16.gmra.mrb[0].mxu0 %v829
      %v957 = vpop.f32.mrb[0].mxu0
      %v958 = vadd.f32 0.0, %v957
      %v959 = vpop.f32.mrb[0].mxu0
      %v960 = vpop.f32.mrb[0].mxu0
      %v961 = vadd.f32 0.0, %v960
      %v962 = vpop.f32.mrb[0].mxu0
      %963 = vdwg.mxu0
      %v964 = vadd.f32 %v779, %v934
      %v965 = vadd.f32 %v782, %v937
      %v966 = vadd.f32 %v787, %v942
      %v967 = vadd.f32 %v790, %v945
      %v968 = vadd.f32 %v795, %v950
      %v969 = vadd.f32 %v798, %v953
      %v970 = vadd.f32 %v803, %v958
      %v971 = vadd.f32 %v806, %v961
      %s972 = scalar_lea.vmem %s1, 192
      %v973 = vld [vmem:[%s972] sm:$0xf]
      %v974 = vld [vmem:[%s972 + $0x4] sm:$0xf]
      %v975 = vld [vmem:[%s972 + $0x8] sm:$0xf]
      %v976 = vld [vmem:[%s972 + $0xc] sm:$0xf]
      %v977 = vld [vmem:[%s972 + $0x10] sm:$0xf]
      %v978 = vld [vmem:[%s972 + $0x14] sm:$0xf]
      %v979 = vld [vmem:[%s972 + $0x18] sm:$0xf]
      %v980 = vld [vmem:[%s972 + $0x1c] sm:$0xf]
      %v981 = vld [vmem:[%s972 + $0x20] sm:$0xf]
      %v982 = vld [vmem:[%s972 + $0x24] sm:$0xf]
      %v983 = vld [vmem:[%s972 + $0x28] sm:$0xf]
      %v984 = vld [vmem:[%s972 + $0x2c] sm:$0xf]
      %v985 = vld [vmem:[%s972 + $0x30] sm:$0xf]
      %v986 = vld [vmem:[%s972 + $0x34] sm:$0xf]
      %v987 = vld [vmem:[%s972 + $0x38] sm:$0xf]
      %v988 = vld [vmem:[%s972 + $0x3c] sm:$0xf]
      %v1005 = vunpack.c.l.b16 %v973
      %v1006 = vunpack.c.l.b16 %v974
      %v1007 = vunpack.c.l.b16 %v975
      %v1008 = vunpack.c.l.b16 %v976
      %v1009 = vunpack.c.l.b16 %v977
      %v1010 = vunpack.c.l.b16 %v978
      %v1011 = vunpack.c.l.b16 %v979
      %v1012 = vunpack.c.l.b16 %v980
      %v1013 = vunpack.c.l.b16 %v981
      %v1014 = vunpack.c.l.b16 %v982
      %v1015 = vunpack.c.l.b16 %v983
      %v1016 = vunpack.c.l.b16 %v984
      %v1017 = vunpack.c.l.b16 %v985
      %v1018 = vunpack.c.l.b16 %v986
      %v1019 = vunpack.c.l.b16 %v987
      %v1020 = vunpack.c.l.b16 %v988
      %v1021 = vpack.c.b16 %v1006, %v1005
      %v1022 = vpack.c.b16 %v1008, %v1007
      %v1023 = vpack.c.b16 %v1010, %v1009
      %v1024 = vpack.c.b16 %v1012, %v1011
      %v1025 = vpack.c.b16 %v1014, %v1013
      %v1026 = vpack.c.b16 %v1016, %v1015
      %v1027 = vpack.c.b16 %v1018, %v1017
      %v1028 = vpack.c.b16 %v1020, %v1019
      %1037 = vmatprep.subr.bf16.mxu0 0
      %1038 = vmatpush1.bf16.msra.mxu0 %v1021
      %1039 = vmatprep.subr.bf16.mxu0 0
      %1040 = vmatpush1.bf16.msra.mxu0 %v1022
      %1041 = vmatprep.subr.bf16.mxu0 0
      %1042 = vmatpush1.bf16.msra.mxu0 %v1023
      %1043 = vmatprep.subr.bf16.mxu0 0
      %1044 = vmatpush1.bf16.msra.mxu0 %v1024
      %1045 = vmatprep.subr.bf16.mxu0 0
      %1046 = vmatpush1.bf16.msra.mxu0 %v1025
      %1047 = vmatprep.subr.bf16.mxu0 0
      %1048 = vmatpush1.bf16.msra.mxu0 %v1026
      %1049 = vmatprep.subr.bf16.mxu0 0
      %1050 = vmatpush1.bf16.msra.mxu0 %v1027
      %1051 = vmatprep.subr.bf16.mxu0 0
      %1052 = vmatpush1.bf16.msra.mxu0 %v1028
      %1053 = vmatprep.subr.bf16.mxu0 0
      %1054 = vmatpush1.bf16.msra.mxu0 0
      %1055 = vmatprep.subr.bf16.mxu0 0
      %1056 = vmatpush1.bf16.msra.mxu0 0
      %1057 = vmatprep.subr.bf16.mxu0 0
      %1058 = vmatpush1.bf16.msra.mxu0 0
      %1059 = vmatprep.subr.bf16.mxu0 0
      %1060 = vmatpush1.bf16.msra.mxu0 0
      %1061 = vmatprep.subr.bf16.mxu0 0
      %1062 = vmatpush1.bf16.msra.mxu0 0
      %1063 = vmatprep.subr.bf16.mxu0 0
      %1064 = vmatpush1.bf16.msra.mxu0 0
      %1065 = vmatprep.subr.bf16.mxu0 0
      %1066 = vmatpush1.bf16.msra.mxu0 0
      %1067 = vmatprep.subr.bf16.mxu0 0
      %1068 = vmatpush1.bf16.msra.mxu0 0
      %1069 = vmatprep.mubr.bf16.mxu0 0
      %1070 = vmatmul.mubr.bf16.gmra.mrb[0].mxu0 %v487
      %v1071 = vpop.f32.mrb[0].mxu0
      %v1072 = vadd.f32 0.0, %v1071
      %v1073 = vpop.f32.mrb[0].mxu0
      %v1074 = vpop.f32.mrb[0].mxu0
      %v1075 = vadd.f32 0.0, %v1074
      %v1076 = vpop.f32.mrb[0].mxu0
      %1077 = vmatprep.mubr.bf16.mxu0 0
      %1078 = vmatmul.mubr.bf16.gmra.mrb[0].mxu0 %v489
      %v1079 = vpop.f32.mrb[0].mxu0
      %v1080 = vadd.f32 0.0, %v1079
      %v1081 = vpop.f32.mrb[0].mxu0
      %v1082 = vpop.f32.mrb[0].mxu0
      %v1083 = vadd.f32 0.0, %v1082
      %v1084 = vpop.f32.mrb[0].mxu0
      %1085 = vmatprep.mubr.bf16.mxu0 0
      %1086 = vmatmul.mubr.bf16.gmra.mrb[0].mxu0 %v491
      %v1087 = vpop.f32.mrb[0].mxu0
      %v1088 = vadd.f32 0.0, %v1087
      %v1089 = vpop.f32.mrb[0].mxu0
      %v1090 = vpop.f32.mrb[0].mxu0
      %v1091 = vadd.f32 0.0, %v1090
      %v1092 = vpop.f32.mrb[0].mxu0
      %1093 = vmatprep.mubr.bf16.mxu0 0
      %1094 = vmatmul.mubr.bf16.gmra.mrb[0].mxu0 %v493
      %v1095 = vpop.f32.mrb[0].mxu0
      %v1096 = vadd.f32 0.0, %v1095
      %v1097 = vpop.f32.mrb[0].mxu0
      %v1098 = vpop.f32.mrb[0].mxu0
      %v1099 = vadd.f32 0.0, %v1098
      %v1100 = vpop.f32.mrb[0].mxu0
      %1101 = vdwg.mxu0
      %v1102 = vadd.f32 %v964, %v1072
      %v1103 = vadd.f32 %v965, %v1075
      %v1104 = vadd.f32 %v966, %v1080
      %v1105 = vadd.f32 %v967, %v1083
      %v1106 = vadd.f32 %v968, %v1088
      %v1107 = vadd.f32 %v969, %v1091
      %v1108 = vadd.f32 %v970, %v1096
      %v1109 = vadd.f32 %v971, %v1099
      %v1111 = vshrl.u32 %v493, 16
      %v1113 = vshll.u32 %v493, 16
      %v1115 = vrot.slane %v1113, 1
      %v1116 = vor.u32 %v1111, %v1115
      %v1118 = vshll.u32 %v494, 16
      %v1120 = vrot.slane %v1118, 1
      %v1121 = vsel %vm513, %v1116, %v1120
      %s1123 = scalar_lea.vmem %s1, 256
      %v1124 = vld [vmem:[%s1123] sm:$0xf]
      %v1125 = vld [vmem:[%s1123 + $0x4] sm:$0xf]
      %v1126 = vld [vmem:[%s1123 + $0x8] sm:$0xf]
      %v1127 = vld [vmem:[%s1123 + $0xc] sm:$0xf]
      %v1128 = vld [vmem:[%s1123 + $0x10] sm:$0xf]
      %v1129 = vld [vmem:[%s1123 + $0x14] sm:$0xf]
      %v1130 = vld [vmem:[%s1123 + $0x18] sm:$0xf]
      %v1131 = vld [vmem:[%s1123 + $0x1c] sm:$0xf]
      %v1132 = vld [vmem:[%s1123 + $0x20] sm:$0xf]
      %v1133 = vld [vmem:[%s1123 + $0x24] sm:$0xf]
      %v1134 = vld [vmem:[%s1123 + $0x28] sm:$0xf]
      %v1135 = vld [vmem:[%s1123 + $0x2c] sm:$0xf]
      %v1136 = vld [vmem:[%s1123 + $0x30] sm:$0xf]
      %v1137 = vld [vmem:[%s1123 + $0x34] sm:$0xf]
      %v1138 = vld [vmem:[%s1123 + $0x38] sm:$0xf]
      %v1139 = vld [vmem:[%s1123 + $0x3c] sm:$0xf]
      %v1156 = vunpack.c.l.b16 %v1124
      %v1157 = vunpack.c.l.b16 %v1125
      %v1158 = vunpack.c.l.b16 %v1126
      %v1159 = vunpack.c.l.b16 %v1127
      %v1160 = vunpack.c.l.b16 %v1128
      %v1161 = vunpack.c.l.b16 %v1129
      %v1162 = vunpack.c.l.b16 %v1130
      %v1163 = vunpack.c.l.b16 %v1131
      %v1164 = vunpack.c.l.b16 %v1132
      %v1165 = vunpack.c.l.b16 %v1133
      %v1166 = vunpack.c.l.b16 %v1134
      %v1167 = vunpack.c.l.b16 %v1135
      %v1168 = vunpack.c.l.b16 %v1136
      %v1169 = vunpack.c.l.b16 %v1137
      %v1170 = vunpack.c.l.b16 %v1138
      %v1171 = vunpack.c.l.b16 %v1139
      %v1172 = vpack.c.b16 %v1157, %v1156
      %v1173 = vpack.c.b16 %v1159, %v1158
      %v1174 = vpack.c.b16 %v1161, %v1160
      %v1175 = vpack.c.b16 %v1163, %v1162
      %v1176 = vpack.c.b16 %v1165, %v1164
      %v1177 = vpack.c.b16 %v1167, %v1166
      %v1178 = vpack.c.b16 %v1169, %v1168
      %v1179 = vpack.c.b16 %v1171, %v1170
      %1188 = vmatprep.subr.bf16.mxu0 0
      %1189 = vmatpush1.bf16.msra.mxu0 %v1172
      %1190 = vmatprep.subr.bf16.mxu0 0
      %1191 = vmatpush1.bf16.msra.mxu0 %v1173
      %1192 = vmatprep.subr.bf16.mxu0 0
      %1193 = vmatpush1.bf16.msra.mxu0 %v1174
      %1194 = vmatprep.subr.bf16.mxu0 0
      %1195 = vmatpush1.bf16.msra.mxu0 %v1175
      %1196 = vmatprep.subr.bf16.mxu0 0
      %1197 = vmatpush1.bf16.msra.mxu0 %v1176
      %1198 = vmatprep.subr.bf16.mxu0 0
      %1199 = vmatpush1.bf16.msra.mxu0 %v1177
      %1200 = vmatprep.subr.bf16.mxu0 0
      %1201 = vmatpush1.bf16.msra.mxu0 %v1178
      %1202 = vmatprep.subr.bf16.mxu0 0
      %1203 = vmatpush1.bf16.msra.mxu0 %v1179
      %1204 = vmatprep.subr.bf16.mxu0 0
      %1205 = vmatpush1.bf16.msra.mxu0 0
      %1206 = vmatprep.subr.bf16.mxu0 0
      %1207 = vmatpush1.bf16.msra.mxu0 0
      %1208 = vmatprep.subr.bf16.mxu0 0
      %1209 = vmatpush1.bf16.msra.mxu0 0
      %1210 = vmatprep.subr.bf16.mxu0 0
      %1211 = vmatpush1.bf16.msra.mxu0 0
      %1212 = vmatprep.subr.bf16.mxu0 0
      %1213 = vmatpush1.bf16.msra.mxu0 0
      %1214 = vmatprep.subr.bf16.mxu0 0
      %1215 = vmatpush1.bf16.msra.mxu0 0
      %1216 = vmatprep.subr.bf16.mxu0 0
      %1217 = vmatpush1.bf16.msra.mxu0 0
      %1218 = vmatprep.subr.bf16.mxu0 0
      %1219 = vmatpush1.bf16.msra.mxu0 0
      %1220 = vmatprep.mubr.bf16.mxu0 0
      %1221 = vmatmul.mubr.bf16.gmra.mrb[0].mxu0 %v537
      %v1222 = vpop.f32.mrb[0].mxu0
      %v1223 = vadd.f32 0.0, %v1222
      %v1224 = vpop.f32.mrb[0].mxu0
      %v1225 = vpop.f32.mrb[0].mxu0
      %v1226 = vadd.f32 0.0, %v1225
      %v1227 = vpop.f32.mrb[0].mxu0
      %1228 = vmatprep.mubr.bf16.mxu0 0
      %1229 = vmatmul.mubr.bf16.gmra.mrb[0].mxu0 %v549
      %v1230 = vpop.f32.mrb[0].mxu0
      %v1231 = vadd.f32 0.0, %v1230
      %v1232 = vpop.f32.mrb[0].mxu0
      %v1233 = vpop.f32.mrb[0].mxu0
      %v1234 = vadd.f32 0.0, %v1233
      %v1235 = vpop.f32.mrb[0].mxu0
      %1236 = vmatprep.mubr.bf16.mxu0 0
      %1237 = vmatmul.mubr.bf16.gmra.mrb[0].mxu0 %v561
      %v1238 = vpop.f32.mrb[0].mxu0
      %v1239 = vadd.f32 0.0, %v1238
      %v1240 = vpop.f32.mrb[0].mxu0
      %v1241 = vpop.f32.mrb[0].mxu0
      %v1242 = vadd.f32 0.0, %v1241
      %v1243 = vpop.f32.mrb[0].mxu0
      %1244 = vmatprep.mubr.bf16.mxu0 0
      %1245 = vmatmul.mubr.bf16.gmra.mrb[0].mxu0 %v1121
      %v1246 = vpop.f32.mrb[0].mxu0
      %v1247 = vadd.f32 0.0, %v1246
      %v1248 = vpop.f32.mrb[0].mxu0
      %v1249 = vpop.f32.mrb[0].mxu0
      %v1250 = vadd.f32 0.0, %v1249
      %v1251 = vpop.f32.mrb[0].mxu0
      %1252 = vdwg.mxu0
      %v1253 = vadd.f32 %v1102, %v1223
      %v1254 = vadd.f32 %v1103, %v1226
      %v1255 = vadd.f32 %v1104, %v1231
      %v1256 = vadd.f32 %v1105, %v1234
      %v1257 = vadd.f32 %v1106, %v1239
      %v1258 = vadd.f32 %v1107, %v1242
      %v1259 = vadd.f32 %v1108, %v1247
      %v1260 = vadd.f32 %v1109, %v1250
      %v1263 = vrot.slane %v493, 1
      %v1264 = vrot.slane %v494, 1
      %v1265 = vsel %vm817, %v1263, %v1264
      %s1267 = scalar_lea.vmem %s1, 320
      %v1268 = vld [vmem:[%s1267] sm:$0xf]
      %v1269 = vld [vmem:[%s1267 + $0x4] sm:$0xf]
      %v1270 = vld [vmem:[%s1267 + $0x8] sm:$0xf]
      %v1271 = vld [vmem:[%s1267 + $0xc] sm:$0xf]
      %v1272 = vld [vmem:[%s1267 + $0x10] sm:$0xf]
      %v1273 = vld [vmem:[%s1267 + $0x14] sm:$0xf]
      %v1274 = vld [vmem:[%s1267 + $0x18] sm:$0xf]
      %v1275 = vld [vmem:[%s1267 + $0x1c] sm:$0xf]
      %v1276 = vld [vmem:[%s1267 + $0x20] sm:$0xf]
      %v1277 = vld [vmem:[%s1267 + $0x24] sm:$0xf]
      %v1278 = vld [vmem:[%s1267 + $0x28] sm:$0xf]
      %v1279 = vld [vmem:[%s1267 + $0x2c] sm:$0xf]
      %v1280 = vld [vmem:[%s1267 + $0x30] sm:$0xf]
      %v1281 = vld [vmem:[%s1267 + $0x34] sm:$0xf]
      %v1282 = vld [vmem:[%s1267 + $0x38] sm:$0xf]
      %v1283 = vld [vmem:[%s1267 + $0x3c] sm:$0xf]
      %v1300 = vunpack.c.l.b16 %v1268
      %v1301 = vunpack.c.l.b16 %v1269
      %v1302 = vunpack.c.l.b16 %v1270
      %v1303 = vunpack.c.l.b16 %v1271
      %v1304 = vunpack.c.l.b16 %v1272
      %v1305 = vunpack.c.l.b16 %v1273
      %v1306 = vunpack.c.l.b16 %v1274
      %v1307 = vunpack.c.l.b16 %v1275
      %v1308 = vunpack.c.l.b16 %v1276
      %v1309 = vunpack.c.l.b16 %v1277
      %v1310 = vunpack.c.l.b16 %v1278
      %v1311 = vunpack.c.l.b16 %v1279
      %v1312 = vunpack.c.l.b16 %v1280
      %v1313 = vunpack.c.l.b16 %v1281
      %v1314 = vunpack.c.l.b16 %v1282
      %v1315 = vunpack.c.l.b16 %v1283
      %v1316 = vpack.c.b16 %v1301, %v1300
      %v1317 = vpack.c.b16 %v1303, %v1302
      %v1318 = vpack.c.b16 %v1305, %v1304
      %v1319 = vpack.c.b16 %v1307, %v1306
      %v1320 = vpack.c.b16 %v1309, %v1308
      %v1321 = vpack.c.b16 %v1311, %v1310
      %v1322 = vpack.c.b16 %v1313, %v1312
      %v1323 = vpack.c.b16 %v1315, %v1314
      %1332 = vmatprep.subr.bf16.mxu0 0
      %1333 = vmatpush1.bf16.msra.mxu0 %v1316
      %1334 = vmatprep.subr.bf16.mxu0 0
      %1335 = vmatpush1.bf16.msra.mxu0 %v1317
      %1336 = vmatprep.subr.bf16.mxu0 0
      %1337 = vmatpush1.bf16.msra.mxu0 %v1318
      %1338 = vmatprep.subr.bf16.mxu0 0
      %1339 = vmatpush1.bf16.msra.mxu0 %v1319
      %1340 = vmatprep.subr.bf16.mxu0 0
      %1341 = vmatpush1.bf16.msra.mxu0 %v1320
      %1342 = vmatprep.subr.bf16.mxu0 0
      %1343 = vmatpush1.bf16.msra.mxu0 %v1321
      %1344 = vmatprep.subr.bf16.mxu0 0
      %1345 = vmatpush1.bf16.msra.mxu0 %v1322
      %1346 = vmatprep.subr.bf16.mxu0 0
      %1347 = vmatpush1.bf16.msra.mxu0 %v1323
      %1348 = vmatprep.subr.bf16.mxu0 0
      %1349 = vmatpush1.bf16.msra.mxu0 0
      %1350 = vmatprep.subr.bf16.mxu0 0
      %1351 = vmatpush1.bf16.msra.mxu0 0
      %1352 = vmatprep.subr.bf16.mxu0 0
      %1353 = vmatpush1.bf16.msra.mxu0 0
      %1354 = vmatprep.subr.bf16.mxu0 0
      %1355 = vmatpush1.bf16.msra.mxu0 0
      %1356 = vmatprep.subr.bf16.mxu0 0
      %1357 = vmatpush1.bf16.msra.mxu0 0
      %1358 = vmatprep.subr.bf16.mxu0 0
      %1359 = vmatpush1.bf16.msra.mxu0 0
      %1360 = vmatprep.subr.bf16.mxu0 0
      %1361 = vmatpush1.bf16.msra.mxu0 0
      %1362 = vmatprep.subr.bf16.mxu0 0
      %1363 = vmatpush1.bf16.msra.mxu0 0
      %1364 = vmatprep.mubr.bf16.mxu0 0
      %1365 = vmatmul.mubr.bf16.gmra.mrb[0].mxu0 %v823
      %v1366 = vpop.f32.mrb[0].mxu0
      %v1367 = vadd.f32 0.0, %v1366
      %v1368 = vpop.f32.mrb[0].mxu0
      %v1369 = vpop.f32.mrb[0].mxu0
      %v1370 = vadd.f32 0.0, %v1369
      %v1371 = vpop.f32.mrb[0].mxu0
      %1372 = vmatprep.mubr.bf16.mxu0 0
      %1373 = vmatmul.mubr.bf16.gmra.mrb[0].mxu0 %v826
      %v1374 = vpop.f32.mrb[0].mxu0
      %v1375 = vadd.f32 0.0, %v1374
      %v1376 = vpop.f32.mrb[0].mxu0
      %v1377 = vpop.f32.mrb[0].mxu0
      %v1378 = vadd.f32 0.0, %v1377
      %v1379 = vpop.f32.mrb[0].mxu0
      %1380 = vmatprep.mubr.bf16.mxu0 0
      %1381 = vmatmul.mubr.bf16.gmra.mrb[0].mxu0 %v829
      %v1382 = vpop.f32.mrb[0].mxu0
      %v1383 = vadd.f32 0.0, %v1382
      %v1384 = vpop.f32.mrb[0].mxu0
      %v1385 = vpop.f32.mrb[0].mxu0
      %v1386 = vadd.f32 0.0, %v1385
      %v1387 = vpop.f32.mrb[0].mxu0
      %1388 = vmatprep.mubr.bf16.mxu0 0
      %1389 = vmatmul.mubr.bf16.gmra.mrb[0].mxu0 %v1265
      %v1390 = vpop.f32.mrb[0].mxu0
      %v1391 = vadd.f32 0.0, %v1390
      %v1392 = vpop.f32.mrb[0].mxu0
      %v1393 = vpop.f32.mrb[0].mxu0
      %v1394 = vadd.f32 0.0, %v1393
      %v1395 = vpop.f32.mrb[0].mxu0
      %1396 = vdwg.mxu0
      %v1397 = vadd.f32 %v1253, %v1367
      %v1398 = vadd.f32 %v1254, %v1370
      %v1399 = vadd.f32 %v1255, %v1375
      %v1400 = vadd.f32 %v1256, %v1378
      %v1401 = vadd.f32 %v1257, %v1383
      %v1402 = vadd.f32 %v1258, %v1386
      %v1403 = vadd.f32 %v1259, %v1391
      %v1404 = vadd.f32 %v1260, %v1394
      %s1405 = scalar_lea.vmem %s1, 384
      %v1406 = vld [vmem:[%s1405] sm:$0xf]
      %v1407 = vld [vmem:[%s1405 + $0x4] sm:$0xf]
      %v1408 = vld [vmem:[%s1405 + $0x8] sm:$0xf]
      %v1409 = vld [vmem:[%s1405 + $0xc] sm:$0xf]
      %v1410 = vld [vmem:[%s1405 + $0x10] sm:$0xf]
      %v1411 = vld [vmem:[%s1405 + $0x14] sm:$0xf]
      %v1412 = vld [vmem:[%s1405 + $0x18] sm:$0xf]
      %v1413 = vld [vmem:[%s1405 + $0x1c] sm:$0xf]
      %v1414 = vld [vmem:[%s1405 + $0x20] sm:$0xf]
      %v1415 = vld [vmem:[%s1405 + $0x24] sm:$0xf]
      %v1416 = vld [vmem:[%s1405 + $0x28] sm:$0xf]
      %v1417 = vld [vmem:[%s1405 + $0x2c] sm:$0xf]
      %v1418 = vld [vmem:[%s1405 + $0x30] sm:$0xf]
      %v1419 = vld [vmem:[%s1405 + $0x34] sm:$0xf]
      %v1420 = vld [vmem:[%s1405 + $0x38] sm:$0xf]
      %v1421 = vld [vmem:[%s1405 + $0x3c] sm:$0xf]
      %v1438 = vunpack.c.l.b16 %v1406
      %v1439 = vunpack.c.l.b16 %v1407
      %v1440 = vunpack.c.l.b16 %v1408
      %v1441 = vunpack.c.l.b16 %v1409
      %v1442 = vunpack.c.l.b16 %v1410
      %v1443 = vunpack.c.l.b16 %v1411
      %v1444 = vunpack.c.l.b16 %v1412
      %v1445 = vunpack.c.l.b16 %v1413
      %v1446 = vunpack.c.l.b16 %v1414
      %v1447 = vunpack.c.l.b16 %v1415
      %v1448 = vunpack.c.l.b16 %v1416
      %v1449 = vunpack.c.l.b16 %v1417
      %v1450 = vunpack.c.l.b16 %v1418
      %v1451 = vunpack.c.l.b16 %v1419
      %v1452 = vunpack.c.l.b16 %v1420
      %v1453 = vunpack.c.l.b16 %v1421
      %v1454 = vpack.c.b16 %v1439, %v1438
      %v1455 = vpack.c.b16 %v1441, %v1440
      %v1456 = vpack.c.b16 %v1443, %v1442
      %v1457 = vpack.c.b16 %v1445, %v1444
      %v1458 = vpack.c.b16 %v1447, %v1446
      %v1459 = vpack.c.b16 %v1449, %v1448
      %v1460 = vpack.c.b16 %v1451, %v1450
      %v1461 = vpack.c.b16 %v1453, %v1452
      %1470 = vmatprep.subr.bf16.mxu0 0
      %1471 = vmatpush1.bf16.msra.mxu0 %v1454
      %1472 = vmatprep.subr.bf16.mxu0 0
      %1473 = vmatpush1.bf16.msra.mxu0 %v1455
      %1474 = vmatprep.subr.bf16.mxu0 0
      %1475 = vmatpush1.bf16.msra.mxu0 %v1456
      %1476 = vmatprep.subr.bf16.mxu0 0
      %1477 = vmatpush1.bf16.msra.mxu0 %v1457
      %1478 = vmatprep.subr.bf16.mxu0 0
      %1479 = vmatpush1.bf16.msra.mxu0 %v1458
      %1480 = vmatprep.subr.bf16.mxu0 0
      %1481 = vmatpush1.bf16.msra.mxu0 %v1459
      %1482 = vmatprep.subr.bf16.mxu0 0
      %1483 = vmatpush1.bf16.msra.mxu0 %v1460
      %1484 = vmatprep.subr.bf16.mxu0 0
      %1485 = vmatpush1.bf16.msra.mxu0 %v1461
      %1486 = vmatprep.subr.bf16.mxu0 0
      %1487 = vmatpush1.bf16.msra.mxu0 0
      %1488 = vmatprep.subr.bf16.mxu0 0
      %1489 = vmatpush1.bf16.msra.mxu0 0
      %1490 = vmatprep.subr.bf16.mxu0 0
      %1491 = vmatpush1.bf16.msra.mxu0 0
      %1492 = vmatprep.subr.bf16.mxu0 0
      %1493 = vmatpush1.bf16.msra.mxu0 0
      %1494 = vmatprep.subr.bf16.mxu0 0
      %1495 = vmatpush1.bf16.msra.mxu0 0
      %1496 = vmatprep.subr.bf16.mxu0 0
      %1497 = vmatpush1.bf16.msra.mxu0 0
      %1498 = vmatprep.subr.bf16.mxu0 0
      %1499 = vmatpush1.bf16.msra.mxu0 0
      %1500 = vmatprep.subr.bf16.mxu0 0
      %1501 = vmatpush1.bf16.msra.mxu0 0
      %1502 = vmatprep.mubr.bf16.mxu0 0
      %1503 = vmatmul.mubr.bf16.gmra.mrb[0].mxu0 %v489
      %v1504 = vpop.f32.mrb[0].mxu0
      %v1505 = vadd.f32 0.0, %v1504
      %v1506 = vpop.f32.mrb[0].mxu0
      %v1507 = vpop.f32.mrb[0].mxu0
      %v1508 = vadd.f32 0.0, %v1507
      %v1509 = vpop.f32.mrb[0].mxu0
      %1510 = vmatprep.mubr.bf16.mxu0 0
      %1511 = vmatmul.mubr.bf16.gmra.mrb[0].mxu0 %v491
      %v1512 = vpop.f32.mrb[0].mxu0
      %v1513 = vadd.f32 0.0, %v1512
      %v1514 = vpop.f32.mrb[0].mxu0
      %v1515 = vpop.f32.mrb[0].mxu0
      %v1516 = vadd.f32 0.0, %v1515
      %v1517 = vpop.f32.mrb[0].mxu0
      %1518 = vmatprep.mubr.bf16.mxu0 0
      %1519 = vmatmul.mubr.bf16.gmra.mrb[0].mxu0 %v493
      %v1520 = vpop.f32.mrb[0].mxu0
      %v1521 = vadd.f32 0.0, %v1520
      %v1522 = vpop.f32.mrb[0].mxu0
      %v1523 = vpop.f32.mrb[0].mxu0
      %v1524 = vadd.f32 0.0, %v1523
      %v1525 = vpop.f32.mrb[0].mxu0
      %1526 = vmatprep.mubr.bf16.mxu0 0
      %1527 = vmatmul.mubr.bf16.gmra.mrb[0].mxu0 %v495
      %v1528 = vpop.f32.mrb[0].mxu0
      %v1529 = vadd.f32 0.0, %v1528
      %v1530 = vpop.f32.mrb[0].mxu0
      %v1531 = vpop.f32.mrb[0].mxu0
      %v1532 = vadd.f32 0.0, %v1531
      %v1533 = vpop.f32.mrb[0].mxu0
      %1534 = vdwg.mxu0
      %v1535 = vadd.f32 %v1397, %v1505
      %v1536 = vadd.f32 %v1398, %v1508
      %v1537 = vadd.f32 %v1399, %v1513
      %v1538 = vadd.f32 %v1400, %v1516
      %v1539 = vadd.f32 %v1401, %v1521
      %v1540 = vadd.f32 %v1402, %v1524
      %v1541 = vadd.f32 %v1403, %v1529
      %v1542 = vadd.f32 %v1404, %v1532
      %v1544 = vshrl.u32 %v495, 16
      %v1546 = vshll.u32 %v495, 16
      %v1548 = vrot.slane %v1546, 1
      %v1549 = vor.u32 %v1544, %v1548
      %v1551 = vshll.u32 %v496, 16
      %v1553 = vrot.slane %v1551, 1
      %v1554 = vsel %vm513, %v1549, %v1553
      %s1556 = scalar_lea.vmem %s1, 448
      %v1557 = vld [vmem:[%s1556] sm:$0xf]
      %v1558 = vld [vmem:[%s1556 + $0x4] sm:$0xf]
      %v1559 = vld [vmem:[%s1556 + $0x8] sm:$0xf]
      %v1560 = vld [vmem:[%s1556 + $0xc] sm:$0xf]
      %v1561 = vld [vmem:[%s1556 + $0x10] sm:$0xf]
      %v1562 = vld [vmem:[%s1556 + $0x14] sm:$0xf]
      %v1563 = vld [vmem:[%s1556 + $0x18] sm:$0xf]
      %v1564 = vld [vmem:[%s1556 + $0x1c] sm:$0xf]
      %v1565 = vld [vmem:[%s1556 + $0x20] sm:$0xf]
      %v1566 = vld [vmem:[%s1556 + $0x24] sm:$0xf]
      %v1567 = vld [vmem:[%s1556 + $0x28] sm:$0xf]
      %v1568 = vld [vmem:[%s1556 + $0x2c] sm:$0xf]
      %v1569 = vld [vmem:[%s1556 + $0x30] sm:$0xf]
      %v1570 = vld [vmem:[%s1556 + $0x34] sm:$0xf]
      %v1571 = vld [vmem:[%s1556 + $0x38] sm:$0xf]
      %v1572 = vld [vmem:[%s1556 + $0x3c] sm:$0xf]
      %v1589 = vunpack.c.l.b16 %v1557
      %v1590 = vunpack.c.l.b16 %v1558
      %v1591 = vunpack.c.l.b16 %v1559
      %v1592 = vunpack.c.l.b16 %v1560
      %v1593 = vunpack.c.l.b16 %v1561
      %v1594 = vunpack.c.l.b16 %v1562
      %v1595 = vunpack.c.l.b16 %v1563
      %v1596 = vunpack.c.l.b16 %v1564
      %v1597 = vunpack.c.l.b16 %v1565
      %v1598 = vunpack.c.l.b16 %v1566
      %v1599 = vunpack.c.l.b16 %v1567
      %v1600 = vunpack.c.l.b16 %v1568
      %v1601 = vunpack.c.l.b16 %v1569
      %v1602 = vunpack.c.l.b16 %v1570
      %v1603 = vunpack.c.l.b16 %v1571
      %v1604 = vunpack.c.l.b16 %v1572
      %v1605 = vpack.c.b16 %v1590, %v1589
      %v1606 = vpack.c.b16 %v1592, %v1591
      %v1607 = vpack.c.b16 %v1594, %v1593
      %v1608 = vpack.c.b16 %v1596, %v1595
      %v1609 = vpack.c.b16 %v1598, %v1597
      %v1610 = vpack.c.b16 %v1600, %v1599
      %v1611 = vpack.c.b16 %v1602, %v1601
      %v1612 = vpack.c.b16 %v1604, %v1603
      %1621 = vmatprep.subr.bf16.mxu0 0
      %1622 = vmatpush1.bf16.msra.mxu0 %v1605
      %1623 = vmatprep.subr.bf16.mxu0 0
      %1624 = vmatpush1.bf16.msra.mxu0 %v1606
      %1625 = vmatprep.subr.bf16.mxu0 0
      %1626 = vmatpush1.bf16.msra.mxu0 %v1607
      %1627 = vmatprep.subr.bf16.mxu0 0
      %1628 = vmatpush1.bf16.msra.mxu0 %v1608
      %1629 = vmatprep.subr.bf16.mxu0 0
      %1630 = vmatpush1.bf16.msra.mxu0 %v1609
      %1631 = vmatprep.subr.bf16.mxu0 0
      %1632 = vmatpush1.bf16.msra.mxu0 %v1610
      %1633 = vmatprep.subr.bf16.mxu0 0
      %1634 = vmatpush1.bf16.msra.mxu0 %v1611
      %1635 = vmatprep.subr.bf16.mxu0 0
      %1636 = vmatpush1.bf16.msra.mxu0 %v1612
      %1637 = vmatprep.subr.bf16.mxu0 0
      %1638 = vmatpush1.bf16.msra.mxu0 0
      %1639 = vmatprep.subr.bf16.mxu0 0
      %1640 = vmatpush1.bf16.msra.mxu0 0
      %1641 = vmatprep.subr.bf16.mxu0 0
      %1642 = vmatpush1.bf16.msra.mxu0 0
      %1643 = vmatprep.subr.bf16.mxu0 0
      %1644 = vmatpush1.bf16.msra.mxu0 0
      %1645 = vmatprep.subr.bf16.mxu0 0
      %1646 = vmatpush1.bf16.msra.mxu0 0
      %1647 = vmatprep.subr.bf16.mxu0 0
      %1648 = vmatpush1.bf16.msra.mxu0 0
      %1649 = vmatprep.subr.bf16.mxu0 0
      %1650 = vmatpush1.bf16.msra.mxu0 0
      %1651 = vmatprep.subr.bf16.mxu0 0
      %1652 = vmatpush1.bf16.msra.mxu0 0
      %1653 = vmatprep.mubr.bf16.mxu0 0
      %1654 = vmatmul.mubr.bf16.gmra.mrb[0].mxu0 %v549
      %v1655 = vpop.f32.mrb[0].mxu0
      %v1656 = vadd.f32 0.0, %v1655
      %v1657 = vpop.f32.mrb[0].mxu0
      %v1658 = vpop.f32.mrb[0].mxu0
      %v1659 = vadd.f32 0.0, %v1658
      %v1660 = vpop.f32.mrb[0].mxu0
      %1661 = vmatprep.mubr.bf16.mxu0 0
      %1662 = vmatmul.mubr.bf16.gmra.mrb[0].mxu0 %v561
      %v1663 = vpop.f32.mrb[0].mxu0
      %v1664 = vadd.f32 0.0, %v1663
      %v1665 = vpop.f32.mrb[0].mxu0
      %v1666 = vpop.f32.mrb[0].mxu0
      %v1667 = vadd.f32 0.0, %v1666
      %v1668 = vpop.f32.mrb[0].mxu0
      %1669 = vmatprep.mubr.bf16.mxu0 0
      %1670 = vmatmul.mubr.bf16.gmra.mrb[0].mxu0 %v1121
      %v1671 = vpop.f32.mrb[0].mxu0
      %v1672 = vadd.f32 0.0, %v1671
      %v1673 = vpop.f32.mrb[0].mxu0
      %v1674 = vpop.f32.mrb[0].mxu0
      %v1675 = vadd.f32 0.0, %v1674
      %v1676 = vpop.f32.mrb[0].mxu0
      %1677 = vmatprep.mubr.bf16.mxu0 0
      %1678 = vmatmul.mubr.bf16.gmra.mrb[0].mxu0 %v1554
      %v1679 = vpop.f32.mrb[0].mxu0
      %v1680 = vadd.f32 0.0, %v1679
      %v1681 = vpop.f32.mrb[0].mxu0
      %v1682 = vpop.f32.mrb[0].mxu0
      %v1683 = vadd.f32 0.0, %v1682
      %v1684 = vpop.f32.mrb[0].mxu0
      %1685 = vdwg.mxu0
      %v1686 = vadd.f32 %v1535, %v1656
      %v1687 = vadd.f32 %v1536, %v1659
      %v1688 = vadd.f32 %v1537, %v1664
      %v1689 = vadd.f32 %v1538, %v1667
      %v1690 = vadd.f32 %v1539, %v1672
      %v1691 = vadd.f32 %v1540, %v1675
      %v1692 = vadd.f32 %v1541, %v1680
      %v1693 = vadd.f32 %v1542, %v1683
      %v1696 = vrot.slane %v495, 1
      %v1697 = vrot.slane %v496, 1
      %v1698 = vsel %vm817, %v1696, %v1697
      %s1700 = scalar_lea.vmem %s1, 512
      %v1701 = vld [vmem:[%s1700] sm:$0xf]
      %v1702 = vld [vmem:[%s1700 + $0x4] sm:$0xf]
      %v1703 = vld [vmem:[%s1700 + $0x8] sm:$0xf]
      %v1704 = vld [vmem:[%s1700 + $0xc] sm:$0xf]
      %v1705 = vld [vmem:[%s1700 + $0x10] sm:$0xf]
      %v1706 = vld [vmem:[%s1700 + $0x14] sm:$0xf]
      %v1707 = vld [vmem:[%s1700 + $0x18] sm:$0xf]
      %v1708 = vld [vmem:[%s1700 + $0x1c] sm:$0xf]
      %v1709 = vld [vmem:[%s1700 + $0x20] sm:$0xf]
      %v1710 = vld [vmem:[%s1700 + $0x24] sm:$0xf]
      %v1711 = vld [vmem:[%s1700 + $0x28] sm:$0xf]
      %v1712 = vld [vmem:[%s1700 + $0x2c] sm:$0xf]
      %v1713 = vld [vmem:[%s1700 + $0x30] sm:$0xf]
      %v1714 = vld [vmem:[%s1700 + $0x34] sm:$0xf]
      %v1715 = vld [vmem:[%s1700 + $0x38] sm:$0xf]
      %v1716 = vld [vmem:[%s1700 + $0x3c] sm:$0xf]
      %v1733 = vunpack.c.l.b16 %v1701
      %v1734 = vunpack.c.l.b16 %v1702
      %v1735 = vunpack.c.l.b16 %v1703
      %v1736 = vunpack.c.l.b16 %v1704
      %v1737 = vunpack.c.l.b16 %v1705
      %v1738 = vunpack.c.l.b16 %v1706
      %v1739 = vunpack.c.l.b16 %v1707
      %v1740 = vunpack.c.l.b16 %v1708
      %v1741 = vunpack.c.l.b16 %v1709
      %v1742 = vunpack.c.l.b16 %v1710
      %v1743 = vunpack.c.l.b16 %v1711
      %v1744 = vunpack.c.l.b16 %v1712
      %v1745 = vunpack.c.l.b16 %v1713
      %v1746 = vunpack.c.l.b16 %v1714
      %v1747 = vunpack.c.l.b16 %v1715
      %v1748 = vunpack.c.l.b16 %v1716
      %v1749 = vpack.c.b16 %v1734, %v1733
      %v1750 = vpack.c.b16 %v1736, %v1735
      %v1751 = vpack.c.b16 %v1738, %v1737
      %v1752 = vpack.c.b16 %v1740, %v1739
      %v1753 = vpack.c.b16 %v1742, %v1741
      %v1754 = vpack.c.b16 %v1744, %v1743
      %v1755 = vpack.c.b16 %v1746, %v1745
      %v1756 = vpack.c.b16 %v1748, %v1747
      %1765 = vmatprep.subr.bf16.mxu0 0
      %1766 = vmatpush1.bf16.msra.mxu0 %v1749
      %1767 = vmatprep.subr.bf16.mxu0 0
      %1768 = vmatpush1.bf16.msra.mxu0 %v1750
      %1769 = vmatprep.subr.bf16.mxu0 0
      %1770 = vmatpush1.bf16.msra.mxu0 %v1751
      %1771 = vmatprep.subr.bf16.mxu0 0
      %1772 = vmatpush1.bf16.msra.mxu0 %v1752
      %1773 = vmatprep.subr.bf16.mxu0 0
      %1774 = vmatpush1.bf16.msra.mxu0 %v1753
      %1775 = vmatprep.subr.bf16.mxu0 0
      %1776 = vmatpush1.bf16.msra.mxu0 %v1754
      %1777 = vmatprep.subr.bf16.mxu0 0
      %1778 = vmatpush1.bf16.msra.mxu0 %v1755
      %1779 = vmatprep.subr.bf16.mxu0 0
      %1780 = vmatpush1.bf16.msra.mxu0 %v1756
      %1781 = vmatprep.subr.bf16.mxu0 0
      %1782 = vmatpush1.bf16.msra.mxu0 0
      %1783 = vmatprep.subr.bf16.mxu0 0
      %1784 = vmatpush1.bf16.msra.mxu0 0
      %1785 = vmatprep.subr.bf16.mxu0 0
      %1786 = vmatpush1.bf16.msra.mxu0 0
      %1787 = vmatprep.subr.bf16.mxu0 0
      %1788 = vmatpush1.bf16.msra.mxu0 0
      %1789 = vmatprep.subr.bf16.mxu0 0
      %1790 = vmatpush1.bf16.msra.mxu0 0
      %1791 = vmatprep.subr.bf16.mxu0 0
      %1792 = vmatpush1.bf16.msra.mxu0 0
      %1793 = vmatprep.subr.bf16.mxu0 0
      %1794 = vmatpush1.bf16.msra.mxu0 0
      %1795 = vmatprep.subr.bf16.mxu0 0
      %1796 = vmatpush1.bf16.msra.mxu0 0
      %1797 = vmatprep.mubr.bf16.mxu0 0
      %1798 = vmatmul.mubr.bf16.gmra.mrb[0].mxu0 %v826
      %v1799 = vpop.f32.mrb[0].mxu0
      %v1800 = vadd.f32 0.0, %v1799
      %v1801 = vpop.f32.mrb[0].mxu0
      %v1802 = vpop.f32.mrb[0].mxu0
      %v1803 = vadd.f32 0.0, %v1802
      %v1804 = vpop.f32.mrb[0].mxu0
      %1805 = vmatprep.mubr.bf16.mxu0 0
      %1806 = vmatmul.mubr.bf16.gmra.mrb[0].mxu0 %v829
      %v1807 = vpop.f32.mrb[0].mxu0
      %v1808 = vadd.f32 0.0, %v1807
      %v1809 = vpop.f32.mrb[0].mxu0
      %v1810 = vpop.f32.mrb[0].mxu0
      %v1811 = vadd.f32 0.0, %v1810
      %v1812 = vpop.f32.mrb[0].mxu0
      %1813 = vmatprep.mubr.bf16.mxu0 0
      %1814 = vmatmul.mubr.bf16.gmra.mrb[0].mxu0 %v1265
      %v1815 = vpop.f32.mrb[0].mxu0
      %v1816 = vadd.f32 0.0, %v1815
      %v1817 = vpop.f32.mrb[0].mxu0
      %v1818 = vpop.f32.mrb[0].mxu0
      %v1819 = vadd.f32 0.0, %v1818
      %v1820 = vpop.f32.mrb[0].mxu0
      %1821 = vmatprep.mubr.bf16.mxu0 0
      %1822 = vmatmul.mubr.bf16.gmra.mrb[0].mxu0 %v1698
      %v1823 = vpop.f32.mrb[0].mxu0
      %v1824 = vadd.f32 0.0, %v1823
      %v1825 = vpop.f32.mrb[0].mxu0
      %v1826 = vpop.f32.mrb[0].mxu0
      %v1827 = vadd.f32 0.0, %v1826
      %v1828 = vpop.f32.mrb[0].mxu0
      %1829 = vdwg.mxu0
      %v1830 = vadd.f32 %v1686, %v1800
      %v1831 = vadd.f32 %v1687, %v1803
      %v1832 = vadd.f32 %v1688, %v1808
      %v1833 = vadd.f32 %v1689, %v1811
      %v1834 = vadd.f32 %v1690, %v1816
      %v1835 = vadd.f32 %v1691, %v1819
      %v1836 = vadd.f32 %v1692, %v1824
      %v1837 = vadd.f32 %v1693, %v1827
      %1838 = vst [vmem:[%s261] sm:$0xff] %v1830
      %1839 = vst [vmem:[%s261 + $0x8] sm:$0xff] %v1831
      %1840 = vst [vmem:[%s261 + $0x10] sm:$0xff] %v1832
      %1841 = vst [vmem:[%s261 + $0x18] sm:$0xff] %v1833
      %1842 = vst [vmem:[%s261 + $0x20] sm:$0xff] %v1834
      %1843 = vst [vmem:[%s261 + $0x28] sm:$0xff] %v1835
      %1844 = vst [vmem:[%s261 + $0x30] sm:$0xff] %v1836
      %1845 = vst [vmem:[%s261 + $0x38] sm:$0xff] %v1837
      %v1846 = vadd.f32 %v1830, %v1831
      %v1847 = vadd.f32 %v1846, %v1832
      %v1848 = vadd.f32 %v1847, %v1833
      %v1849 = vadd.f32 %v1848, %v1834
      %v1850 = vadd.f32 %v1849, %v1835
      %v1851 = vadd.f32 %v1850, %v1836
      %v1852 = vadd.f32 %v1851, %v1837
      %v1853 = vrot.slane %v1852, 4
      %v1854 = vadd.f32 %v1852, %v1853
      %v1855 = vrot.slane %v1854, 2
      %v1856 = vadd.f32 %v1854, %v1855
      %v1857 = vrot.slane %v1856, 1
      %v1858 = vadd.f32 %v1856, %v1857
      %v1859 = vmul.f32 %v1830, %v1830
      %v1860 = vmul.f32 %v1831, %v1831
      %v1861 = vmul.f32 %v1832, %v1832
      %v1862 = vmul.f32 %v1833, %v1833
      %v1863 = vmul.f32 %v1834, %v1834
      %v1864 = vmul.f32 %v1835, %v1835
      %v1865 = vmul.f32 %v1836, %v1836
      %v1866 = vmul.f32 %v1837, %v1837
      %v1867 = vadd.f32 %v1859, %v1860
      %v1868 = vadd.f32 %v1867, %v1861
      %v1869 = vadd.f32 %v1868, %v1862
      %v1870 = vadd.f32 %v1869, %v1863
      %v1871 = vadd.f32 %v1870, %v1864
      %v1872 = vadd.f32 %v1871, %v1865
      %v1873 = vadd.f32 %v1872, %v1866
      %v1874 = vrot.slane %v1873, 4
      %v1875 = vadd.f32 %v1873, %v1874
      %v1876 = vrot.slane %v1875, 2
      %v1877 = vadd.f32 %v1875, %v1876
      %v1878 = vrot.slane %v1877, 1
      %v1879 = vadd.f32 %v1877, %v1878
      %vm1880 = vcmask 1040384
      %v1881 = vsel %vm1880, %v1858, %v1879
      %1882 = vst [vmem:[%s270] sm:$0x3] %v1881
      %s1883 = smul.u32 4, %s22
      %p1884 = scmp.lt.s32.totalorder %s21, 1
      %s1885 = scalar_select %p1884, %s21, 1
      %p1886 = scmp.lt.s32.totalorder %s1883, 15
      %s1887 = scalar_select %p1886, %s1883, 15
      %s1888 = smul.addr %s1887, 2
      %s1889 = smul.addr %s1885, 32
      %s1890 = sadd.s32 %s1888, %s1889
      %s1891 = smul.addr %s1890, 8
      %s1892 = scalar_lea.vmem %s4, %s1891
      %p1893 = scmp.lt.s32.totalorder %s21, 1
      %s1894 = scalar_select %p1893, %s21, 1
      %p1895 = scmp.lt.s32.totalorder %s22, 3
      %s1896 = scalar_select %p1895, %s22, 3
      %s1897 = smul.addr %s1894, 4
      %s1898 = sadd.s32 %s1896, %s1897
      %s1899 = smul.addr %s1898, 2
      %s1900 = scalar_lea.vmem %s5, %s1899
      // Predicated region
      $region37: #{basic_block_forward.4} parent=35 // pred_check
        %p1901 = pneg %p138
      $region38: #{basic_block_forward.4} parent=35 // pred_check_branch
        %1903 = sbr.rel (%p1901) target = $region40
      $region39: #{basic_block_forward.4} parent=35 // pred_region
        %s1904 = smul.u32 4, %s22
      $region40: #{basic_block_forward.4} parent=35 // pred_fallthru
        _
      // Predicated region
      $region41: #{basic_block_forward.4} parent=35 // pred_check
        %p1905 = pneg %p166
      $region42: #{basic_block_forward.4} parent=35 // pred_check_branch
        %1907 = sbr.rel (%p1905) target = $region44
      $region43: #{basic_block_forward.4} parent=35 // pred_region
        _
      $region44: #{basic_block_forward.4} parent=35 // pred_fallthru
        _
    $region36: #{basic_block_forward.4} parent=5 // pred_fallthru
      _
    %p1908 = scmp.le.s32.totalorder 2, %s12
    // Predicated region
    $region45: #{basic_block_forward.4} parent=5 // pred_check
      %p1909 = pneg %p1908
    $region46: #{basic_block_forward.4} parent=5 // pred_check_branch
      %1911 = sbr.rel (%p1909) target = $region48
    $region47: #{basic_block_forward.4} parent=5 // pred_region
      %s1912 = ssub.s32 %s12, 2
      // Predicated region
      $region49: #{basic_block_forward.4} parent=47 // pred_check
        %p1913 = pneg %p144
      $region50: #{basic_block_forward.4} parent=47 // pred_check_branch
        %1915 = sbr.rel (%p1913) target = $region52
      $region51: #{basic_block_forward.4} parent=47 // pred_region
        %s1916 = smul.u32 4, %s24
        %p1917 = scmp.lt.s32.totalorder %s23, 1
        %s1918 = scalar_select %p1917, %s23, 1
        %p1919 = scmp.lt.s32.totalorder %s1916, 15
        %s1920 = scalar_select %p1919, %s1916, 15
        %s1921 = smul.addr %s1920, 2
        %s1922 = smul.addr %s1918, 32
        %s1923 = sadd.s32 %s1921, %s1922
        %s1924 = smul.addr %s1923, 8
        %s1925 = scalar_lea.vmem %s4, %s1924
      $region52: #{basic_block_forward.4} parent=47 // pred_fallthru
        _
      // Predicated region
      $region53: #{basic_block_forward.4} parent=47 // pred_check
        %p1926 = pneg %p172
      $region54: #{basic_block_forward.4} parent=47 // pred_check_branch
        %1928 = sbr.rel (%p1926) target = $region56
      $region55: #{basic_block_forward.4} parent=47 // pred_region
        %p1929 = scmp.lt.s32.totalorder %s23, 1
        %s1930 = scalar_select %p1929, %s23, 1
        %p1931 = scmp.lt.s32.totalorder %s24, 3
        %s1932 = scalar_select %p1931, %s24, 3
        %s1933 = smul.addr %s1930, 4
        %s1934 = sadd.s32 %s1932, %s1933
        %s1935 = smul.addr %s1934, 2
        %s1936 = scalar_lea.vmem %s5, %s1935
      $region56: #{basic_block_forward.4} parent=47 // pred_fallthru
        _
    $region48: #{basic_block_forward.4} parent=5 // pred_fallthru
      _
  $region6: #{basic_block_forward.4} parent=0 // loop_footer
    %s16 = sadd.s32 1, %s12
  $region7: #{basic_block_forward.4} parent=0 // loop_footer_branch
    %11 = sbr.rel target = $region3
  $region8: #{basic_block_forward.4} parent=0 // loop_exit
    _

// kernel: basic_block_forward.3
$region0: #{basic_block_forward.3}
  #allocation0 [shape = 'u32[]', space=smem, size = 0x4, offset = 0x4, fixed_abs, tag = 'smem constant byte address 0x4 - core index']
  #allocation1 [shape = 'u32[144,128]{1,0:T(1,128)}', space=vmem, size = 0x12000, scoped, tag = 'internal scratch']
  %s0 = inlined_call_operand.vmem [shape: bf16[2,18,18,128], index: 0, kind: input, shape index: {}]
  %s1 = inlined_call_operand.vmem [shape: bf16[9,128,128], index: 1, kind: input, shape index: {}]
  %s2 = inlined_call_operand.vmem [shape: f32[2,16,16,128], index: 2, kind: output, shape index: {0}]
  %s3 = inlined_call_operand.vmem [shape: f32[2,4,2,128], index: 3, kind: output, shape index: {1}]
  %4 = xla_tuple %s2, %s3
  %s5 = sld [smem:[#allocation0]]
  $region49: #{basic_block_forward.3} parent=0
    _
  %s7 = ssub.s32 1, %s5
  %s8 = scalar_select 0, %s7, %s5
  loop: start=0, step=1, limit=10
  $region2: #{basic_block_forward.3} parent=0 // loop_pre_header
    _
  $region3: #{basic_block_forward.3} parent=0 // loop_header
    %s10 = sphi 0, %s14
    %p11 = scmp.ge.s32.totalorder %s10, 10
    %s17 = sphi 0, %s29
    %s18 = sphi 0, %s25
    %s19 = sphi 0, %s17
    %s20 = sphi 0, %s18
    %s21 = sphi 0, %s19
    %s22 = sphi 0, %s20
    %s32 = sphi 0, %s34
    %s35 = sphi 0, %s32
    %s36 = sphi 0, %s35
    %s52 = sphi 0, %s36
    %s56 = sphi 0, %s56
    %s58 = sphi 0, %s56
    %s59 = sphi 0, %s58
    %s73 = sphi 0, %s59
    %s81 = sphi 0, %s83
    %s84 = sphi 0, %s81
    %s85 = sphi 0, %s84
    %s101 = sphi 0, %s85
    %s109 = sphi 0, %s111
    %s112 = sphi 0, %s109
    %s113 = sphi 0, %s112
    %s129 = sphi 0, %s113
  $region4: #{basic_block_forward.3} parent=0 // loop_header_branch
    %13 = sbr.rel (%p11) target = $region8
  $region5: #{basic_block_forward.3} parent=0 // loop_body
    %s15 = ssub.s32 %s10, 1
    %s16 = ssub.s32 %s10, 2
    %s23 = sadd.s32 1, %s18
    %p24 = scmp.ge.s32.totalorder %s23, 4
    %s25 = scalar_select %p24, 0, %s23
    %s26 = sadd.s32 1, %s17
    %s27 = scalar_select %p24, %s26, %s17
    %p28 = scmp.ge.s32.totalorder %s27, 2
    %s29 = scalar_select %p28, 0, %s27
    %s30 = ssub.s32 %s17, %s29
    %p31 = scmp.eq.s32.totalorder %s30, 0
    %s33 = sadd.s32 %s32, 1
    %s34 = scalar_select %p31, %s32, %s33
    %p37 = pneg %p31
    %p38 = scmp.eq.s32.totalorder %s10, 7
    %p39 = por %p37, %p38
    %p40 = scmp.ne.s32.totalorder %s32, %s35
    %p41 = scmp.eq.s32.totalorder %s10, 0
    %p42 = por %p40, %p41
    %p43 = scmp.ne.s32.totalorder %s32, %s35
    %p44 = scmp.eq.s32.totalorder %s15, 7
    %p45 = por %p43, %p44
    %p46 = scmp.ne.s32.totalorder %s35, %s36
    %p47 = scmp.eq.s32.totalorder %s15, 0
    %p48 = por %p46, %p47
    %p49 = scmp.ne.s32.totalorder %s35, %s36
    %p50 = scmp.eq.s32.totalorder %s16, 7
    %p51 = por %p49, %p50
    %p53 = scmp.ne.s32.totalorder %s36, %s52
    %p54 = scmp.eq.s32.totalorder %s16, 0
    %p55 = por %p53, %p54
    %s57 = sadd.s32 %s56, 1
    %p60 = scmp.eq.s32.totalorder %s10, 7
    %p61 = scmp.ne.s32.totalorder %s56, %s58
    %p62 = scmp.eq.s32.totalorder %s10, 0
    %p63 = por %p61, %p62
    %p64 = scmp.ne.s32.totalorder %s56, %s58
    %p65 = scmp.eq.s32.totalorder %s15, 7
    %p66 = por %p64, %p65
    %p67 = scmp.ne.s32.totalorder %s58, %s59
    %p68 = scmp.eq.s32.totalorder %s15, 0
    %p69 = por %p67, %p68
    %p70 = scmp.ne.s32.totalorder %s58, %s59
    %p71 = scmp.eq.s32.totalorder %s16, 7
    %p72 = por %p70, %p71
    %p74 = scmp.ne.s32.totalorder %s59, %s73
    %p75 = scmp.eq.s32.totalorder %s16, 0
    %p76 = por %p74, %p75
    %s77 = ssub.s32 %s17, %s29
    %s78 = ssub.s32 %s18, %s25
    %s79 = sor.u32 %s77, %s78
    %p80 = scmp.eq.s32.totalorder %s79, 0
    %s82 = sadd.s32 %s81, 1
    %s83 = scalar_select %p80, %s81, %s82
    %p86 = pneg %p80
    %p87 = scmp.eq.s32.totalorder %s10, 7
    %p88 = por %p86, %p87
    %p89 = scmp.ne.s32.totalorder %s81, %s84
    %p90 = scmp.eq.s32.totalorder %s10, 0
    %p91 = por %p89, %p90
    %p92 = scmp.ne.s32.totalorder %s81, %s84
    %p93 = scmp.eq.s32.totalorder %s15, 7
    %p94 = por %p92, %p93
    %p95 = scmp.ne.s32.totalorder %s84, %s85
    %p96 = scmp.eq.s32.totalorder %s15, 0
    %p97 = por %p95, %p96
    %p98 = scmp.ne.s32.totalorder %s84, %s85
    %p99 = scmp.eq.s32.totalorder %s16, 7
    %p100 = por %p98, %p99
    %p102 = scmp.ne.s32.totalorder %s85, %s101
    %p103 = scmp.eq.s32.totalorder %s16, 0
    %p104 = por %p102, %p103
    %s105 = ssub.s32 %s17, %s29
    %s106 = ssub.s32 %s18, %s25
    %s107 = sor.u32 %s105, %s106
    %p108 = scmp.eq.s32.totalorder %s107, 0
    %s110 = sadd.s32 %s109, 1
    %s111 = scalar_select %p108, %s109, %s110
    %p114 = pneg %p108
    %p115 = scmp.eq.s32.totalorder %s10, 7
    %p116 = por %p114, %p115
    %p117 = scmp.ne.s32.totalorder %s109, %s112
    %p118 = scmp.eq.s32.totalorder %s10, 0
    %p119 = por %p117, %p118
    %p120 = scmp.ne.s32.totalorder %s109, %s112
    %p121 = scmp.eq.s32.totalorder %s15, 7
    %p122 = por %p120, %p121
    %p123 = scmp.ne.s32.totalorder %s112, %s113
    %p124 = scmp.eq.s32.totalorder %s15, 0
    %p125 = por %p123, %p124
    %p126 = scmp.ne.s32.totalorder %s112, %s113
    %p127 = scmp.eq.s32.totalorder %s16, 7
    %p128 = por %p126, %p127
    %p130 = scmp.ne.s32.totalorder %s113, %s129
    %p131 = scmp.eq.s32.totalorder %s16, 0
    %p132 = por %p130, %p131
    %p133 = scmp.le.s32.totalorder 1, %s10
    %p134 = scmp.lt.s32.totalorder %s10, 9
    %p135 = pnand %p133, %p134
    %p136 = pneg %p135
    // Predicated region
    $region9: #{basic_block_forward.3} parent=5 // pred_check
      _
    $region10: #{basic_block_forward.3} parent=5 // pred_check_branch
      %138 = sbr.rel (%p135) target = $region12
    $region11: #{basic_block_forward.3} parent=5 // pred_region
      %s139 = ssub.s32 %s10, 1
      // Predicated region
      $region13: #{basic_block_forward.3} parent=11 // pred_check
        %p140 = pneg %p69
      $region14: #{basic_block_forward.3} parent=11 // pred_check_branch
        %142 = sbr.rel (%p140) target = $region16
      $region15: #{basic_block_forward.3} parent=11 // pred_region
        _
      $region16: #{basic_block_forward.3} parent=11 // pred_fallthru
        _
    $region12: #{basic_block_forward.3} parent=5 // pred_fallthru
      _
    %p143 = scmp.lt.s32.totalorder %s10, 8
    // Predicated region
    $region17: #{basic_block_forward.3} parent=5 // pred_check
      %p144 = pneg %p143
    $region18: #{basic_block_forward.3} parent=5 // pred_check_branch
      %146 = sbr.rel (%p144) target = $region20
    $region19: #{basic_block_forward.3} parent=5 // pred_region
      // Predicated region
      $region21: #{basic_block_forward.3} parent=19 // pred_check
        %p147 = pneg %p42
      $region22: #{basic_block_forward.3} parent=19 // pred_check_branch
        %149 = sbr.rel (%p147) target = $region24
      $region23: #{basic_block_forward.3} parent=19 // pred_region
        %p150 = scmp.lt.s32.totalorder %s17, 1
        %s151 = scalar_select %p150, %s17, 1
        %s152 = smul.addr %s151, 54
        %s153 = smul.addr %s152, 4
        %s154 = scalar_lea.vmem %s0, %s153
      $region24: #{basic_block_forward.3} parent=19 // pred_fallthru
        _
    $region20: #{basic_block_forward.3} parent=5 // pred_fallthru
      _
    %p155 = scmp.le.s32.totalorder 1, %s10
    %p156 = scmp.lt.s32.totalorder %s10, 9
    %p157 = pnand %p155, %p156
    %p158 = pneg %p157
    // Predicated region
    $region25: #{basic_block_forward.3} parent=5 // pred_check
      _
    $region26: #{basic_block_forward.3} parent=5 // pred_check_branch
      %160 = sbr.rel (%p157) target = $region28
    $region27: #{basic_block_forward.3} parent=5 // pred_region
      %s161 = ssub.s32 %s10, 1
      %p162 = scmp.lt.s32.totalorder %s19, 1
      %s163 = scalar_select %p162, %s19, 1
      %s164 = smul.addr %s163, 54
      %s165 = smul.addr %s164, 4
      %s166 = scalar_lea.vmem %s0, %s165
      %p167 = pneg %p48
      %p168 = pneg %p45
      %p169 = pneg %p69
      %p170 = pneg %p66
      %p171 = pneg %p97
      %p172 = pneg %p94
      %s173 = smul.u32 4, %s20
      %p174 = scmp.lt.s32.totalorder %s19, 1
      %s175 = scalar_select %p174, %s19, 1
      %p176 = scmp.lt.s32.totalorder %s173, 15
      %s177 = scalar_select %p176, %s173, 15
      %s178 = smul.addr %s177, 2
      %s179 = smul.addr %s175, 32
      %s180 = sadd.s32 %s178, %s179
      %s181 = smul.addr %s180, 8
      %s182 = scalar_lea.vmem %s2, %s181
      %p183 = pneg %p125
      %p184 = pneg %p122
      %p185 = scmp.lt.s32.totalorder %s19, 1
      %s186 = scalar_select %p185, %s19, 1
      %p187 = scmp.lt.s32.totalorder %s20, 3
      %s188 = scalar_select %p187, %s20, 3
      %s189 = smul.addr %s186, 4
      %s190 = sadd.s32 %s188, %s189
      %s191 = smul.addr %s190, 2
      %s192 = scalar_lea.vmem %s3, %s191
      %p193 = scmp.lt.s32.totalorder %s19, 1
      %s194 = scalar_select %p193, %s19, 1
      %s195 = smul.addr %s194, 54
      %s196 = smul.addr %s195, 4
      %s197 = scalar_lea.vmem %s0, %s196
      %s198 = smul.u32 4, %s20
      %p199 = scmp.lt.s32.totalorder %s19, 1
      %s200 = scalar_select %p199, %s19, 1
      %p201 = scmp.lt.s32.totalorder %s198, 15
      %s202 = scalar_select %p201, %s198, 15
      %s203 = smul.addr %s202, 2
      %s204 = smul.addr %s200, 32
      %s205 = sadd.s32 %s203, %s204
      %s206 = smul.addr %s205, 8
      %s207 = scalar_lea.vmem %s2, %s206
      %s208 = smul.u32 4, %s20
      %p209 = scmp.lt.s32.totalorder %s19, 1
      %s210 = scalar_select %p209, %s19, 1
      %p211 = scmp.lt.s32.totalorder %s20, 3
      %s212 = scalar_select %p211, %s20, 3
      %s213 = smul.addr %s210, 4
      %s214 = sadd.s32 %s212, %s213
      %s215 = smul.addr %s214, 2
      %s216 = scalar_lea.vmem %s3, %s215
      %s218 = smul.u32 %s20, 4
      %s219 = smul.u32 %s218, 3
      %s220 = smul.addr %s219, 4
      %s221 = scalar_lea.vmem %s197, %s220
      %v222 = vld [vmem:[%s221] sm:$0xf]
      %v223 = vld [vmem:[%s221 + $0x4] sm:$0xf]
      %v224 = vld [vmem:[%s221 + $0xc] sm:$0xf]
      %v225 = vld [vmem:[%s221 + $0x10] sm:$0xf]
      %v226 = vld [vmem:[%s221 + $0x18] sm:$0xf]
      %v227 = vld [vmem:[%s221 + $0x1c] sm:$0xf]
      %v228 = vld [vmem:[%s221 + $0x24] sm:$0xf]
      %v229 = vld [vmem:[%s221 + $0x28] sm:$0xf]
      %v230 = vld [vmem:[%s1] sm:$0xf]
      %v231 = vld [vmem:[%s1 + $0x4] sm:$0xf]
      %v232 = vld [vmem:[%s1 + $0x8] sm:$0xf]
      %v233 = vld [vmem:[%s1 + $0xc] sm:$0xf]
      %v234 = vld [vmem:[%s1 + $0x10] sm:$0xf]
      %v235 = vld [vmem:[%s1 + $0x14] sm:$0xf]
      %v236 = vld [vmem:[%s1 + $0x18] sm:$0xf]
      %v237 = vld [vmem:[%s1 + $0x1c] sm:$0xf]
      %v238 = vld [vmem:[%s1 + $0x20] sm:$0xf]
      %v239 = vld [vmem:[%s1 + $0x24] sm:$0xf]
      %v240 = vld [vmem:[%s1 + $0x28] sm:$0xf]
      %v241 = vld [vmem:[%s1 + $0x2c] sm:$0xf]
      %v242 = vld [vmem:[%s1 + $0x30] sm:$0xf]
      %v243 = vld [vmem:[%s1 + $0x34] sm:$0xf]
      %v244 = vld [vmem:[%s1 + $0x38] sm:$0xf]
      %v245 = vld [vmem:[%s1 + $0x3c] sm:$0xf]
      %v246 = vld [vmem:[%s221 + $0x8] sm:$0x1]
      %v247 = vld [vmem:[%s221 + $0x14] sm:$0x1]
      %v248 = vld [vmem:[%s221 + $0x20] sm:$0x1]
      %v249 = vld [vmem:[%s221 + $0x2c] sm:$0x1]
      %vm250 = vsmask.f32 3328
      %vm251 = vsmask.f32 7440
      %vm252 = vmor %vm250, %vm251
      %v254 = vshrl.u32 %v222, 16
      %v256 = vrot.slane %v254, 4
      %v257 = vshll.u32 %v222, 16
      %v259 = vrot.slane %v257, 5
      %v260 = vor.u32 %v256, %v259
      %v261 = vrot.slane %v260, 4
      %v263 = vshll.u32 %v223, 16
      %v265 = vrot.slane %v263, 5
      %v266 = vsel %vm252, %v261, %v265
      %v267 = vshrl.u32 %v223, 16
      %v269 = vrot.slane %v267, 4
      %v270 = vor.u32 %v269, %v265
      %v271 = vrot.slane %v270, 4
      %v273 = vshll.u32 %v246, 16
      %v275 = vrot.slane %v273, 5
      %v276 = vsel %vm252, %v271, %v275
      %v278 = vshrl.u32 %v224, 16
      %v280 = vrot.slane %v278, 4
      %v281 = vshll.u32 %v224, 16
      %v283 = vrot.slane %v281, 5
      %v284 = vor.u32 %v280, %v283
      %v285 = vrot.slane %v284, 4
      %v287 = vshll.u32 %v225, 16
      %v289 = vrot.slane %v287, 5
      %v290 = vsel %vm252, %v285, %v289
      %v291 = vshrl.u32 %v225, 16
      %v293 = vrot.slane %v291, 4
      %v294 = vor.u32 %v293, %v289
      %v295 = vrot.slane %v294, 4
      %v297 = vshll.u32 %v247, 16
      %v299 = vrot.slane %v297, 5
      %v300 = vsel %vm252, %v295, %v299
      %v302 = vshrl.u32 %v226, 16
      %v304 = vrot.slane %v302, 4
      %v305 = vshll.u32 %v226, 16
      %v307 = vrot.slane %v305, 5
      %v308 = vor.u32 %v304, %v307
      %v309 = vrot.slane %v308, 4
      %v311 = vshll.u32 %v227, 16
      %v313 = vrot.slane %v311, 5
      %v314 = vsel %vm252, %v309, %v313
      %v315 = vshrl.u32 %v227, 16
      %v317 = vrot.slane %v315, 4
      %v318 = vor.u32 %v317, %v313
      %v319 = vrot.slane %v318, 4
      %v321 = vshll.u32 %v248, 16
      %v323 = vrot.slane %v321, 5
      %v324 = vsel %vm252, %v319, %v323
      %v326 = vshrl.u32 %v228, 16
      %v328 = vrot.slane %v326, 4
      %v329 = vshll.u32 %v228, 16
      %v331 = vrot.slane %v329, 5
      %v332 = vor.u32 %v328, %v331
      %v333 = vrot.slane %v332, 4
      %v335 = vshll.u32 %v229, 16
      %v337 = vrot.slane %v335, 5
      %v338 = vsel %vm252, %v333, %v337
      %v339 = vshrl.u32 %v229, 16
      %v341 = vrot.slane %v339, 4
      %v342 = vor.u32 %v341, %v337
      %v343 = vrot.slane %v342, 4
      %v345 = vshll.u32 %v249, 16
      %v347 = vrot.slane %v345, 5
      %v348 = vsel %vm252, %v343, %v347
      %s349 = scalar_lea.vmem %s1, 64
      %v350 = vld [vmem:[%s349] sm:$0xf]
      %v351 = vld [vmem:[%s349 + $0x4] sm:$0xf]
      %v352 = vld [vmem:[%s349 + $0x8] sm:$0xf]
      %v353 = vld [vmem:[%s349 + $0xc] sm:$0xf]
      %v354 = vld [vmem:[%s349 + $0x10] sm:$0xf]
      %v355 = vld [vmem:[%s349 + $0x14] sm:$0xf]
      %v356 = vld [vmem:[%s349 + $0x18] sm:$0xf]
      %v357 = vld [vmem:[%s349 + $0x1c] sm:$0xf]
      %v358 = vld [vmem:[%s349 + $0x20] sm:$0xf]
      %v359 = vld [vmem:[%s349 + $0x24] sm:$0xf]
      %v360 = vld [vmem:[%s349 + $0x28] sm:$0xf]
      %v361 = vld [vmem:[%s349 + $0x2c] sm:$0xf]
      %v362 = vld [vmem:[%s349 + $0x30] sm:$0xf]
      %v363 = vld [vmem:[%s349 + $0x34] sm:$0xf]
      %v364 = vld [vmem:[%s349 + $0x38] sm:$0xf]
      %v365 = vld [vmem:[%s349 + $0x3c] sm:$0xf]
      %v366 = vunpack.c.l.b16 %v266
      %v367 = vunpack.c.l.b16 %v276
      %v368 = vunpack.c.l.b16 %v290
      %v369 = vunpack.c.l.b16 %v300
      %v370 = vunpack.c.l.b16 %v314
      %v371 = vunpack.c.l.b16 %v324
      %v372 = vunpack.c.l.b16 %v338
      %v373 = vunpack.c.l.b16 %v348
      %v374 = vpack.c.b16 %v367, %v366
      %v375 = vpack.c.b16 %v369, %v368
      %v376 = vpack.c.b16 %v371, %v370
      %v377 = vpack.c.b16 %v373, %v372
      %v398 = vunpack.c.l.b16 %v350
      %v399 = vunpack.c.l.b16 %v351
      %v400 = vunpack.c.l.b16 %v352
      %v401 = vunpack.c.l.b16 %v353
      %v402 = vunpack.c.l.b16 %v354
      %v403 = vunpack.c.l.b16 %v355
      %v404 = vunpack.c.l.b16 %v356
      %v405 = vunpack.c.l.b16 %v357
      %v406 = vunpack.c.l.b16 %v358
      %v407 = vunpack.c.l.b16 %v359
      %v408 = vunpack.c.l.b16 %v360
      %v409 = vunpack.c.l.b16 %v361
      %v410 = vunpack.c.l.b16 %v362
      %v411 = vunpack.c.l.b16 %v363
      %v412 = vunpack.c.l.b16 %v364
      %v413 = vunpack.c.l.b16 %v365
      %v414 = vpack.c.b16 %v399, %v398
      %v415 = vpack.c.b16 %v401, %v400
      %v416 = vpack.c.b16 %v403, %v402
      %v417 = vpack.c.b16 %v405, %v404
      %v418 = vpack.c.b16 %v407, %v406
      %v419 = vpack.c.b16 %v409, %v408
      %v420 = vpack.c.b16 %v411, %v410
      %v421 = vpack.c.b16 %v413, %v412
      %430 = vmatprep.subr.bf16.mxu0 0
      %431 = vmatpush1.bf16.msra.mxu0 %v414
      %432 = vmatprep.subr.bf16.mxu0 0
      %433 = vmatpush1.bf16.msra.mxu0 %v415
      %434 = vmatprep.subr.bf16.mxu0 0
      %435 = vmatpush1.bf16.msra.mxu0 %v416
      %436 = vmatprep.subr.bf16.mxu0 0
      %437 = vmatpush1.bf16.msra.mxu0 %v417
      %438 = vmatprep.subr.bf16.mxu0 0
      %439 = vmatpush1.bf16.msra.mxu0 %v418
      %440 = vmatprep.subr.bf16.mxu0 0
      %441 = vmatpush1.bf16.msra.mxu0 %v419
      %442 = vmatprep.subr.bf16.mxu0 0
      %443 = vmatpush1.bf16.msra.mxu0 %v420
      %444 = vmatprep.subr.bf16.mxu0 0
      %445 = vmatpush1.bf16.msra.mxu0 %v421
      %446 = vmatprep.subr.bf16.mxu0 0
      %447 = vmatpush1.bf16.msra.mxu0 0
      %448 = vmatprep.subr.bf16.mxu0 0
      %449 = vmatpush1.bf16.msra.mxu0 0
      %450 = vmatprep.subr.bf16.mxu0 0
      %451 = vmatpush1.bf16.msra.mxu0 0
      %452 = vmatprep.subr.bf16.mxu0 0
      %453 = vmatpush1.bf16.msra.mxu0 0
      %454 = vmatprep.subr.bf16.mxu0 0
      %455 = vmatpush1.bf16.msra.mxu0 0
      %456 = vmatprep.subr.bf16.mxu0 0
      %457 = vmatpush1.bf16.msra.mxu0 0
      %458 = vmatprep.subr.bf16.mxu0 0
      %459 = vmatpush1.bf16.msra.mxu0 0
      %460 = vmatprep.subr.bf16.mxu0 0
      %461 = vmatpush1.bf16.msra.mxu0 0
      %462 = vmatprep.mubr.bf16.mxu0 0
      %463 = vmatmul.mubr.bf16.gmra.mrb[0].mxu0 %v374
      %v464 = vpop.f32.mrb[0].mxu0
      %v465 = vadd.f32 0.0, %v464
      %v466 = vpop.f32.mrb[0].mxu0
      %v467 = vpop.f32.mrb[0].mxu0
      %v468 = vadd.f32 0.0, %v467
      %v469 = vpop.f32.mrb[0].mxu0
      %470 = vmatprep.mubr.bf16.mxu0 0
      %471 = vmatmul.mubr.bf16.gmra.mrb[0].mxu0 %v375
      %v472 = vpop.f32.mrb[0].mxu0
      %v473 = vadd.f32 0.0, %v472
      %v474 = vpop.f32.mrb[0].mxu0
      %v475 = vpop.f32.mrb[0].mxu0
      %v476 = vadd.f32 0.0, %v475
      %v477 = vpop.f32.mrb[0].mxu0
      %478 = vmatprep.mubr.bf16.mxu0 0
      %479 = vmatmul.mubr.bf16.gmra.mrb[0].mxu0 %v376
      %v480 = vpop.f32.mrb[0].mxu0
      %v481 = vadd.f32 0.0, %v480
      %v482 = vpop.f32.mrb[0].mxu0
      %v483 = vpop.f32.mrb[0].mxu0
      %v484 = vadd.f32 0.0, %v483
      %v485 = vpop.f32.mrb[0].mxu0
      %486 = vmatprep.mubr.bf16.mxu0 0
      %487 = vmatmul.mubr.bf16.gmra.mrb[0].mxu0 %v377
      %v488 = vpop.f32.mrb[0].mxu0
      %v489 = vadd.f32 0.0, %v488
      %v490 = vpop.f32.mrb[0].mxu0
      %v491 = vpop.f32.mrb[0].mxu0
      %v492 = vadd.f32 0.0, %v491
      %v493 = vpop.f32.mrb[0].mxu0
      %494 = vdwg.mxu0
      %v503 = vunpack.c.l.b16 %v222
      %v504 = vunpack.c.l.b16 %v223
      %v505 = vunpack.c.l.b16 %v224
      %v506 = vunpack.c.l.b16 %v225
      %v507 = vunpack.c.l.b16 %v226
      %v508 = vunpack.c.l.b16 %v227
      %v509 = vunpack.c.l.b16 %v228
      %v510 = vunpack.c.l.b16 %v229
      %v511 = vpack.c.b16 %v504, %v503
      %v512 = vpack.c.b16 %v506, %v505
      %v513 = vpack.c.b16 %v508, %v507
      %v514 = vpack.c.b16 %v510, %v509
      %v535 = vunpack.c.l.b16 %v230
      %v536 = vunpack.c.l.b16 %v231
      %v537 = vunpack.c.l.b16 %v232
      %v538 = vunpack.c.l.b16 %v233
      %v539 = vunpack.c.l.b16 %v234
      %v540 = vunpack.c.l.b16 %v235
      %v541 = vunpack.c.l.b16 %v236
      %v542 = vunpack.c.l.b16 %v237
      %v543 = vunpack.c.l.b16 %v238
      %v544 = vunpack.c.l.b16 %v239
      %v545 = vunpack.c.l.b16 %v240
      %v546 = vunpack.c.l.b16 %v241
      %v547 = vunpack.c.l.b16 %v242
      %v548 = vunpack.c.l.b16 %v243
      %v549 = vunpack.c.l.b16 %v244
      %v550 = vunpack.c.l.b16 %v245
      %v551 = vpack.c.b16 %v536, %v535
      %v552 = vpack.c.b16 %v538, %v537
      %v553 = vpack.c.b16 %v540, %v539
      %v554 = vpack.c.b16 %v542, %v541
      %v555 = vpack.c.b16 %v544, %v543
      %v556 = vpack.c.b16 %v546, %v545
      %v557 = vpack.c.b16 %v548, %v547
      %v558 = vpack.c.b16 %v550, %v549
      %567 = vmatprep.subr.bf16.mxu0 0
      %568 = vmatpush1.bf16.msra.mxu0 %v551
      %569 = vmatprep.subr.bf16.mxu0 0
      %570 = vmatpush1.bf16.msra.mxu0 %v552
      %571 = vmatprep.subr.bf16.mxu0 0
      %572 = vmatpush1.bf16.msra.mxu0 %v553
      %573 = vmatprep.subr.bf16.mxu0 0
      %574 = vmatpush1.bf16.msra.mxu0 %v554
      %575 = vmatprep.subr.bf16.mxu0 0
      %576 = vmatpush1.bf16.msra.mxu0 %v555
      %577 = vmatprep.subr.bf16.mxu0 0
      %578 = vmatpush1.bf16.msra.mxu0 %v556
      %579 = vmatprep.subr.bf16.mxu0 0
      %580 = vmatpush1.bf16.msra.mxu0 %v557
      %581 = vmatprep.subr.bf16.mxu0 0
      %582 = vmatpush1.bf16.msra.mxu0 %v558
      %583 = vmatprep.subr.bf16.mxu0 0
      %584 = vmatpush1.bf16.msra.mxu0 0
      %585 = vmatprep.subr.bf16.mxu0 0
      %586 = vmatpush1.bf16.msra.mxu0 0
      %587 = vmatprep.subr.bf16.mxu0 0
      %588 = vmatpush1.bf16.msra.mxu0 0
      %589 = vmatprep.subr.bf16.mxu0 0
      %590 = vmatpush1.bf16.msra.mxu0 0
      %591 = vmatprep.subr.bf16.mxu0 0
      %592 = vmatpush1.bf16.msra.mxu0 0
      %593 = vmatprep.subr.bf16.mxu0 0
      %594 = vmatpush1.bf16.msra.mxu0 0
      %595 = vmatprep.subr.bf16.mxu0 0
      %596 = vmatpush1.bf16.msra.mxu0 0
      %597 = vmatprep.subr.bf16.mxu0 0
      %598 = vmatpush1.bf16.msra.mxu0 0
      %599 = vmatprep.mubr.bf16.mxu0 0
      %600 = vmatmul.mubr.bf16.gmra.mrb[0].mxu0 %v511
      %v601 = vpop.f32.mrb[0].mxu0
      %v602 = vadd.f32 %v465, %v601
      %v603 = vpop.f32.mrb[0].mxu0
      %v604 = vpop.f32.mrb[0].mxu0
      %v605 = vadd.f32 %v468, %v604
      %v606 = vpop.f32.mrb[0].mxu0
      %607 = vmatprep.mubr.bf16.mxu0 0
      %608 = vmatmul.mubr.bf16.gmra.mrb[0].mxu0 %v512
      %v609 = vpop.f32.mrb[0].mxu0
      %v610 = vadd.f32 %v473, %v609
      %v611 = vpop.f32.mrb[0].mxu0
      %v612 = vpop.f32.mrb[0].mxu0
      %v613 = vadd.f32 %v476, %v612
      %v614 = vpop.f32.mrb[0].mxu0
      %615 = vmatprep.mubr.bf16.mxu0 0
      %616 = vmatmul.mubr.bf16.gmra.mrb[0].mxu0 %v513
      %v617 = vpop.f32.mrb[0].mxu0
      %v618 = vadd.f32 %v481, %v617
      %v619 = vpop.f32.mrb[0].mxu0
      %v620 = vpop.f32.mrb[0].mxu0
      %v621 = vadd.f32 %v484, %v620
      %v622 = vpop.f32.mrb[0].mxu0
      %623 = vmatprep.mubr.bf16.mxu0 0
      %624 = vmatmul.mubr.bf16.gmra.mrb[0].mxu0 %v514
      %v625 = vpop.f32.mrb[0].mxu0
      %v626 = vadd.f32 %v489, %v625
      %v627 = vpop.f32.mrb[0].mxu0
      %v628 = vpop.f32.mrb[0].mxu0
      %v629 = vadd.f32 %v492, %v628
      %v630 = vpop.f32.mrb[0].mxu0
      %631 = vdwg.mxu0
      %v632 = vld [vmem:[%s221] sm:$0xe]
      %v633 = vld [vmem:[%s221 + $0xc] sm:$0xe]
      %v634 = vld [vmem:[%s221 + $0x18] sm:$0xe]
      %v635 = vld [vmem:[%s221 + $0x24] sm:$0xe]
      %vm644 = vcmask 1042432
      %vm645 = vcmask 1046532
      %vm646 = vmor %vm644, %vm645
      %v647 = vrot.slane %v632, 5
      %v648 = vrot.slane %v647, 4
      %v649 = vrot.slane %v223, 5
      %v650 = vsel %vm646, %v648, %v649
      %v651 = vrot.slane %v649, 4
      %v652 = vrot.slane %v246, 5
      %v653 = vsel %vm646, %v651, %v652
      %v654 = vrot.slane %v633, 5
      %v655 = vrot.slane %v654, 4
      %v656 = vrot.slane %v225, 5
      %v657 = vsel %vm646, %v655, %v656
      %v658 = vrot.slane %v656, 4
      %v659 = vrot.slane %v247, 5
      %v660 = vsel %vm646, %v658, %v659
      %v661 = vrot.slane %v634, 5
      %v662 = vrot.slane %v661, 4
      %v663 = vrot.slane %v227, 5
      %v664 = vsel %vm646, %v662, %v663
      %v665 = vrot.slane %v663, 4
      %v666 = vrot.slane %v248, 5
      %v667 = vsel %vm646, %v665, %v666
      %v668 = vrot.slane %v635, 5
      %v669 = vrot.slane %v668, 4
      %v670 = vrot.slane %v229, 5
      %v671 = vsel %vm646, %v669, %v670
      %v672 = vrot.slane %v670, 4
      %v673 = vrot.slane %v249, 5
      %v674 = vsel %vm646, %v672, %v673
      %s675 = scalar_lea.vmem %s1, 128
      %v676 = vld [vmem:[%s675] sm:$0xf]
      %v677 = vld [vmem:[%s675 + $0x4] sm:$0xf]
      %v678 = vld [vmem:[%s675 + $0x8] sm:$0xf]
      %v679 = vld [vmem:[%s675 + $0xc] sm:$0xf]
      %v680 = vld [vmem:[%s675 + $0x10] sm:$0xf]
      %v681 = vld [vmem:[%s675 + $0x14] sm:$0xf]
      %v682 = vld [vmem:[%s675 + $0x18] sm:$0xf]
      %v683 = vld [vmem:[%s675 + $0x1c] sm:$0xf]
      %v684 = vld [vmem:[%s675 + $0x20] sm:$0xf]
      %v685 = vld [vmem:[%s675 + $0x24] sm:$0xf]
      %v686 = vld [vmem:[%s675 + $0x28] sm:$0xf]
      %v687 = vld [vmem:[%s675 + $0x2c] sm:$0xf]
      %v688 = vld [vmem:[%s675 + $0x30] sm:$0xf]
      %v689 = vld [vmem:[%s675 + $0x34] sm:$0xf]
      %v690 = vld [vmem:[%s675 + $0x38] sm:$0xf]
      %v691 = vld [vmem:[%s675 + $0x3c] sm:$0xf]
      %v692 = vunpack.c.l.b16 %v650
      %v693 = vunpack.c.l.b16 %v653
      %v694 = vunpack.c.l.b16 %v657
      %v695 = vunpack.c.l.b16 %v660
      %v696 = vunpack.c.l.b16 %v664
      %v697 = vunpack.c.l.b16 %v667
      %v698 = vunpack.c.l.b16 %v671
      %v699 = vunpack.c.l.b16 %v674
      %v700 = vpack.c.b16 %v693, %v692
      %v701 = vpack.c.b16 %v695, %v694
      %v702 = vpack.c.b16 %v697, %v696
      %v703 = vpack.c.b16 %v699, %v698
      %v724 = vunpack.c.l.b16 %v676
      %v725 = vunpack.c.l.b16 %v677
      %v726 = vunpack.c.l.b16 %v678
      %v727 = vunpack.c.l.b16 %v679
      %v728 = vunpack.c.l.b16 %v680
      %v729 = vunpack.c.l.b16 %v681
      %v730 = vunpack.c.l.b16 %v682
      %v731 = vunpack.c.l.b16 %v683
      %v732 = vunpack.c.l.b16 %v684
      %v733 = vunpack.c.l.b16 %v685
      %v734 = vunpack.c.l.b16 %v686
      %v735 = vunpack.c.l.b16 %v687
      %v736 = vunpack.c.l.b16 %v688
      %v737 = vunpack.c.l.b16 %v689
      %v738 = vunpack.c.l.b16 %v690
      %v739 = vunpack.c.l.b16 %v691
      %v740 = vpack.c.b16 %v725, %v724
      %v741 = vpack.c.b16 %v727, %v726
      %v742 = vpack.c.b16 %v729, %v728
      %v743 = vpack.c.b16 %v731, %v730
      %v744 = vpack.c.b16 %v733, %v732
      %v745 = vpack.c.b16 %v735, %v734
      %v746 = vpack.c.b16 %v737, %v736
      %v747 = vpack.c.b16 %v739, %v738
      %756 = vmatprep.subr.bf16.mxu0 0
      %757 = vmatpush1.bf16.msra.mxu0 %v740
      %758 = vmatprep.subr.bf16.mxu0 0
      %759 = vmatpush1.bf16.msra.mxu0 %v741
      %760 = vmatprep.subr.bf16.mxu0 0
      %761 = vmatpush1.bf16.msra.mxu0 %v742
      %762 = vmatprep.subr.bf16.mxu0 0
      %763 = vmatpush1.bf16.msra.mxu0 %v743
      %764 = vmatprep.subr.bf16.mxu0 0
      %765 = vmatpush1.bf16.msra.mxu0 %v744
      %766 = vmatprep.subr.bf16.mxu0 0
      %767 = vmatpush1.bf16.msra.mxu0 %v745
      %768 = vmatprep.subr.bf16.mxu0 0
      %769 = vmatpush1.bf16.msra.mxu0 %v746
      %770 = vmatprep.subr.bf16.mxu0 0
      %771 = vmatpush1.bf16.msra.mxu0 %v747
      %772 = vmatprep.subr.bf16.mxu0 0
      %773 = vmatpush1.bf16.msra.mxu0 0
      %774 = vmatprep.subr.bf16.mxu0 0
      %775 = vmatpush1.bf16.msra.mxu0 0
      %776 = vmatprep.subr.bf16.mxu0 0
      %777 = vmatpush1.bf16.msra.mxu0 0
      %778 = vmatprep.subr.bf16.mxu0 0
      %779 = vmatpush1.bf16.msra.mxu0 0
      %780 = vmatprep.subr.bf16.mxu0 0
      %781 = vmatpush1.bf16.msra.mxu0 0
      %782 = vmatprep.subr.bf16.mxu0 0
      %783 = vmatpush1.bf16.msra.mxu0 0
      %784 = vmatprep.subr.bf16.mxu0 0
      %785 = vmatpush1.bf16.msra.mxu0 0
      %786 = vmatprep.subr.bf16.mxu0 0
      %787 = vmatpush1.bf16.msra.mxu0 0
      %788 = vmatprep.mubr.bf16.mxu0 0
      %789 = vmatmul.mubr.bf16.gmra.mrb[0].mxu0 %v700
      %v790 = vpop.f32.mrb[0].mxu0
      %v791 = vadd.f32 0.0, %v790
      %v792 = vpop.f32.mrb[0].mxu0
      %v793 = vpop.f32.mrb[0].mxu0
      %v794 = vadd.f32 0.0, %v793
      %v795 = vpop.f32.mrb[0].mxu0
      %796 = vmatprep.mubr.bf16.mxu0 0
      %797 = vmatmul.mubr.bf16.gmra.mrb[0].mxu0 %v701
      %v798 = vpop.f32.mrb[0].mxu0
      %v799 = vadd.f32 0.0, %v798
      %v800 = vpop.f32.mrb[0].mxu0
      %v801 = vpop.f32.mrb[0].mxu0
      %v802 = vadd.f32 0.0, %v801
      %v803 = vpop.f32.mrb[0].mxu0
      %804 = vmatprep.mubr.bf16.mxu0 0
      %805 = vmatmul.mubr.bf16.gmra.mrb[0].mxu0 %v702
      %v806 = vpop.f32.mrb[0].mxu0
      %v807 = vadd.f32 0.0, %v806
      %v808 = vpop.f32.mrb[0].mxu0
      %v809 = vpop.f32.mrb[0].mxu0
      %v810 = vadd.f32 0.0, %v809
      %v811 = vpop.f32.mrb[0].mxu0
      %812 = vmatprep.mubr.bf16.mxu0 0
      %813 = vmatmul.mubr.bf16.gmra.mrb[0].mxu0 %v703
      %v814 = vpop.f32.mrb[0].mxu0
      %v815 = vadd.f32 0.0, %v814
      %v816 = vpop.f32.mrb[0].mxu0
      %v817 = vpop.f32.mrb[0].mxu0
      %v818 = vadd.f32 0.0, %v817
      %v819 = vpop.f32.mrb[0].mxu0
      %820 = vdwg.mxu0
      %v821 = vadd.f32 %v602, %v791
      %v822 = vadd.f32 %v605, %v794
      %v823 = vadd.f32 %v610, %v799
      %v824 = vadd.f32 %v613, %v802
      %v825 = vadd.f32 %v618, %v807
      %v826 = vadd.f32 %v621, %v810
      %v827 = vadd.f32 %v626, %v815
      %v828 = vadd.f32 %v629, %v818
      %s829 = sadd.s32 %s218, 1
      %s830 = smul.u32 %s829, 3
      %s831 = smul.addr %s830, 4
      %s832 = scalar_lea.vmem %s197, %s831
      %v833 = vld [vmem:[%s832] sm:$0xf]
      %v834 = vld [vmem:[%s832 + $0x4] sm:$0xf]
      %v835 = vld [vmem:[%s832 + $0xc] sm:$0xf]
      %v836 = vld [vmem:[%s832 + $0x10] sm:$0xf]
      %v837 = vld [vmem:[%s832 + $0x18] sm:$0xf]
      %v838 = vld [vmem:[%s832 + $0x1c] sm:$0xf]
      %v839 = vld [vmem:[%s832 + $0x24] sm:$0xf]
      %v840 = vld [vmem:[%s832 + $0x28] sm:$0xf]
      %s841 = scalar_lea.vmem %s1, 192
      %v842 = vld [vmem:[%s841] sm:$0xf]
      %v843 = vld [vmem:[%s841 + $0x4] sm:$0xf]
      %v844 = vld [vmem:[%s841 + $0x8] sm:$0xf]
      %v845 = vld [vmem:[%s841 + $0xc] sm:$0xf]
      %v846 = vld [vmem:[%s841 + $0x10] sm:$0xf]
      %v847 = vld [vmem:[%s841 + $0x14] sm:$0xf]
      %v848 = vld [vmem:[%s841 + $0x18] sm:$0xf]
      %v849 = vld [vmem:[%s841 + $0x1c] sm:$0xf]
      %v850 = vld [vmem:[%s841 + $0x20] sm:$0xf]
      %v851 = vld [vmem:[%s841 + $0x24] sm:$0xf]
      %v852 = vld [vmem:[%s841 + $0x28] sm:$0xf]
      %v853 = vld [vmem:[%s841 + $0x2c] sm:$0xf]
      %v854 = vld [vmem:[%s841 + $0x30] sm:$0xf]
      %v855 = vld [vmem:[%s841 + $0x34] sm:$0xf]
      %v856 = vld [vmem:[%s841 + $0x38] sm:$0xf]
      %v857 = vld [vmem:[%s841 + $0x3c] sm:$0xf]
      %v866 = vunpack.c.l.b16 %v833
      %v867 = vunpack.c.l.b16 %v834
      %v868 = vunpack.c.l.b16 %v835
      %v869 = vunpack.c.l.b16 %v836
      %v870 = vunpack.c.l.b16 %v837
      %v871 = vunpack.c.l.b16 %v838
      %v872 = vunpack.c.l.b16 %v839
      %v873 = vunpack.c.l.b16 %v840
      %v874 = vpack.c.b16 %v867, %v866
      %v875 = vpack.c.b16 %v869, %v868
      %v876 = vpack.c.b16 %v871, %v870
      %v877 = vpack.c.b16 %v873, %v872
      %v898 = vunpack.c.l.b16 %v842
      %v899 = vunpack.c.l.b16 %v843
      %v900 = vunpack.c.l.b16 %v844
      %v901 = vunpack.c.l.b16 %v845
      %v902 = vunpack.c.l.b16 %v846
      %v903 = vunpack.c.l.b16 %v847
      %v904 = vunpack.c.l.b16 %v848
      %v905 = vunpack.c.l.b16 %v849
      %v906 = vunpack.c.l.b16 %v850
      %v907 = vunpack.c.l.b16 %v851
      %v908 = vunpack.c.l.b16 %v852
      %v909 = vunpack.c.l.b16 %v853
      %v910 = vunpack.c.l.b16 %v854
      %v911 = vunpack.c.l.b16 %v855
      %v912 = vunpack.c.l.b16 %v856
      %v913 = vunpack.c.l.b16 %v857
      %v914 = vpack.c.b16 %v899, %v898
      %v915 = vpack.c.b16 %v901, %v900
      %v916 = vpack.c.b16 %v903, %v902
      %v917 = vpack.c.b16 %v905, %v904
      %v918 = vpack.c.b16 %v907, %v906
      %v919 = vpack.c.b16 %v909, %v908
      %v920 = vpack.c.b16 %v911, %v910
      %v921 = vpack.c.b16 %v913, %v912
      %930 = vmatprep.subr.bf16.mxu0 0
      %931 = vmatpush1.bf16.msra.mxu0 %v914
      %932 = vmatprep.subr.bf16.mxu0 0
      %933 = vmatpush1.bf16.msra.mxu0 %v915
      %934 = vmatprep.subr.bf16.mxu0 0
      %935 = vmatpush1.bf16.msra.mxu0 %v916
      %936 = vmatprep.subr.bf16.mxu0 0
      %937 = vmatpush1.bf16.msra.mxu0 %v917
      %938 = vmatprep.subr.bf16.mxu0 0
      %939 = vmatpush1.bf16.msra.mxu0 %v918
      %940 = vmatprep.subr.bf16.mxu0 0
      %941 = vmatpush1.bf16.msra.mxu0 %v919
      %942 = vmatprep.subr.bf16.mxu0 0
      %943 = vmatpush1.bf16.msra.mxu0 %v920
      %944 = vmatprep.subr.bf16.mxu0 0
      %945 = vmatpush1.bf16.msra.mxu0 %v921
      %946 = vmatprep.subr.bf16.mxu0 0
      %947 = vmatpush1.bf16.msra.mxu0 0
      %948 = vmatprep.subr.bf16.mxu0 0
      %949 = vmatpush1.bf16.msra.mxu0 0
      %950 = vmatprep.subr.bf16.mxu0 0
      %951 = vmatpush1.bf16.msra.mxu0 0
      %952 = vmatprep.subr.bf16.mxu0 0
      %953 = vmatpush1.bf16.msra.mxu0 0
      %954 = vmatprep.subr.bf16.mxu0 0
      %955 = vmatpush1.bf16.msra.mxu0 0
      %956 = vmatprep.subr.bf16.mxu0 0
      %957 = vmatpush1.bf16.msra.mxu0 0
      %958 = vmatprep.subr.bf16.mxu0 0
      %959 = vmatpush1.bf16.msra.mxu0 0
      %960 = vmatprep.subr.bf16.mxu0 0
      %961 = vmatpush1.bf16.msra.mxu0 0
      %962 = vmatprep.mubr.bf16.mxu0 0
      %963 = vmatmul.mubr.bf16.gmra.mrb[0].mxu0 %v874
      %v964 = vpop.f32.mrb[0].mxu0
      %v965 = vadd.f32 0.0, %v964
      %v966 = vpop.f32.mrb[0].mxu0
      %v967 = vpop.f32.mrb[0].mxu0
      %v968 = vadd.f32 0.0, %v967
      %v969 = vpop.f32.mrb[0].mxu0
      %970 = vmatprep.mubr.bf16.mxu0 0
      %971 = vmatmul.mubr.bf16.gmra.mrb[0].mxu0 %v875
      %v972 = vpop.f32.mrb[0].mxu0
      %v973 = vadd.f32 0.0, %v972
      %v974 = vpop.f32.mrb[0].mxu0
      %v975 = vpop.f32.mrb[0].mxu0
      %v976 = vadd.f32 0.0, %v975
      %v977 = vpop.f32.mrb[0].mxu0
      %978 = vmatprep.mubr.bf16.mxu0 0
      %979 = vmatmul.mubr.bf16.gmra.mrb[0].mxu0 %v876
      %v980 = vpop.f32.mrb[0].mxu0
      %v981 = vadd.f32 0.0, %v980
      %v982 = vpop.f32.mrb[0].mxu0
      %v983 = vpop.f32.mrb[0].mxu0
      %v984 = vadd.f32 0.0, %v983
      %v985 = vpop.f32.mrb[0].mxu0
      %986 = vmatprep.mubr.bf16.mxu0 0
      %987 = vmatmul.mubr.bf16.gmra.mrb[0].mxu0 %v877
      %v988 = vpop.f32.mrb[0].mxu0
      %v989 = vadd.f32 0.0, %v988
      %v990 = vpop.f32.mrb[0].mxu0
      %v991 = vpop.f32.mrb[0].mxu0
      %v992 = vadd.f32 0.0, %v991
      %v993 = vpop.f32.mrb[0].mxu0
      %994 = vdwg.mxu0
      %v995 = vadd.f32 %v821, %v965
      %v996 = vadd.f32 %v822, %v968
      %v997 = vadd.f32 %v823, %v973
      %v998 = vadd.f32 %v824, %v976
      %v999 = vadd.f32 %v825, %v981
      %v1000 = vadd.f32 %v826, %v984
      %v1001 = vadd.f32 %v827, %v989
      %v1002 = vadd.f32 %v828, %v992
      %v1003 = vld [vmem:[%s832] sm:$0xf]
      %v1004 = vld [vmem:[%s832 + $0x4] sm:$0xf]
      %v1005 = vld [vmem:[%s832 + $0x8] sm:$0x1]
      %v1006 = vld [vmem:[%s832 + $0xc] sm:$0xf]
      %v1007 = vld [vmem:[%s832 + $0x10] sm:$0xf]
      %v1008 = vld [vmem:[%s832 + $0x14] sm:$0x1]
      %v1009 = vld [vmem:[%s832 + $0x18] sm:$0xf]
      %v1010 = vld [vmem:[%s832 + $0x1c] sm:$0xf]
      %v1011 = vld [vmem:[%s832 + $0x20] sm:$0x1]
      %v1012 = vld [vmem:[%s832 + $0x24] sm:$0xf]
      %v1013 = vld [vmem:[%s832 + $0x28] sm:$0xf]
      %v1014 = vld [vmem:[%s832 + $0x2c] sm:$0x1]
      %v1016 = vshrl.u32 %v1003, 16
      %v1018 = vrot.slane %v1016, 4
      %v1019 = vshll.u32 %v1003, 16
      %v1021 = vrot.slane %v1019, 5
      %v1022 = vor.u32 %v1018, %v1021
      %v1023 = vrot.slane %v1022, 4
      %v1025 = vshll.u32 %v1004, 16
      %v1027 = vrot.slane %v1025, 5
      %v1028 = vsel %vm252, %v1023, %v1027
      %v1029 = vshrl.u32 %v1004, 16
      %v1031 = vrot.slane %v1029, 4
      %v1032 = vor.u32 %v1031, %v1027
      %v1033 = vrot.slane %v1032, 4
      %v1035 = vshll.u32 %v1005, 16
      %v1037 = vrot.slane %v1035, 5
      %v1038 = vsel %vm252, %v1033, %v1037
      %v1040 = vshrl.u32 %v1006, 16
      %v1042 = vrot.slane %v1040, 4
      %v1043 = vshll.u32 %v1006, 16
      %v1045 = vrot.slane %v1043, 5
      %v1046 = vor.u32 %v1042, %v1045
      %v1047 = vrot.slane %v1046, 4
      %v1049 = vshll.u32 %v1007, 16
      %v1051 = vrot.slane %v1049, 5
      %v1052 = vsel %vm252, %v1047, %v1051
      %v1053 = vshrl.u32 %v1007, 16
      %v1055 = vrot.slane %v1053, 4
      %v1056 = vor.u32 %v1055, %v1051
      %v1057 = vrot.slane %v1056, 4
      %v1059 = vshll.u32 %v1008, 16
      %v1061 = vrot.slane %v1059, 5
      %v1062 = vsel %vm252, %v1057, %v1061
      %v1064 = vshrl.u32 %v1009, 16
      %v1066 = vrot.slane %v1064, 4
      %v1067 = vshll.u32 %v1009, 16
      %v1069 = vrot.slane %v1067, 5
      %v1070 = vor.u32 %v1066, %v1069
      %v1071 = vrot.slane %v1070, 4
      %v1073 = vshll.u32 %v1010, 16
      %v1075 = vrot.slane %v1073, 5
      %v1076 = vsel %vm252, %v1071, %v1075
      %v1077 = vshrl.u32 %v1010, 16
      %v1079 = vrot.slane %v1077, 4
      %v1080 = vor.u32 %v1079, %v1075
      %v1081 = vrot.slane %v1080, 4
      %v1083 = vshll.u32 %v1011, 16
      %v1085 = vrot.slane %v1083, 5
      %v1086 = vsel %vm252, %v1081, %v1085
      %v1088 = vshrl.u32 %v1012, 16
      %v1090 = vrot.slane %v1088, 4
      %v1091 = vshll.u32 %v1012, 16
      %v1093 = vrot.slane %v1091, 5
      %v1094 = vor.u32 %v1090, %v1093
      %v1095 = vrot.slane %v1094, 4
      %v1097 = vshll.u32 %v1013, 16
      %v1099 = vrot.slane %v1097, 5
      %v1100 = vsel %vm252, %v1095, %v1099
      %v1101 = vshrl.u32 %v1013, 16
      %v1103 = vrot.slane %v1101, 4
      %v1104 = vor.u32 %v1103, %v1099
      %v1105 = vrot.slane %v1104, 4
      %v1107 = vshll.u32 %v1014, 16
      %v1109 = vrot.slane %v1107, 5
      %v1110 = vsel %vm252, %v1105, %v1109
      %s1111 = scalar_lea.vmem %s1, 256
      %v1112 = vld [vmem:[%s1111] sm:$0xf]
      %v1113 = vld [vmem:[%s1111 + $0x4] sm:$0xf]
      %v1114 = vld [vmem:[%s1111 + $0x8] sm:$0xf]
      %v1115 = vld [vmem:[%s1111 + $0xc] sm:$0xf]
      %v1116 = vld [vmem:[%s1111 + $0x10] sm:$0xf]
      %v1117 = vld [vmem:[%s1111 + $0x14] sm:$0xf]
      %v1118 = vld [vmem:[%s1111 + $0x18] sm:$0xf]
      %v1119 = vld [vmem:[%s1111 + $0x1c] sm:$0xf]
      %v1120 = vld [vmem:[%s1111 + $0x20] sm:$0xf]
      %v1121 = vld [vmem:[%s1111 + $0x24] sm:$0xf]
      %v1122 = vld [vmem:[%s1111 + $0x28] sm:$0xf]
      %v1123 = vld [vmem:[%s1111 + $0x2c] sm:$0xf]
      %v1124 = vld [vmem:[%s1111 + $0x30] sm:$0xf]
      %v1125 = vld [vmem:[%s1111 + $0x34] sm:$0xf]
      %v1126 = vld [vmem:[%s1111 + $0x38] sm:$0xf]
      %v1127 = vld [vmem:[%s1111 + $0x3c] sm:$0xf]
      %v1128 = vunpack.c.l.b16 %v1028
      %v1129 = vunpack.c.l.b16 %v1038
      %v1130 = vunpack.c.l.b16 %v1052
      %v1131 = vunpack.c.l.b16 %v1062
      %v1132 = vunpack.c.l.b16 %v1076
      %v1133 = vunpack.c.l.b16 %v1086
      %v1134 = vunpack.c.l.b16 %v1100
      %v1135 = vunpack.c.l.b16 %v1110
      %v1136 = vpack.c.b16 %v1129, %v1128
      %v1137 = vpack.c.b16 %v1131, %v1130
      %v1138 = vpack.c.b16 %v1133, %v1132
      %v1139 = vpack.c.b16 %v1135, %v1134
      %v1160 = vunpack.c.l.b16 %v1112
      %v1161 = vunpack.c.l.b16 %v1113
      %v1162 = vunpack.c.l.b16 %v1114
      %v1163 = vunpack.c.l.b16 %v1115
      %v1164 = vunpack.c.l.b16 %v1116
      %v1165 = vunpack.c.l.b16 %v1117
      %v1166 = vunpack.c.l.b16 %v1118
      %v1167 = vunpack.c.l.b16 %v1119
      %v1168 = vunpack.c.l.b16 %v1120
      %v1169 = vunpack.c.l.b16 %v1121
      %v1170 = vunpack.c.l.b16 %v1122
      %v1171 = vunpack.c.l.b16 %v1123
      %v1172 = vunpack.c.l.b16 %v1124
      %v1173 = vunpack.c.l.b16 %v1125
      %v1174 = vunpack.c.l.b16 %v1126
      %v1175 = vunpack.c.l.b16 %v1127
      %v1176 = vpack.c.b16 %v1161, %v1160
      %v1177 = vpack.c.b16 %v1163, %v1162
      %v1178 = vpack.c.b16 %v1165, %v1164
      %v1179 = vpack.c.b16 %v1167, %v1166
      %v1180 = vpack.c.b16 %v1169, %v1168
      %v1181 = vpack.c.b16 %v1171, %v1170
      %v1182 = vpack.c.b16 %v1173, %v1172
      %v1183 = vpack.c.b16 %v1175, %v1174
      %1192 = vmatprep.subr.bf16.mxu0 0
      %1193 = vmatpush1.bf16.msra.mxu0 %v1176
      %1194 = vmatprep.subr.bf16.mxu0 0
      %1195 = vmatpush1.bf16.msra.mxu0 %v1177
      %1196 = vmatprep.subr.bf16.mxu0 0
      %1197 = vmatpush1.bf16.msra.mxu0 %v1178
      %1198 = vmatprep.subr.bf16.mxu0 0
      %1199 = vmatpush1.bf16.msra.mxu0 %v1179
      %1200 = vmatprep.subr.bf16.mxu0 0
      %1201 = vmatpush1.bf16.msra.mxu0 %v1180
      %1202 = vmatprep.subr.bf16.mxu0 0
      %1203 = vmatpush1.bf16.msra.mxu0 %v1181
      %1204 = vmatprep.subr.bf16.mxu0 0
      %1205 = vmatpush1.bf16.msra.mxu0 %v1182
      %1206 = vmatprep.subr.bf16.mxu0 0
      %1207 = vmatpush1.bf16.msra.mxu0 %v1183
      %1208 = vmatprep.subr.bf16.mxu0 0
      %1209 = vmatpush1.bf16.msra.mxu0 0
      %1210 = vmatprep.subr.bf16.mxu0 0
      %1211 = vmatpush1.bf16.msra.mxu0 0
      %1212 = vmatprep.subr.bf16.mxu0 0
      %1213 = vmatpush1.bf16.msra.mxu0 0
      %1214 = vmatprep.subr.bf16.mxu0 0
      %1215 = vmatpush1.bf16.msra.mxu0 0
      %1216 = vmatprep.subr.bf16.mxu0 0
      %1217 = vmatpush1.bf16.msra.mxu0 0
      %1218 = vmatprep.subr.bf16.mxu0 0
      %1219 = vmatpush1.bf16.msra.mxu0 0
      %1220 = vmatprep.subr.bf16.mxu0 0
      %1221 = vmatpush1.bf16.msra.mxu0 0
      %1222 = vmatprep.subr.bf16.mxu0 0
      %1223 = vmatpush1.bf16.msra.mxu0 0
      %1224 = vmatprep.mubr.bf16.mxu0 0
      %1225 = vmatmul.mubr.bf16.gmra.mrb[0].mxu0 %v1136
      %v1226 = vpop.f32.mrb[0].mxu0
      %v1227 = vadd.f32 0.0, %v1226
      %v1228 = vpop.f32.mrb[0].mxu0
      %v1229 = vpop.f32.mrb[0].mxu0
      %v1230 = vadd.f32 0.0, %v1229
      %v1231 = vpop.f32.mrb[0].mxu0
      %1232 = vmatprep.mubr.bf16.mxu0 0
      %1233 = vmatmul.mubr.bf16.gmra.mrb[0].mxu0 %v1137
      %v1234 = vpop.f32.mrb[0].mxu0
      %v1235 = vadd.f32 0.0, %v1234
      %v1236 = vpop.f32.mrb[0].mxu0
      %v1237 = vpop.f32.mrb[0].mxu0
      %v1238 = vadd.f32 0.0, %v1237
      %v1239 = vpop.f32.mrb[0].mxu0
      %1240 = vmatprep.mubr.bf16.mxu0 0
      %1241 = vmatmul.mubr.bf16.gmra.mrb[0].mxu0 %v1138
      %v1242 = vpop.f32.mrb[0].mxu0
      %v1243 = vadd.f32 0.0, %v1242
      %v1244 = vpop.f32.mrb[0].mxu0
      %v1245 = vpop.f32.mrb[0].mxu0
      %v1246 = vadd.f32 0.0, %v1245
      %v1247 = vpop.f32.mrb[0].mxu0
      %1248 = vmatprep.mubr.bf16.mxu0 0
      %1249 = vmatmul.mubr.bf16.gmra.mrb[0].mxu0 %v1139
      %v1250 = vpop.f32.mrb[0].mxu0
      %v1251 = vadd.f32 0.0, %v1250
      %v1252 = vpop.f32.mrb[0].mxu0
      %v1253 = vpop.f32.mrb[0].mxu0
      %v1254 = vadd.f32 0.0, %v1253
      %v1255 = vpop.f32.mrb[0].mxu0
      %1256 = vdwg.mxu0
      %v1257 = vadd.f32 %v995, %v1227
      %v1258 = vadd.f32 %v996, %v1230
      %v1259 = vadd.f32 %v997, %v1235
      %v1260 = vadd.f32 %v998, %v1238
      %v1261 = vadd.f32 %v999, %v1243
      %v1262 = vadd.f32 %v1000, %v1246
      %v1263 = vadd.f32 %v1001, %v1251
      %v1264 = vadd.f32 %v1002, %v1254
      %v1265 = vld [vmem:[%s832] sm:$0xe]
      %v1266 = vld [vmem:[%s832 + $0xc] sm:$0xe]
      %v1267 = vld [vmem:[%s832 + $0x18] sm:$0xe]
      %v1268 = vld [vmem:[%s832 + $0x24] sm:$0xe]
      %v1281 = vrot.slane %v1265, 5
      %v1282 = vrot.slane %v1281, 4
      %v1283 = vrot.slane %v1004, 5
      %v1284 = vsel %vm646, %v1282, %v1283
      %v1285 = vrot.slane %v1283, 4
      %v1286 = vrot.slane %v1005, 5
      %v1287 = vsel %vm646, %v1285, %v1286
      %v1288 = vrot.slane %v1266, 5
      %v1289 = vrot.slane %v1288, 4
      %v1290 = vrot.slane %v1007, 5
      %v1291 = vsel %vm646, %v1289, %v1290
      %v1292 = vrot.slane %v1290, 4
      %v1293 = vrot.slane %v1008, 5
      %v1294 = vsel %vm646, %v1292, %v1293
      %v1295 = vrot.slane %v1267, 5
      %v1296 = vrot.slane %v1295, 4
      %v1297 = vrot.slane %v1010, 5
      %v1298 = vsel %vm646, %v1296, %v1297
      %v1299 = vrot.slane %v1297, 4
      %v1300 = vrot.slane %v1011, 5
      %v1301 = vsel %vm646, %v1299, %v1300
      %v1302 = vrot.slane %v1268, 5
      %v1303 = vrot.slane %v1302, 4
      %v1304 = vrot.slane %v1013, 5
      %v1305 = vsel %vm646, %v1303, %v1304
      %v1306 = vrot.slane %v1304, 4
      %v1307 = vrot.slane %v1014, 5
      %v1308 = vsel %vm646, %v1306, %v1307
      %s1309 = scalar_lea.vmem %s1, 320
      %v1310 = vld [vmem:[%s1309] sm:$0xf]
      %v1311 = vld [vmem:[%s1309 + $0x4] sm:$0xf]
      %v1312 = vld [vmem:[%s1309 + $0x8] sm:$0xf]
      %v1313 = vld [vmem:[%s1309 + $0xc] sm:$0xf]
      %v1314 = vld [vmem:[%s1309 + $0x10] sm:$0xf]
      %v1315 = vld [vmem:[%s1309 + $0x14] sm:$0xf]
      %v1316 = vld [vmem:[%s1309 + $0x18] sm:$0xf]
      %v1317 = vld [vmem:[%s1309 + $0x1c] sm:$0xf]
      %v1318 = vld [vmem:[%s1309 + $0x20] sm:$0xf]
      %v1319 = vld [vmem:[%s1309 + $0x24] sm:$0xf]
      %v1320 = vld [vmem:[%s1309 + $0x28] sm:$0xf]
      %v1321 = vld [vmem:[%s1309 + $0x2c] sm:$0xf]
      %v1322 = vld [vmem:[%s1309 + $0x30] sm:$0xf]
      %v1323 = vld [vmem:[%s1309 + $0x34] sm:$0xf]
      %v1324 = vld [vmem:[%s1309 + $0x38] sm:$0xf]
      %v1325 = vld [vmem:[%s1309 + $0x3c] sm:$0xf]
      %v1326 = vunpack.c.l.b16 %v1284
      %v1327 = vunpack.c.l.b16 %v1287
      %v1328 = vunpack.c.l.b16 %v1291
      %v1329 = vunpack.c.l.b16 %v1294
      %v1330 = vunpack.c.l.b16 %v1298
      %v1331 = vunpack.c.l.b16 %v1301
      %v1332 = vunpack.c.l.b16 %v1305
      %v1333 = vunpack.c.l.b16 %v1308
      %v1334 = vpack.c.b16 %v1327, %v1326
      %v1335 = vpack.c.b16 %v1329, %v1328
      %v1336 = vpack.c.b16 %v1331, %v1330
      %v1337 = vpack.c.b16 %v1333, %v1332
      %v1358 = vunpack.c.l.b16 %v1310
      %v1359 = vunpack.c.l.b16 %v1311
      %v1360 = vunpack.c.l.b16 %v1312
      %v1361 = vunpack.c.l.b16 %v1313
      %v1362 = vunpack.c.l.b16 %v1314
      %v1363 = vunpack.c.l.b16 %v1315
      %v1364 = vunpack.c.l.b16 %v1316
      %v1365 = vunpack.c.l.b16 %v1317
      %v1366 = vunpack.c.l.b16 %v1318
      %v1367 = vunpack.c.l.b16 %v1319
      %v1368 = vunpack.c.l.b16 %v1320
      %v1369 = vunpack.c.l.b16 %v1321
      %v1370 = vunpack.c.l.b16 %v1322
      %v1371 = vunpack.c.l.b16 %v1323
      %v1372 = vunpack.c.l.b16 %v1324
      %v1373 = vunpack.c.l.b16 %v1325
      %v1374 = vpack.c.b16 %v1359, %v1358
      %v1375 = vpack.c.b16 %v1361, %v1360
      %v1376 = vpack.c.b16 %v1363, %v1362
      %v1377 = vpack.c.b16 %v1365, %v1364
      %v1378 = vpack.c.b16 %v1367, %v1366
      %v1379 = vpack.c.b16 %v1369, %v1368
      %v1380 = vpack.c.b16 %v1371, %v1370
      %v1381 = vpack.c.b16 %v1373, %v1372
      %1390 = vmatprep.subr.bf16.mxu0 0
      %1391 = vmatpush1.bf16.msra.mxu0 %v1374
      %1392 = vmatprep.subr.bf16.mxu0 0
      %1393 = vmatpush1.bf16.msra.mxu0 %v1375
      %1394 = vmatprep.subr.bf16.mxu0 0
      %1395 = vmatpush1.bf16.msra.mxu0 %v1376
      %1396 = vmatprep.subr.bf16.mxu0 0
      %1397 = vmatpush1.bf16.msra.mxu0 %v1377
      %1398 = vmatprep.subr.bf16.mxu0 0
      %1399 = vmatpush1.bf16.msra.mxu0 %v1378
      %1400 = vmatprep.subr.bf16.mxu0 0
      %1401 = vmatpush1.bf16.msra.mxu0 %v1379
      %1402 = vmatprep.subr.bf16.mxu0 0
      %1403 = vmatpush1.bf16.msra.mxu0 %v1380
      %1404 = vmatprep.subr.bf16.mxu0 0
      %1405 = vmatpush1.bf16.msra.mxu0 %v1381
      %1406 = vmatprep.subr.bf16.mxu0 0
      %1407 = vmatpush1.bf16.msra.mxu0 0
      %1408 = vmatprep.subr.bf16.mxu0 0
      %1409 = vmatpush1.bf16.msra.mxu0 0
      %1410 = vmatprep.subr.bf16.mxu0 0
      %1411 = vmatpush1.bf16.msra.mxu0 0
      %1412 = vmatprep.subr.bf16.mxu0 0
      %1413 = vmatpush1.bf16.msra.mxu0 0
      %1414 = vmatprep.subr.bf16.mxu0 0
      %1415 = vmatpush1.bf16.msra.mxu0 0
      %1416 = vmatprep.subr.bf16.mxu0 0
      %1417 = vmatpush1.bf16.msra.mxu0 0
      %1418 = vmatprep.subr.bf16.mxu0 0
      %1419 = vmatpush1.bf16.msra.mxu0 0
      %1420 = vmatprep.subr.bf16.mxu0 0
      %1421 = vmatpush1.bf16.msra.mxu0 0
      %1422 = vmatprep.mubr.bf16.mxu0 0
      %1423 = vmatmul.mubr.bf16.gmra.mrb[0].mxu0 %v1334
      %v1424 = vpop.f32.mrb[0].mxu0
      %v1425 = vadd.f32 0.0, %v1424
      %v1426 = vpop.f32.mrb[0].mxu0
      %v1427 = vpop.f32.mrb[0].mxu0
      %v1428 = vadd.f32 0.0, %v1427
      %v1429 = vpop.f32.mrb[0].mxu0
      %1430 = vmatprep.mubr.bf16.mxu0 0
      %1431 = vmatmul.mubr.bf16.gmra.mrb[0].mxu0 %v1335
      %v1432 = vpop.f32.mrb[0].mxu0
      %v1433 = vadd.f32 0.0, %v1432
      %v1434 = vpop.f32.mrb[0].mxu0
      %v1435 = vpop.f32.mrb[0].mxu0
      %v1436 = vadd.f32 0.0, %v1435
      %v1437 = vpop.f32.mrb[0].mxu0
      %1438 = vmatprep.mubr.bf16.mxu0 0
      %1439 = vmatmul.mubr.bf16.gmra.mrb[0].mxu0 %v1336
      %v1440 = vpop.f32.mrb[0].mxu0
      %v1441 = vadd.f32 0.0, %v1440
      %v1442 = vpop.f32.mrb[0].mxu0
      %v1443 = vpop.f32.mrb[0].mxu0
      %v1444 = vadd.f32 0.0, %v1443
      %v1445 = vpop.f32.mrb[0].mxu0
      %1446 = vmatprep.mubr.bf16.mxu0 0
      %1447 = vmatmul.mubr.bf16.gmra.mrb[0].mxu0 %v1337
      %v1448 = vpop.f32.mrb[0].mxu0
      %v1449 = vadd.f32 0.0, %v1448
      %v1450 = vpop.f32.mrb[0].mxu0
      %v1451 = vpop.f32.mrb[0].mxu0
      %v1452 = vadd.f32 0.0, %v1451
      %v1453 = vpop.f32.mrb[0].mxu0
      %1454 = vdwg.mxu0
      %v1455 = vadd.f32 %v1257, %v1425
      %v1456 = vadd.f32 %v1258, %v1428
      %v1457 = vadd.f32 %v1259, %v1433
      %v1458 = vadd.f32 %v1260, %v1436
      %v1459 = vadd.f32 %v1261, %v1441
      %v1460 = vadd.f32 %v1262, %v1444
      %v1461 = vadd.f32 %v1263, %v1449
      %v1462 = vadd.f32 %v1264, %v1452
      %s1463 = sadd.s32 %s218, 2
      %s1464 = smul.u32 %s1463, 3
      %s1465 = smul.addr %s1464, 4
      %s1466 = scalar_lea.vmem %s197, %s1465
      %v1467 = vld [vmem:[%s1466] sm:$0xf]
      %v1468 = vld [vmem:[%s1466 + $0x4] sm:$0xf]
      %v1469 = vld [vmem:[%s1466 + $0xc] sm:$0xf]
      %v1470 = vld [vmem:[%s1466 + $0x10] sm:$0xf]
      %v1471 = vld [vmem:[%s1466 + $0x18] sm:$0xf]
      %v1472 = vld [vmem:[%s1466 + $0x1c] sm:$0xf]
      %v1473 = vld [vmem:[%s1466 + $0x24] sm:$0xf]
      %v1474 = vld [vmem:[%s1466 + $0x28] sm:$0xf]
      %s1475 = scalar_lea.vmem %s1, 384
      %v1476 = vld [vmem:[%s1475] sm:$0xf]
      %v1477 = vld [vmem:[%s1475 + $0x4] sm:$0xf]
      %v1478 = vld [vmem:[%s1475 + $0x8] sm:$0xf]
      %v1479 = vld [vmem:[%s1475 + $0xc] sm:$0xf]
      %v1480 = vld [vmem:[%s1475 + $0x10] sm:$0xf]
      %v1481 = vld [vmem:[%s1475 + $0x14] sm:$0xf]
      %v1482 = vld [vmem:[%s1475 + $0x18] sm:$0xf]
      %v1483 = vld [vmem:[%s1475 + $0x1c] sm:$0xf]
      %v1484 = vld [vmem:[%s1475 + $0x20] sm:$0xf]
      %v1485 = vld [vmem:[%s1475 + $0x24] sm:$0xf]
      %v1486 = vld [vmem:[%s1475 + $0x28] sm:$0xf]
      %v1487 = vld [vmem:[%s1475 + $0x2c] sm:$0xf]
      %v1488 = vld [vmem:[%s1475 + $0x30] sm:$0xf]
      %v1489 = vld [vmem:[%s1475 + $0x34] sm:$0xf]
      %v1490 = vld [vmem:[%s1475 + $0x38] sm:$0xf]
      %v1491 = vld [vmem:[%s1475 + $0x3c] sm:$0xf]
      %v1500 = vunpack.c.l.b16 %v1467
      %v1501 = vunpack.c.l.b16 %v1468
      %v1502 = vunpack.c.l.b16 %v1469
      %v1503 = vunpack.c.l.b16 %v1470
      %v1504 = vunpack.c.l.b16 %v1471
      %v1505 = vunpack.c.l.b16 %v1472
      %v1506 = vunpack.c.l.b16 %v1473
      %v1507 = vunpack.c.l.b16 %v1474
      %v1508 = vpack.c.b16 %v1501, %v1500
      %v1509 = vpack.c.b16 %v1503, %v1502
      %v1510 = vpack.c.b16 %v1505, %v1504
      %v1511 = vpack.c.b16 %v1507, %v1506
      %v1532 = vunpack.c.l.b16 %v1476
      %v1533 = vunpack.c.l.b16 %v1477
      %v1534 = vunpack.c.l.b16 %v1478
      %v1535 = vunpack.c.l.b16 %v1479
      %v1536 = vunpack.c.l.b16 %v1480
      %v1537 = vunpack.c.l.b16 %v1481
      %v1538 = vunpack.c.l.b16 %v1482
      %v1539 = vunpack.c.l.b16 %v1483
      %v1540 = vunpack.c.l.b16 %v1484
      %v1541 = vunpack.c.l.b16 %v1485
      %v1542 = vunpack.c.l.b16 %v1486
      %v1543 = vunpack.c.l.b16 %v1487
      %v1544 = vunpack.c.l.b16 %v1488
      %v1545 = vunpack.c.l.b16 %v1489
      %v1546 = vunpack.c.l.b16 %v1490
      %v1547 = vunpack.c.l.b16 %v1491
      %v1548 = vpack.c.b16 %v1533, %v1532
      %v1549 = vpack.c.b16 %v1535, %v1534
      %v1550 = vpack.c.b16 %v1537, %v1536
      %v1551 = vpack.c.b16 %v1539, %v1538
      %v1552 = vpack.c.b16 %v1541, %v1540
      %v1553 = vpack.c.b16 %v1543, %v1542
      %v1554 = vpack.c.b16 %v1545, %v1544
      %v1555 = vpack.c.b16 %v1547, %v1546
      %1564 = vmatprep.subr.bf16.mxu0 0
      %1565 = vmatpush1.bf16.msra.mxu0 %v1548
      %1566 = vmatprep.subr.bf16.mxu0 0
      %1567 = vmatpush1.bf16.msra.mxu0 %v1549
      %1568 = vmatprep.subr.bf16.mxu0 0
      %1569 = vmatpush1.bf16.msra.mxu0 %v1550
      %1570 = vmatprep.subr.bf16.mxu0 0
      %1571 = vmatpush1.bf16.msra.mxu0 %v1551
      %1572 = vmatprep.subr.bf16.mxu0 0
      %1573 = vmatpush1.bf16.msra.mxu0 %v1552
      %1574 = vmatprep.subr.bf16.mxu0 0
      %1575 = vmatpush1.bf16.msra.mxu0 %v1553
      %1576 = vmatprep.subr.bf16.mxu0 0
      %1577 = vmatpush1.bf16.msra.mxu0 %v1554
      %1578 = vmatprep.subr.bf16.mxu0 0
      %1579 = vmatpush1.bf16.msra.mxu0 %v1555
      %1580 = vmatprep.subr.bf16.mxu0 0
      %1581 = vmatpush1.bf16.msra.mxu0 0
      %1582 = vmatprep.subr.bf16.mxu0 0
      %1583 = vmatpush1.bf16.msra.mxu0 0
      %1584 = vmatprep.subr.bf16.mxu0 0
      %1585 = vmatpush1.bf16.msra.mxu0 0
      %1586 = vmatprep.subr.bf16.mxu0 0
      %1587 = vmatpush1.bf16.msra.mxu0 0
      %1588 = vmatprep.subr.bf16.mxu0 0
      %1589 = vmatpush1.bf16.msra.mxu0 0
      %1590 = vmatprep.subr.bf16.mxu0 0
      %1591 = vmatpush1.bf16.msra.mxu0 0
      %1592 = vmatprep.subr.bf16.mxu0 0
      %1593 = vmatpush1.bf16.msra.mxu0 0
      %1594 = vmatprep.subr.bf16.mxu0 0
      %1595 = vmatpush1.bf16.msra.mxu0 0
      %1596 = vmatprep.mubr.bf16.mxu0 0
      %1597 = vmatmul.mubr.bf16.gmra.mrb[0].mxu0 %v1508
      %v1598 = vpop.f32.mrb[0].mxu0
      %v1599 = vadd.f32 0.0, %v1598
      %v1600 = vpop.f32.mrb[0].mxu0
      %v1601 = vpop.f32.mrb[0].mxu0
      %v1602 = vadd.f32 0.0, %v1601
      %v1603 = vpop.f32.mrb[0].mxu0
      %1604 = vmatprep.mubr.bf16.mxu0 0
      %1605 = vmatmul.mubr.bf16.gmra.mrb[0].mxu0 %v1509
      %v1606 = vpop.f32.mrb[0].mxu0
      %v1607 = vadd.f32 0.0, %v1606
      %v1608 = vpop.f32.mrb[0].mxu0
      %v1609 = vpop.f32.mrb[0].mxu0
      %v1610 = vadd.f32 0.0, %v1609
      %v1611 = vpop.f32.mrb[0].mxu0
      %1612 = vmatprep.mubr.bf16.mxu0 0
      %1613 = vmatmul.mubr.bf16.gmra.mrb[0].mxu0 %v1510
      %v1614 = vpop.f32.mrb[0].mxu0
      %v1615 = vadd.f32 0.0, %v1614
      %v1616 = vpop.f32.mrb[0].mxu0
      %v1617 = vpop.f32.mrb[0].mxu0
      %v1618 = vadd.f32 0.0, %v1617
      %v1619 = vpop.f32.mrb[0].mxu0
      %1620 = vmatprep.mubr.bf16.mxu0 0
      %1621 = vmatmul.mubr.bf16.gmra.mrb[0].mxu0 %v1511
      %v1622 = vpop.f32.mrb[0].mxu0
      %v1623 = vadd.f32 0.0, %v1622
      %v1624 = vpop.f32.mrb[0].mxu0
      %v1625 = vpop.f32.mrb[0].mxu0
      %v1626 = vadd.f32 0.0, %v1625
      %v1627 = vpop.f32.mrb[0].mxu0
      %1628 = vdwg.mxu0
      %v1629 = vadd.f32 %v1455, %v1599
      %v1630 = vadd.f32 %v1456, %v1602
      %v1631 = vadd.f32 %v1457, %v1607
      %v1632 = vadd.f32 %v1458, %v1610
      %v1633 = vadd.f32 %v1459, %v1615
      %v1634 = vadd.f32 %v1460, %v1618
      %v1635 = vadd.f32 %v1461, %v1623
      %v1636 = vadd.f32 %v1462, %v1626
      %v1637 = vld [vmem:[%s1466] sm:$0xf]
      %v1638 = vld [vmem:[%s1466 + $0x4] sm:$0xf]
      %v1639 = vld [vmem:[%s1466 + $0x8] sm:$0x1]
      %v1640 = vld [vmem:[%s1466 + $0xc] sm:$0xf]
      %v1641 = vld [vmem:[%s1466 + $0x10] sm:$0xf]
      %v1642 = vld [vmem:[%s1466 + $0x14] sm:$0x1]
      %v1643 = vld [vmem:[%s1466 + $0x18] sm:$0xf]
      %v1644 = vld [vmem:[%s1466 + $0x1c] sm:$0xf]
      %v1645 = vld [vmem:[%s1466 + $0x20] sm:$0x1]
      %v1646 = vld [vmem:[%s1466 + $0x24] sm:$0xf]
      %v1647 = vld [vmem:[%s1466 + $0x28] sm:$0xf]
      %v1648 = vld [vmem:[%s1466 + $0x2c] sm:$0x1]
      %v1650 = vshrl.u32 %v1637, 16
      %v1652 = vrot.slane %v1650, 4
      %v1653 = vshll.u32 %v1637, 16
      %v1655 = vrot.slane %v1653, 5
      %v1656 = vor.u32 %v1652, %v1655
      %v1657 = vrot.slane %v1656, 4
      %v1659 = vshll.u32 %v1638, 16
      %v1661 = vrot.slane %v1659, 5
      %v1662 = vsel %vm252, %v1657, %v1661
      %v1663 = vshrl.u32 %v1638, 16
      %v1665 = vrot.slane %v1663, 4
      %v1666 = vor.u32 %v1665, %v1661
      %v1667 = vrot.slane %v1666, 4
      %v1669 = vshll.u32 %v1639, 16
      %v1671 = vrot.slane %v1669, 5
      %v1672 = vsel %vm252, %v1667, %v1671
      %v1674 = vshrl.u32 %v1640, 16
      %v1676 = vrot.slane %v1674, 4
      %v1677 = vshll.u32 %v1640, 16
      %v1679 = vrot.slane %v1677, 5
      %v1680 = vor.u32 %v1676, %v1679
      %v1681 = vrot.slane %v1680, 4
      %v1683 = vshll.u32 %v1641, 16
      %v1685 = vrot.slane %v1683, 5
      %v1686 = vsel %vm252, %v1681, %v1685
      %v1687 = vshrl.u32 %v1641, 16
      %v1689 = vrot.slane %v1687, 4
      %v1690 = vor.u32 %v1689, %v1685
      %v1691 = vrot.slane %v1690, 4
      %v1693 = vshll.u32 %v1642, 16
      %v1695 = vrot.slane %v1693, 5
      %v1696 = vsel %vm252, %v1691, %v1695
      %v1698 = vshrl.u32 %v1643, 16
      %v1700 = vrot.slane %v1698, 4
      %v1701 = vshll.u32 %v1643, 16
      %v1703 = vrot.slane %v1701, 5
      %v1704 = vor.u32 %v1700, %v1703
      %v1705 = vrot.slane %v1704, 4
      %v1707 = vshll.u32 %v1644, 16
      %v1709 = vrot.slane %v1707, 5
      %v1710 = vsel %vm252, %v1705, %v1709
      %v1711 = vshrl.u32 %v1644, 16
      %v1713 = vrot.slane %v1711, 4
      %v1714 = vor.u32 %v1713, %v1709
      %v1715 = vrot.slane %v1714, 4
      %v1717 = vshll.u32 %v1645, 16
      %v1719 = vrot.slane %v1717, 5
      %v1720 = vsel %vm252, %v1715, %v1719
      %v1722 = vshrl.u32 %v1646, 16
      %v1724 = vrot.slane %v1722, 4
      %v1725 = vshll.u32 %v1646, 16
      %v1727 = vrot.slane %v1725, 5
      %v1728 = vor.u32 %v1724, %v1727
      %v1729 = vrot.slane %v1728, 4
      %v1731 = vshll.u32 %v1647, 16
      %v1733 = vrot.slane %v1731, 5
      %v1734 = vsel %vm252, %v1729, %v1733
      %v1735 = vshrl.u32 %v1647, 16
      %v1737 = vrot.slane %v1735, 4
      %v1738 = vor.u32 %v1737, %v1733
      %v1739 = vrot.slane %v1738, 4
      %v1741 = vshll.u32 %v1648, 16
      %v1743 = vrot.slane %v1741, 5
      %v1744 = vsel %vm252, %v1739, %v1743
      %s1745 = scalar_lea.vmem %s1, 448
      %v1746 = vld [vmem:[%s1745] sm:$0xf]
      %v1747 = vld [vmem:[%s1745 + $0x4] sm:$0xf]
      %v1748 = vld [vmem:[%s1745 + $0x8] sm:$0xf]
      %v1749 = vld [vmem:[%s1745 + $0xc] sm:$0xf]
      %v1750 = vld [vmem:[%s1745 + $0x10] sm:$0xf]
      %v1751 = vld [vmem:[%s1745 + $0x14] sm:$0xf]
      %v1752 = vld [vmem:[%s1745 + $0x18] sm:$0xf]
      %v1753 = vld [vmem:[%s1745 + $0x1c] sm:$0xf]
      %v1754 = vld [vmem:[%s1745 + $0x20] sm:$0xf]
      %v1755 = vld [vmem:[%s1745 + $0x24] sm:$0xf]
      %v1756 = vld [vmem:[%s1745 + $0x28] sm:$0xf]
      %v1757 = vld [vmem:[%s1745 + $0x2c] sm:$0xf]
      %v1758 = vld [vmem:[%s1745 + $0x30] sm:$0xf]
      %v1759 = vld [vmem:[%s1745 + $0x34] sm:$0xf]
      %v1760 = vld [vmem:[%s1745 + $0x38] sm:$0xf]
      %v1761 = vld [vmem:[%s1745 + $0x3c] sm:$0xf]
      %v1762 = vunpack.c.l.b16 %v1662
      %v1763 = vunpack.c.l.b16 %v1672
      %v1764 = vunpack.c.l.b16 %v1686
      %v1765 = vunpack.c.l.b16 %v1696
      %v1766 = vunpack.c.l.b16 %v1710
      %v1767 = vunpack.c.l.b16 %v1720
      %v1768 = vunpack.c.l.b16 %v1734
      %v1769 = vunpack.c.l.b16 %v1744
      %v1770 = vpack.c.b16 %v1763, %v1762
      %v1771 = vpack.c.b16 %v1765, %v1764
      %v1772 = vpack.c.b16 %v1767, %v1766
      %v1773 = vpack.c.b16 %v1769, %v1768
      %v1794 = vunpack.c.l.b16 %v1746
      %v1795 = vunpack.c.l.b16 %v1747
      %v1796 = vunpack.c.l.b16 %v1748
      %v1797 = vunpack.c.l.b16 %v1749
      %v1798 = vunpack.c.l.b16 %v1750
      %v1799 = vunpack.c.l.b16 %v1751
      %v1800 = vunpack.c.l.b16 %v1752
      %v1801 = vunpack.c.l.b16 %v1753
      %v1802 = vunpack.c.l.b16 %v1754
      %v1803 = vunpack.c.l.b16 %v1755
      %v1804 = vunpack.c.l.b16 %v1756
      %v1805 = vunpack.c.l.b16 %v1757
      %v1806 = vunpack.c.l.b16 %v1758
      %v1807 = vunpack.c.l.b16 %v1759
      %v1808 = vunpack.c.l.b16 %v1760
      %v1809 = vunpack.c.l.b16 %v1761
      %v1810 = vpack.c.b16 %v1795, %v1794
      %v1811 = vpack.c.b16 %v1797, %v1796
      %v1812 = vpack.c.b16 %v1799, %v1798
      %v1813 = vpack.c.b16 %v1801, %v1800
      %v1814 = vpack.c.b16 %v1803, %v1802
      %v1815 = vpack.c.b16 %v1805, %v1804
      %v1816 = vpack.c.b16 %v1807, %v1806
      %v1817 = vpack.c.b16 %v1809, %v1808
      %1826 = vmatprep.subr.bf16.mxu0 0
      %1827 = vmatpush1.bf16.msra.mxu0 %v1810
      %1828 = vmatprep.subr.bf16.mxu0 0
      %1829 = vmatpush1.bf16.msra.mxu0 %v1811
      %1830 = vmatprep.subr.bf16.mxu0 0
      %1831 = vmatpush1.bf16.msra.mxu0 %v1812
      %1832 = vmatprep.subr.bf16.mxu0 0
      %1833 = vmatpush1.bf16.msra.mxu0 %v1813
      %1834 = vmatprep.subr.bf16.mxu0 0
      %1835 = vmatpush1.bf16.msra.mxu0 %v1814
      %1836 = vmatprep.subr.bf16.mxu0 0
      %1837 = vmatpush1.bf16.msra.mxu0 %v1815
      %1838 = vmatprep.subr.bf16.mxu0 0
      %1839 = vmatpush1.bf16.msra.mxu0 %v1816
      %1840 = vmatprep.subr.bf16.mxu0 0
      %1841 = vmatpush1.bf16.msra.mxu0 %v1817
      %1842 = vmatprep.subr.bf16.mxu0 0
      %1843 = vmatpush1.bf16.msra.mxu0 0
      %1844 = vmatprep.subr.bf16.mxu0 0
      %1845 = vmatpush1.bf16.msra.mxu0 0
      %1846 = vmatprep.subr.bf16.mxu0 0
      %1847 = vmatpush1.bf16.msra.mxu0 0
      %1848 = vmatprep.subr.bf16.mxu0 0
      %1849 = vmatpush1.bf16.msra.mxu0 0
      %1850 = vmatprep.subr.bf16.mxu0 0
      %1851 = vmatpush1.bf16.msra.mxu0 0
      %1852 = vmatprep.subr.bf16.mxu0 0
      %1853 = vmatpush1.bf16.msra.mxu0 0
      %1854 = vmatprep.subr.bf16.mxu0 0
      %1855 = vmatpush1.bf16.msra.mxu0 0
      %1856 = vmatprep.subr.bf16.mxu0 0
      %1857 = vmatpush1.bf16.msra.mxu0 0
      %1858 = vmatprep.mubr.bf16.mxu0 0
      %1859 = vmatmul.mubr.bf16.gmra.mrb[0].mxu0 %v1770
      %v1860 = vpop.f32.mrb[0].mxu0
      %v1861 = vadd.f32 0.0, %v1860
      %v1862 = vpop.f32.mrb[0].mxu0
      %v1863 = vpop.f32.mrb[0].mxu0
      %v1864 = vadd.f32 0.0, %v1863
      %v1865 = vpop.f32.mrb[0].mxu0
      %1866 = vmatprep.mubr.bf16.mxu0 0
      %1867 = vmatmul.mubr.bf16.gmra.mrb[0].mxu0 %v1771
      %v1868 = vpop.f32.mrb[0].mxu0
      %v1869 = vadd.f32 0.0, %v1868
      %v1870 = vpop.f32.mrb[0].mxu0
      %v1871 = vpop.f32.mrb[0].mxu0
      %v1872 = vadd.f32 0.0, %v1871
      %v1873 = vpop.f32.mrb[0].mxu0
      %1874 = vmatprep.mubr.bf16.mxu0 0
      %1875 = vmatmul.mubr.bf16.gmra.mrb[0].mxu0 %v1772
      %v1876 = vpop.f32.mrb[0].mxu0
      %v1877 = vadd.f32 0.0, %v1876
      %v1878 = vpop.f32.mrb[0].mxu0
      %v1879 = vpop.f32.mrb[0].mxu0
      %v1880 = vadd.f32 0.0, %v1879
      %v1881 = vpop.f32.mrb[0].mxu0
      %1882 = vmatprep.mubr.bf16.mxu0 0
      %1883 = vmatmul.mubr.bf16.gmra.mrb[0].mxu0 %v1773
      %v1884 = vpop.f32.mrb[0].mxu0
      %v1885 = vadd.f32 0.0, %v1884
      %v1886 = vpop.f32.mrb[0].mxu0
      %v1887 = vpop.f32.mrb[0].mxu0
      %v1888 = vadd.f32 0.0, %v1887
      %v1889 = vpop.f32.mrb[0].mxu0
      %1890 = vdwg.mxu0
      %v1891 = vadd.f32 %v1629, %v1861
      %v1892 = vadd.f32 %v1630, %v1864
      %v1893 = vadd.f32 %v1631, %v1869
      %v1894 = vadd.f32 %v1632, %v1872
      %v1895 = vadd.f32 %v1633, %v1877
      %v1896 = vadd.f32 %v1634, %v1880
      %v1897 = vadd.f32 %v1635, %v1885
      %v1898 = vadd.f32 %v1636, %v1888
      %v1899 = vld [vmem:[%s1466] sm:$0xe]
      %v1900 = vld [vmem:[%s1466 + $0xc] sm:$0xe]
      %v1901 = vld [vmem:[%s1466 + $0x18] sm:$0xe]
      %v1902 = vld [vmem:[%s1466 + $0x24] sm:$0xe]
      %v1915 = vrot.slane %v1899, 5
      %v1916 = vrot.slane %v1915, 4
      %v1917 = vrot.slane %v1638, 5
      %v1918 = vsel %vm646, %v1916, %v1917
      %v1919 = vrot.slane %v1917, 4
      %v1920 = vrot.slane %v1639, 5
      %v1921 = vsel %vm646, %v1919, %v1920
      %v1922 = vrot.slane %v1900, 5
      %v1923 = vrot.slane %v1922, 4
      %v1924 = vrot.slane %v1641, 5
      %v1925 = vsel %vm646, %v1923, %v1924
      %v1926 = vrot.slane %v1924, 4
      %v1927 = vrot.slane %v1642, 5
      %v1928 = vsel %vm646, %v1926, %v1927
      %v1929 = vrot.slane %v1901, 5
      %v1930 = vrot.slane %v1929, 4
      %v1931 = vrot.slane %v1644, 5
      %v1932 = vsel %vm646, %v1930, %v1931
      %v1933 = vrot.slane %v1931, 4
      %v1934 = vrot.slane %v1645, 5
      %v1935 = vsel %vm646, %v1933, %v1934
      %v1936 = vrot.slane %v1902, 5
      %v1937 = vrot.slane %v1936, 4
      %v1938 = vrot.slane %v1647, 5
      %v1939 = vsel %vm646, %v1937, %v1938
      %v1940 = vrot.slane %v1938, 4
      %v1941 = vrot.slane %v1648, 5
      %v1942 = vsel %vm646, %v1940, %v1941
      %s1943 = scalar_lea.vmem %s1, 512
      %v1944 = vld [vmem:[%s1943] sm:$0xf]
      %v1945 = vld [vmem:[%s1943 + $0x4] sm:$0xf]
      %v1946 = vld [vmem:[%s1943 + $0x8] sm:$0xf]
      %v1947 = vld [vmem:[%s1943 + $0xc] sm:$0xf]
      %v1948 = vld [vmem:[%s1943 + $0x10] sm:$0xf]
      %v1949 = vld [vmem:[%s1943 + $0x14] sm:$0xf]
      %v1950 = vld [vmem:[%s1943 + $0x18] sm:$0xf]
      %v1951 = vld [vmem:[%s1943 + $0x1c] sm:$0xf]
      %v1952 = vld [vmem:[%s1943 + $0x20] sm:$0xf]
      %v1953 = vld [vmem:[%s1943 + $0x24] sm:$0xf]
      %v1954 = vld [vmem:[%s1943 + $0x28] sm:$0xf]
      %v1955 = vld [vmem:[%s1943 + $0x2c] sm:$0xf]
      %v1956 = vld [vmem:[%s1943 + $0x30] sm:$0xf]
      %v1957 = vld [vmem:[%s1943 + $0x34] sm:$0xf]
      %v1958 = vld [vmem:[%s1943 + $0x38] sm:$0xf]
      %v1959 = vld [vmem:[%s1943 + $0x3c] sm:$0xf]
      %v1960 = vunpack.c.l.b16 %v1918
      %v1961 = vunpack.c.l.b16 %v1921
      %v1962 = vunpack.c.l.b16 %v1925
      %v1963 = vunpack.c.l.b16 %v1928
      %v1964 = vunpack.c.l.b16 %v1932
      %v1965 = vunpack.c.l.b16 %v1935
      %v1966 = vunpack.c.l.b16 %v1939
      %v1967 = vunpack.c.l.b16 %v1942
      %v1968 = vpack.c.b16 %v1961, %v1960
      %v1969 = vpack.c.b16 %v1963, %v1962
      %v1970 = vpack.c.b16 %v1965, %v1964
      %v1971 = vpack.c.b16 %v1967, %v1966
      %v1992 = vunpack.c.l.b16 %v1944
      %v1993 = vunpack.c.l.b16 %v1945
      %v1994 = vunpack.c.l.b16 %v1946
      %v1995 = vunpack.c.l.b16 %v1947
      %v1996 = vunpack.c.l.b16 %v1948
      %v1997 = vunpack.c.l.b16 %v1949
      %v1998 = vunpack.c.l.b16 %v1950
      %v1999 = vunpack.c.l.b16 %v1951
      %v2000 = vunpack.c.l.b16 %v1952
      %v2001 = vunpack.c.l.b16 %v1953
      %v2002 = vunpack.c.l.b16 %v1954
      %v2003 = vunpack.c.l.b16 %v1955
      %v2004 = vunpack.c.l.b16 %v1956
      %v2005 = vunpack.c.l.b16 %v1957
      %v2006 = vunpack.c.l.b16 %v1958
      %v2007 = vunpack.c.l.b16 %v1959
      %v2008 = vpack.c.b16 %v1993, %v1992
      %v2009 = vpack.c.b16 %v1995, %v1994
      %v2010 = vpack.c.b16 %v1997, %v1996
      %v2011 = vpack.c.b16 %v1999, %v1998
      %v2012 = vpack.c.b16 %v2001, %v2000
      %v2013 = vpack.c.b16 %v2003, %v2002
      %v2014 = vpack.c.b16 %v2005, %v2004
      %v2015 = vpack.c.b16 %v2007, %v2006
      %2024 = vmatprep.subr.bf16.mxu0 0
      %2025 = vmatpush1.bf16.msra.mxu0 %v2008
      %2026 = vmatprep.subr.bf16.mxu0 0
      %2027 = vmatpush1.bf16.msra.mxu0 %v2009
      %2028 = vmatprep.subr.bf16.mxu0 0
      %2029 = vmatpush1.bf16.msra.mxu0 %v2010
      %2030 = vmatprep.subr.bf16.mxu0 0
      %2031 = vmatpush1.bf16.msra.mxu0 %v2011
      %2032 = vmatprep.subr.bf16.mxu0 0
      %2033 = vmatpush1.bf16.msra.mxu0 %v2012
      %2034 = vmatprep.subr.bf16.mxu0 0
      %2035 = vmatpush1.bf16.msra.mxu0 %v2013
      %2036 = vmatprep.subr.bf16.mxu0 0
      %2037 = vmatpush1.bf16.msra.mxu0 %v2014
      %2038 = vmatprep.subr.bf16.mxu0 0
      %2039 = vmatpush1.bf16.msra.mxu0 %v2015
      %2040 = vmatprep.subr.bf16.mxu0 0
      %2041 = vmatpush1.bf16.msra.mxu0 0
      %2042 = vmatprep.subr.bf16.mxu0 0
      %2043 = vmatpush1.bf16.msra.mxu0 0
      %2044 = vmatprep.subr.bf16.mxu0 0
      %2045 = vmatpush1.bf16.msra.mxu0 0
      %2046 = vmatprep.subr.bf16.mxu0 0
      %2047 = vmatpush1.bf16.msra.mxu0 0
      %2048 = vmatprep.subr.bf16.mxu0 0
      %2049 = vmatpush1.bf16.msra.mxu0 0
      %2050 = vmatprep.subr.bf16.mxu0 0
      %2051 = vmatpush1.bf16.msra.mxu0 0
      %2052 = vmatprep.subr.bf16.mxu0 0
      %2053 = vmatpush1.bf16.msra.mxu0 0
      %2054 = vmatprep.subr.bf16.mxu0 0
      %2055 = vmatpush1.bf16.msra.mxu0 0
      %2056 = vmatprep.mubr.bf16.mxu0 0
      %2057 = vmatmul.mubr.bf16.gmra.mrb[0].mxu0 %v1968
      %v2058 = vpop.f32.mrb[0].mxu0
      %v2059 = vadd.f32 0.0, %v2058
      %v2060 = vpop.f32.mrb[0].mxu0
      %v2061 = vpop.f32.mrb[0].mxu0
      %v2062 = vadd.f32 0.0, %v2061
      %v2063 = vpop.f32.mrb[0].mxu0
      %2064 = vmatprep.mubr.bf16.mxu0 0
      %2065 = vmatmul.mubr.bf16.gmra.mrb[0].mxu0 %v1969
      %v2066 = vpop.f32.mrb[0].mxu0
      %v2067 = vadd.f32 0.0, %v2066
      %v2068 = vpop.f32.mrb[0].mxu0
      %v2069 = vpop.f32.mrb[0].mxu0
      %v2070 = vadd.f32 0.0, %v2069
      %v2071 = vpop.f32.mrb[0].mxu0
      %2072 = vmatprep.mubr.bf16.mxu0 0
      %2073 = vmatmul.mubr.bf16.gmra.mrb[0].mxu0 %v1970
      %v2074 = vpop.f32.mrb[0].mxu0
      %v2075 = vadd.f32 0.0, %v2074
      %v2076 = vpop.f32.mrb[0].mxu0
      %v2077 = vpop.f32.mrb[0].mxu0
      %v2078 = vadd.f32 0.0, %v2077
      %v2079 = vpop.f32.mrb[0].mxu0
      %2080 = vmatprep.mubr.bf16.mxu0 0
      %2081 = vmatmul.mubr.bf16.gmra.mrb[0].mxu0 %v1971
      %v2082 = vpop.f32.mrb[0].mxu0
      %v2083 = vadd.f32 0.0, %v2082
      %v2084 = vpop.f32.mrb[0].mxu0
      %v2085 = vpop.f32.mrb[0].mxu0
      %v2086 = vadd.f32 0.0, %v2085
      %v2087 = vpop.f32.mrb[0].mxu0
      %2088 = vdwg.mxu0
      %v2089 = vadd.f32 %v1891, %v2059
      %v2090 = vadd.f32 %v1892, %v2062
      %v2091 = vadd.f32 %v1893, %v2067
      %v2092 = vadd.f32 %v1894, %v2070
      %v2093 = vadd.f32 %v1895, %v2075
      %v2094 = vadd.f32 %v1896, %v2078
      %v2095 = vadd.f32 %v1897, %v2083
      %v2096 = vadd.f32 %v1898, %v2086
      %2097 = vst [vmem:[%s207] sm:$0xff] %v2089
      %2098 = vst [vmem:[%s207 + $0x8] sm:$0xff] %v2090
      %2099 = vst [vmem:[%s207 + $0x10] sm:$0xff] %v2091
      %2100 = vst [vmem:[%s207 + $0x18] sm:$0xff] %v2092
      %2101 = vst [vmem:[%s207 + $0x20] sm:$0xff] %v2093
      %2102 = vst [vmem:[%s207 + $0x28] sm:$0xff] %v2094
      %2103 = vst [vmem:[%s207 + $0x30] sm:$0xff] %v2095
      %2104 = vst [vmem:[%s207 + $0x38] sm:$0xff] %v2096
      %v2105 = vadd.f32 %v2089, %v2090
      %v2106 = vadd.f32 %v2105, %v2091
      %v2107 = vadd.f32 %v2106, %v2092
      %v2108 = vadd.f32 %v2107, %v2093
      %v2109 = vadd.f32 %v2108, %v2094
      %v2110 = vadd.f32 %v2109, %v2095
      %v2111 = vadd.f32 %v2110, %v2096
      %v2112 = vrot.slane %v2111, 4
      %v2113 = vadd.f32 %v2111, %v2112
      %v2114 = vrot.slane %v2113, 2
      %v2115 = vadd.f32 %v2113, %v2114
      %v2116 = vrot.slane %v2115, 1
      %v2117 = vadd.f32 %v2115, %v2116
      %v2118 = vmul.f32 %v2089, %v2089
      %v2119 = vmul.f32 %v2090, %v2090
      %v2120 = vmul.f32 %v2091, %v2091
      %v2121 = vmul.f32 %v2092, %v2092
      %v2122 = vmul.f32 %v2093, %v2093
      %v2123 = vmul.f32 %v2094, %v2094
      %v2124 = vmul.f32 %v2095, %v2095
      %v2125 = vmul.f32 %v2096, %v2096
      %v2126 = vadd.f32 %v2118, %v2119
      %v2127 = vadd.f32 %v2126, %v2120
      %v2128 = vadd.f32 %v2127, %v2121
      %v2129 = vadd.f32 %v2128, %v2122
      %v2130 = vadd.f32 %v2129, %v2123
      %v2131 = vadd.f32 %v2130, %v2124
      %v2132 = vadd.f32 %v2131, %v2125
      %v2133 = vrot.slane %v2132, 4
      %v2134 = vadd.f32 %v2132, %v2133
      %v2135 = vrot.slane %v2134, 2
      %v2136 = vadd.f32 %v2134, %v2135
      %v2137 = vrot.slane %v2136, 1
      %v2138 = vadd.f32 %v2136, %v2137
      %vm2139 = vcmask 1040384
      %v2140 = vsel %vm2139, %v2117, %v2138
      %2141 = vst [vmem:[%s216] sm:$0x3] %v2140
      %s2142 = smul.u32 4, %s20
      %p2143 = scmp.lt.s32.totalorder %s19, 1
      %s2144 = scalar_select %p2143, %s19, 1
      %p2145 = scmp.lt.s32.totalorder %s2142, 15
      %s2146 = scalar_select %p2145, %s2142, 15
      %s2147 = smul.addr %s2146, 2
      %s2148 = smul.addr %s2144, 32
      %s2149 = sadd.s32 %s2147, %s2148
      %s2150 = smul.addr %s2149, 8
      %s2151 = scalar_lea.vmem %s2, %s2150
      %p2152 = scmp.lt.s32.totalorder %s19, 1
      %s2153 = scalar_select %p2152, %s19, 1
      %p2154 = scmp.lt.s32.totalorder %s20, 3
      %s2155 = scalar_select %p2154, %s20, 3
      %s2156 = smul.addr %s2153, 4
      %s2157 = sadd.s32 %s2155, %s2156
      %s2158 = smul.addr %s2157, 2
      %s2159 = scalar_lea.vmem %s3, %s2158
      // Predicated region
      $region29: #{basic_block_forward.3} parent=27 // pred_check
        %p2160 = pneg %p94
      $region30: #{basic_block_forward.3} parent=27 // pred_check_branch
        %2162 = sbr.rel (%p2160) target = $region32
      $region31: #{basic_block_forward.3} parent=27 // pred_region
        %s2163 = smul.u32 4, %s20
      $region32: #{basic_block_forward.3} parent=27 // pred_fallthru
        _
      // Predicated region
      $region33: #{basic_block_forward.3} parent=27 // pred_check
        %p2164 = pneg %p122
      $region34: #{basic_block_forward.3} parent=27 // pred_check_branch
        %2166 = sbr.rel (%p2164) target = $region36
      $region35: #{basic_block_forward.3} parent=27 // pred_region
        _
      $region36: #{basic_block_forward.3} parent=27 // pred_fallthru
        _
    $region28: #{basic_block_forward.3} parent=5 // pred_fallthru
      _
    %p2167 = scmp.le.s32.totalorder 2, %s10
    // Predicated region
    $region37: #{basic_block_forward.3} parent=5 // pred_check
      %p2168 = pneg %p2167
    $region38: #{basic_block_forward.3} parent=5 // pred_check_branch
      %2170 = sbr.rel (%p2168) target = $region40
    $region39: #{basic_block_forward.3} parent=5 // pred_region
      %s2171 = ssub.s32 %s10, 2
      // Predicated region
      $region41: #{basic_block_forward.3} parent=39 // pred_check
        %p2172 = pneg %p100
      $region42: #{basic_block_forward.3} parent=39 // pred_check_branch
        %2174 = sbr.rel (%p2172) target = $region44
      $region43: #{basic_block_forward.3} parent=39 // pred_region
        %s2175 = smul.u32 4, %s22
        %p2176 = scmp.lt.s32.totalorder %s21, 1
        %s2177 = scalar_select %p2176, %s21, 1
        %p2178 = scmp.lt.s32.totalorder %s2175, 15
        %s2179 = scalar_select %p2178, %s2175, 15
        %s2180 = smul.addr %s2179, 2
        %s2181 = smul.addr %s2177, 32
        %s2182 = sadd.s32 %s2180, %s2181
        %s2183 = smul.addr %s2182, 8
        %s2184 = scalar_lea.vmem %s2, %s2183
      $region44: #{basic_block_forward.3} parent=39 // pred_fallthru
        _
      // Predicated region
      $region45: #{basic_block_forward.3} parent=39 // pred_check
        %p2185 = pneg %p128
      $region46: #{basic_block_forward.3} parent=39 // pred_check_branch
        %2187 = sbr.rel (%p2185) target = $region48
      $region47: #{basic_block_forward.3} parent=39 // pred_region
        %p2188 = scmp.lt.s32.totalorder %s21, 1
        %s2189 = scalar_select %p2188, %s21, 1
        %p2190 = scmp.lt.s32.totalorder %s22, 3
        %s2191 = scalar_select %p2190, %s22, 3
        %s2192 = smul.addr %s2189, 4
        %s2193 = sadd.s32 %s2191, %s2192
        %s2194 = smul.addr %s2193, 2
        %s2195 = scalar_lea.vmem %s3, %s2194
      $region48: #{basic_block_forward.3} parent=39 // pred_fallthru
        _
    $region40: #{basic_block_forward.3} parent=5 // pred_fallthru
      _
  $region6: #{basic_block_forward.3} parent=0 // loop_footer
    %s14 = sadd.s32 1, %s10
  $region7: #{basic_block_forward.3} parent=0 // loop_footer_branch
    %9 = sbr.rel target = $region3
  $region8: #{basic_block_forward.3} parent=0 // loop_exit
    _

</llo_original>
